<compile_context>
chip_gen: v5e
topology: v5e:2x2
jax: 0.10.0
libtpu: 0.0.40
codegen_flags: <defaults>
</compile_context>

<pallas_src>
import functools

import jax
import jax.numpy as jnp
from jax import lax
from jax.experimental import pallas as pl
from jax.experimental.pallas import tpu as pltpu


def _round_up(x, m):
    return ((x + m - 1) // m) * m


def _pick_vmem_limit(est_bytes):
    """Generation-aware VMEM limit derived from actual buffer sizes."""
    cap = 64 * 1024 * 1024                       # conservative default (v7x)
    try:
        cap = int(pltpu.get_tpu_info().vmem_capacity_bytes)
    except Exception:
        pass
    if cap <= 0:
        cap = 64 * 1024 * 1024
    want = max(32 * 1024 * 1024, 4 * int(est_bytes))
    return int(min(want, cap * 7 // 8))          # headroom for double buffers


# ------------------------------ Pallas kernel -------------------------------


def _fused_kernel(x_ref, h_ref, w_ref, ws_ref, bs_ref, wt_ref, bt_ref, o_ref, *,
                  KH, KW, KT, H, W, PH, PW, PT, PADL, THW, HW, dot_dtype):
    """Fused spatial conv + folded BN + ReLU + temporal conv for one clip.

    Shapes (per grid step):
      x_ref  : (1, Cin_pad, PADL + THW + PADL)   host-padded pixels in lanes
      h_ref  : (1, THW) int32                    per-pixel row index
      w_ref  : (1, THW) int32                    per-pixel col index
      ws_ref : (Cmid_pad, KH*KW*Cin_pad)         spatial weights (BN folded)
      bs_ref : (Cmid_pad, 1)                     folded conv bias + BN shift
      wt_ref : (Cout, KT*Cmid_pad)               temporal weights
      bt_ref : (Cout, 1)                         temporal bias
      o_ref  : (1, Cout, THW)
    """
    f32 = jnp.float32
    Cmid_pad = ws_ref.shape[0]

    h_idx = h_ref[...]                                   # (1, THW) int32
    w_idx = w_ref[...]

    # ---- stage 1: spatial conv (1,KH,KW) + folded bias/BN + ReLU ------------
    # One fat-K matmul: im2col slab (KH*KW*Cin_pad, THW) built from shifted
    # window reads of the lane-padded input; per-tap 0/1 masks (from compares
    # on the row/col indices) realise the spatial zero padding exactly.
    pieces = []
    for kh in range(KH):                                  # static, unrolled taps
        for kw in range(KW):
            dh, dw = kh - PH, kw - PW
            shift = dh * W + dw
            win = x_ref[0, :, PADL + shift:PADL + shift + THW].astype(f32)
            ok = ((h_idx >= -dh) & (h_idx < H - dh) &
                  (w_idx >= -dw) & (w_idx < W - dw))      # in-bounds mask
            pieces.append((win * ok.astype(f32)).astype(dot_dtype))
    slab = jnp.concatenate(pieces, axis=0)                # (KH*KW*Cin_pad, THW)
    y = jnp.dot(ws_ref[...], slab, preferred_element_type=f32)
    y = jnp.maximum(y + bs_ref[...], 0.0)                 # (Cmid_pad, THW) f32

    # ---- stage 2: temporal conv (KT,1,1) + bias ------------------------------
    # One fat-K matmul: whole-frame shifts realised with value-level zero fill
    # (the zero regions ARE the temporal padding); no ypad VMEM buffer.
    lpad = PT * HW
    rpad = (KT - 1 - PT) * HW
    parts = []
    if lpad:
        parts.append(jnp.zeros((Cmid_pad, lpad), f32))
    parts.append(y)
    if rpad:
        parts.append(jnp.zeros((Cmid_pad, rpad), f32))
    ypad = jnp.concatenate(parts, axis=1) if len(parts) > 1 else y
    tpieces = [ypad[:, kt * HW:kt * HW + THW].astype(dot_dtype)
               for kt in range(KT)]
    slab2 = jnp.concatenate(tpieces, axis=0) if KT > 1 else tpieces[0]
    out = jnp.dot(wt_ref[...], slab2, preferred_element_type=f32) + bt_ref[...]
    o_ref[0] = out.astype(o_ref.dtype)                    # lane-dense store


# --------------------------------- wrapper -----------------------------------


def conv2plus1d(x_ncthw, params, *, kernel_size=(3, 3, 3), padding=(1, 1, 1),
                dot_dtype=jnp.float32):
    """(2+1)D conv forward. x_ncthw: (N, Cin, T, H, W) -> (N, Cout, T, H, W).

    dot_dtype: MXU operand dtype.  float32 keeps the 1e-3 reference tolerance;
    set to jnp.bfloat16 on v6e/v7x for the full-rate MXU path (f32 accumulate).
    """
    w_s, b_s, gamma, beta, r_mean, r_var, eps, w_t, b_t = params
    N, Cin, T, H, W = x_ncthw.shape
    KT, KH, KW = kernel_size
    PT, PH, PW = padding
    Cmid = w_s.shape[0]                                   # (Cmid, Cin, KH, KW)
    Cout = w_t.shape[0]                                   # (Cout, Cmid, KT)
    dtype = x_ncthw.dtype
    THW, HW = T * H * W, H * W
    Cin_pad = _round_up(Cin, 8)
    Cmid_pad = _round_up(Cmid, 8)

    # fold conv_s bias + inference BN into scale/bias, then fold the scale
    # straight into the spatial weights (free one-time transform).
    scale = gamma * lax.rsqrt(r_var + eps)                         # (Cmid,)
    bias_s = (b_s - r_mean) * scale + beta                         # (Cmid,)

    ws = (w_s * scale[:, None, None, None]).astype(jnp.float32)
    ws_p = jnp.zeros((Cmid_pad, Cin_pad, KH, KW), jnp.float32)
    ws_p = ws_p.at[:Cmid, :Cin].set(ws)
    # column order must match the in-kernel slab: (tap = kh*KW+kw, cin)
    ws2d = jnp.transpose(ws_p, (0, 2, 3, 1)).reshape(Cmid_pad, KH * KW * Cin_pad)
    bias_s_p = jnp.zeros((Cmid_pad, 1), jnp.float32).at[:Cmid, 0].set(bias_s)

    wt_p = jnp.zeros((Cout, KT, Cmid_pad), jnp.float32)
    wt_p = wt_p.at[:, :, :Cmid].set(jnp.transpose(w_t, (0, 2, 1)).astype(jnp.float32))
    wt2d = wt_p.reshape(Cout, KT * Cmid_pad)
    bt_col = b_t.astype(jnp.float32).reshape(Cout, 1)

    ws2d = ws2d.astype(dot_dtype)
    wt2d = wt2d.astype(dot_dtype)

    # one-time host-side pad: channels -> multiple of 8 (aligned K-concat) and
    # lane-aligned spatial halo so in-kernel window reads never go OOB.
    max_shift = max(PH * W + PW, (KH - 1 - PH) * W + (KW - 1 - PW), 1)
    PADL = _round_up(max_shift, 128)
    x_flat = x_ncthw.reshape(N, Cin, THW)
    x_prep = jnp.pad(x_flat, ((0, 0), (0, Cin_pad - Cin), (PADL, PADL)))
    Wtot = PADL + THW + PADL

    # tiny per-pixel row/col indices (replace the (KH*KW, THW) f32 mask stream)
    pix = jnp.arange(THW, dtype=jnp.int32)
    w_idx = (pix % W).reshape(1, THW)
    h_idx = ((pix // W) % H).reshape(1, THW)

    kernel = functools.partial(
        _fused_kernel, KH=KH, KW=KW, KT=KT, H=H, W=W,
        PH=PH, PW=PW, PT=PT, PADL=PADL, THW=THW, HW=HW, dot_dtype=dot_dtype)

    itemsize = jnp.dtype(dtype).itemsize
    blk_bytes = (Cin_pad * Wtot * itemsize + Cout * THW * itemsize +
                 2 * THW * 4 + ws2d.size * ws2d.dtype.itemsize +
                 wt2d.size * wt2d.dtype.itemsize)
    work_bytes = (KH * KW * Cin_pad + KT * Cmid_pad + 2 * Cmid_pad) * THW * 4
    vmem_limit = _pick_vmem_limit(2 * blk_bytes + work_bytes)

    out_flat = pl.pallas_call(
        kernel,
        out_shape=jax.ShapeDtypeStruct((N, Cout, THW), dtype),
        grid_spec=pltpu.PrefetchScalarGridSpec(
            num_scalar_prefetch=0,
            grid=(N,),
            in_specs=[
                pl.BlockSpec((1, Cin_pad, Wtot), lambda n: (n, 0, 0)),
                pl.BlockSpec((1, THW), lambda n: (0, 0)),
                pl.BlockSpec((1, THW), lambda n: (0, 0)),
                pl.BlockSpec((Cmid_pad, KH * KW * Cin_pad), lambda n: (0, 0)),
                pl.BlockSpec((Cmid_pad, 1), lambda n: (0, 0)),
                pl.BlockSpec((Cout, KT * Cmid_pad), lambda n: (0, 0)),
                pl.BlockSpec((Cout, 1), lambda n: (0, 0)),
            ],
            out_specs=pl.BlockSpec((1, Cout, THW), lambda n: (n, 0, 0)),
        ),
        compiler_params=pltpu.CompilerParams(
            dimension_semantics=("parallel",),
            vmem_limit_bytes=vmem_limit),
    )(x_prep, h_idx, w_idx, ws2d, bias_s_p, wt2d, bt_col)

    return out_flat.reshape(N, Cout, T, H, W)


# ----------------------------- pure-JAX reference ----------------------------


def conv2plus1d_ref(x, params, *, padding=(1, 1, 1)):
    w_s, b_s, gamma, beta, r_mean, r_var, eps, w_t, b_t = params
    pt, ph, pw = padding
    scale = gamma * lax.rsqrt(r_var + eps)
    shift = beta - r_mean * scale
    dn = ("NCDHW", "OIDHW", "NCDHW")
    w_s_o = w_s[:, :, None, :, :]                     # (Cmid, Cin, 1, KH, KW)
    y = lax.conv_general_dilated(x, w_s_o, (1, 1, 1),
                                 [(0, 0), (ph, ph), (pw, pw)],
                                 dimension_numbers=dn)
    y = y + b_s[None, :, None, None, None]
    y = y * scale[None, :, None, None, None] + shift[None, :, None, None, None]
    y = jnp.maximum(y, 0.0)
    w_t_o = w_t[:, :, :, None, None]                  # (Cout, Cmid, KT, 1, 1)
    out = lax.conv_general_dilated(y, w_t_o, (1, 1, 1),
                                   [(pt, pt), (0, 0), (0, 0)],
                                   dimension_numbers=dn)
    return out + b_t[None, :, None, None, None]


# ----------------------------------- main -------------------------------------

if __name__ == "__main__":
    key = jax.random.PRNGKey(0)
    N, Cin, T, H, W = 2, 4, 8, 16, 16
    Cout = 8
    KT, KH, KW = 3, 3, 3
    padding = (1, 1, 1)

    # mid_channels exactly as in the PyTorch module
    Cmid = int(3 * (Cin * Cout * KH * KW) /
               (Cin * KH * KW + 3 * Cout))            # = 14 for these sizes

    k1, k2, k3 = jax.random.split(key, 3)
    # kaiming-style deterministic init (fan_in, relu gain), biases zero
    fan_s = Cin * KH * KW
    w_s = jax.random.normal(k1, (Cmid, Cin, KH, KW), jnp.float32) * jnp.sqrt(2.0 / fan_s)
    b_s = jnp.zeros((Cmid,), jnp.float32)
    fan_t = Cmid * KT
    w_t = jax.random.normal(k2, (Cout, Cmid, KT), jnp.float32) * jnp.sqrt(2.0 / fan_t)
    b_t = jnp.zeros((Cout,), jnp.float32)
    # BN3d params at init: gamma=1, beta=0, running stats (0, 1), eps=1e-5
    gamma = jnp.ones((Cmid,), jnp.float32)
    beta = jnp.zeros((Cmid,), jnp.float32)
    r_mean = jnp.zeros((Cmid,), jnp.float32)
    r_var = jnp.ones((Cmid,), jnp.float32)
    eps = jnp.float32(1e-5)

    params = (w_s, b_s, gamma, beta, r_mean, r_var, eps, w_t, b_t)
    x = jax.random.normal(k3, (N, Cin, T, H, W), jnp.float32)

    out = conv2plus1d(x, params, kernel_size=(KT, KH, KW), padding=padding)
    out = jax.block_until_ready(out)

    ref = conv2plus1d_ref(x, params, padding=padding)
    assert out.shape == (N, Cout, T, H, W), out.shape
    assert jnp.allclose(out, ref, atol=1e-3, rtol=1e-3), "mismatch vs reference"

    print("KERNEL_OK")
</pallas_src>

<mosaic_0001>
module attributes {stable_mosaic.version = 11 : i64} {
  func.func @_fused_kernel(%arg0: i32, %arg1: memref<1x8x2304xf32, #tpu.memory_space<vmem>>, %arg2: memref<1x2048xi32, #tpu.memory_space<vmem>>, %arg3: memref<1x2048xi32, #tpu.memory_space<vmem>>, %arg4: memref<16x72xf32, #tpu.memory_space<vmem>>, %arg5: memref<16x1xf32, #tpu.memory_space<vmem>>, %arg6: memref<8x48xf32, #tpu.memory_space<vmem>>, %arg7: memref<8x1xf32, #tpu.memory_space<vmem>>, %arg8: memref<1x8x2048xf32, #tpu.memory_space<vmem>>) attributes {dimension_semantics = [#tpu.dimension_semantics<parallel>], iteration_bounds = array<i64: 2>, scalar_prefetch = 0 : i64, scratch_operands = 0 : i64, tpu.core_type = #tpu.core_type<tc>, window_params = [{transform_indices = @transform_0, window_bounds = array<i64: 1, 8, 2304>}, {pipeline_mode = #tpu.pipeline_mode<synchronous>, transform_indices = @transform_1, window_bounds = array<i64: 1, 2048>}, {pipeline_mode = #tpu.pipeline_mode<synchronous>, transform_indices = @transform_2, window_bounds = array<i64: 1, 2048>}, {pipeline_mode = #tpu.pipeline_mode<synchronous>, transform_indices = @transform_3, window_bounds = array<i64: 16, 72>}, {pipeline_mode = #tpu.pipeline_mode<synchronous>, transform_indices = @transform_4, window_bounds = array<i64: 16, 1>}, {pipeline_mode = #tpu.pipeline_mode<synchronous>, transform_indices = @transform_5, window_bounds = array<i64: 8, 48>}, {pipeline_mode = #tpu.pipeline_mode<synchronous>, transform_indices = @transform_6, window_bounds = array<i64: 8, 1>}, {transform_indices = @transform_7, window_bounds = array<i64: 1, 8, 2048>}]} {
    %c0 = arith.constant 0 : index
    %c0_0 = arith.constant 0 : index
    %0 = vector.load %arg2[%c0, %c0_0] : memref<1x2048xi32, #tpu.memory_space<vmem>>, vector<1x2048xi32>
    %c0_1 = arith.constant 0 : index
    %c0_2 = arith.constant 0 : index
    %1 = vector.load %arg3[%c0_1, %c0_2] : memref<1x2048xi32, #tpu.memory_space<vmem>>, vector<1x2048xi32>
    %c0_3 = arith.constant 0 : index
    %c0_4 = arith.constant 0 : index
    %c111 = arith.constant 111 : index
    %2 = vector.load %arg1[%c0_3, %c0_4, %c111] : memref<1x8x2304xf32, #tpu.memory_space<vmem>>, vector<1x8x2048xf32>
    %3 = vector.shape_cast %2 : vector<1x8x2048xf32> to vector<8x2048xf32>
    %c1_i32 = arith.constant 1 : i32
    %4 = vector.broadcast %c1_i32 : i32 to vector<1x2048xi32>
    %5 = arith.cmpi sge, %0, %4 : vector<1x2048xi32>
    %c17_i32 = arith.constant 17 : i32
    %6 = vector.broadcast %c17_i32 : i32 to vector<1x2048xi32>
    %7 = arith.cmpi slt, %0, %6 : vector<1x2048xi32>
    %8 = arith.andi %5, %7 : vector<1x2048xi1>
    %c1_i32_5 = arith.constant 1 : i32
    %9 = vector.broadcast %c1_i32_5 : i32 to vector<1x2048xi32>
    %10 = arith.cmpi sge, %1, %9 : vector<1x2048xi32>
    %11 = arith.andi %8, %10 : vector<1x2048xi1>
    %c17_i32_6 = arith.constant 17 : i32
    %12 = vector.broadcast %c17_i32_6 : i32 to vector<1x2048xi32>
    %13 = arith.cmpi slt, %1, %12 : vector<1x2048xi32>
    %14 = arith.andi %11, %13 : vector<1x2048xi1>
    %15 = arith.extui %14 : vector<1x2048xi1> to vector<1x2048xi32>
    %16 = arith.sitofp %15 : vector<1x2048xi32> to vector<1x2048xf32>
    %17 = vector.broadcast %16 : vector<1x2048xf32> to vector<8x2048xf32>
    %18 = arith.mulf %3, %17 : vector<8x2048xf32>
    %c0_7 = arith.constant 0 : index
    %c0_8 = arith.constant 0 : index
    %c112 = arith.constant 112 : index
    %19 = vector.load %arg1[%c0_7, %c0_8, %c112] : memref<1x8x2304xf32, #tpu.memory_space<vmem>>, vector<1x8x2048xf32>
    %20 = vector.shape_cast %19 : vector<1x8x2048xf32> to vector<8x2048xf32>
    %c1_i32_9 = arith.constant 1 : i32
    %21 = vector.broadcast %c1_i32_9 : i32 to vector<1x2048xi32>
    %22 = arith.cmpi sge, %0, %21 : vector<1x2048xi32>
    %c17_i32_10 = arith.constant 17 : i32
    %23 = vector.broadcast %c17_i32_10 : i32 to vector<1x2048xi32>
    %24 = arith.cmpi slt, %0, %23 : vector<1x2048xi32>
    %25 = arith.andi %22, %24 : vector<1x2048xi1>
    %c0_i32 = arith.constant 0 : i32
    %26 = vector.broadcast %c0_i32 : i32 to vector<1x2048xi32>
    %27 = arith.cmpi sge, %1, %26 : vector<1x2048xi32>
    %28 = arith.andi %25, %27 : vector<1x2048xi1>
    %c16_i32 = arith.constant 16 : i32
    %29 = vector.broadcast %c16_i32 : i32 to vector<1x2048xi32>
    %30 = arith.cmpi slt, %1, %29 : vector<1x2048xi32>
    %31 = arith.andi %28, %30 : vector<1x2048xi1>
    %32 = arith.extui %31 : vector<1x2048xi1> to vector<1x2048xi32>
    %33 = arith.sitofp %32 : vector<1x2048xi32> to vector<1x2048xf32>
    %34 = vector.broadcast %33 : vector<1x2048xf32> to vector<8x2048xf32>
    %35 = arith.mulf %20, %34 : vector<8x2048xf32>
    %c0_11 = arith.constant 0 : index
    %c0_12 = arith.constant 0 : index
    %c113 = arith.constant 113 : index
    %36 = vector.load %arg1[%c0_11, %c0_12, %c113] : memref<1x8x2304xf32, #tpu.memory_space<vmem>>, vector<1x8x2048xf32>
    %37 = vector.shape_cast %36 : vector<1x8x2048xf32> to vector<8x2048xf32>
    %c1_i32_13 = arith.constant 1 : i32
    %38 = vector.broadcast %c1_i32_13 : i32 to vector<1x2048xi32>
    %39 = arith.cmpi sge, %0, %38 : vector<1x2048xi32>
    %c17_i32_14 = arith.constant 17 : i32
    %40 = vector.broadcast %c17_i32_14 : i32 to vector<1x2048xi32>
    %41 = arith.cmpi slt, %0, %40 : vector<1x2048xi32>
    %42 = arith.andi %39, %41 : vector<1x2048xi1>
    %c-1_i32 = arith.constant -1 : i32
    %43 = vector.broadcast %c-1_i32 : i32 to vector<1x2048xi32>
    %44 = arith.cmpi sge, %1, %43 : vector<1x2048xi32>
    %45 = arith.andi %42, %44 : vector<1x2048xi1>
    %c15_i32 = arith.constant 15 : i32
    %46 = vector.broadcast %c15_i32 : i32 to vector<1x2048xi32>
    %47 = arith.cmpi slt, %1, %46 : vector<1x2048xi32>
    %48 = arith.andi %45, %47 : vector<1x2048xi1>
    %49 = arith.extui %48 : vector<1x2048xi1> to vector<1x2048xi32>
    %50 = arith.sitofp %49 : vector<1x2048xi32> to vector<1x2048xf32>
    %51 = vector.broadcast %50 : vector<1x2048xf32> to vector<8x2048xf32>
    %52 = arith.mulf %37, %51 : vector<8x2048xf32>
    %c0_15 = arith.constant 0 : index
    %c0_16 = arith.constant 0 : index
    %c127 = arith.constant 127 : index
    %53 = vector.load %arg1[%c0_15, %c0_16, %c127] : memref<1x8x2304xf32, #tpu.memory_space<vmem>>, vector<1x8x2048xf32>
    %54 = vector.shape_cast %53 : vector<1x8x2048xf32> to vector<8x2048xf32>
    %c0_i32_17 = arith.constant 0 : i32
    %55 = vector.broadcast %c0_i32_17 : i32 to vector<1x2048xi32>
    %56 = arith.cmpi sge, %0, %55 : vector<1x2048xi32>
    %c16_i32_18 = arith.constant 16 : i32
    %57 = vector.broadcast %c16_i32_18 : i32 to vector<1x2048xi32>
    %58 = arith.cmpi slt, %0, %57 : vector<1x2048xi32>
    %59 = arith.andi %56, %58 : vector<1x2048xi1>
    %c1_i32_19 = arith.constant 1 : i32
    %60 = vector.broadcast %c1_i32_19 : i32 to vector<1x2048xi32>
    %61 = arith.cmpi sge, %1, %60 : vector<1x2048xi32>
    %62 = arith.andi %59, %61 : vector<1x2048xi1>
    %c17_i32_20 = arith.constant 17 : i32
    %63 = vector.broadcast %c17_i32_20 : i32 to vector<1x2048xi32>
    %64 = arith.cmpi slt, %1, %63 : vector<1x2048xi32>
    %65 = arith.andi %62, %64 : vector<1x2048xi1>
    %66 = arith.extui %65 : vector<1x2048xi1> to vector<1x2048xi32>
    %67 = arith.sitofp %66 : vector<1x2048xi32> to vector<1x2048xf32>
    %68 = vector.broadcast %67 : vector<1x2048xf32> to vector<8x2048xf32>
    %69 = arith.mulf %54, %68 : vector<8x2048xf32>
    %c0_21 = arith.constant 0 : index
    %c0_22 = arith.constant 0 : index
    %c128 = arith.constant 128 : index
    %70 = vector.load %arg1[%c0_21, %c0_22, %c128] : memref<1x8x2304xf32, #tpu.memory_space<vmem>>, vector<1x8x2048xf32>
    %71 = vector.shape_cast %70 : vector<1x8x2048xf32> to vector<8x2048xf32>
    %c0_i32_23 = arith.constant 0 : i32
    %72 = vector.broadcast %c0_i32_23 : i32 to vector<1x2048xi32>
    %73 = arith.cmpi sge, %0, %72 : vector<1x2048xi32>
    %c16_i32_24 = arith.constant 16 : i32
    %74 = vector.broadcast %c16_i32_24 : i32 to vector<1x2048xi32>
    %75 = arith.cmpi slt, %0, %74 : vector<1x2048xi32>
    %76 = arith.andi %73, %75 : vector<1x2048xi1>
    %c0_i32_25 = arith.constant 0 : i32
    %77 = vector.broadcast %c0_i32_25 : i32 to vector<1x2048xi32>
    %78 = arith.cmpi sge, %1, %77 : vector<1x2048xi32>
    %79 = arith.andi %76, %78 : vector<1x2048xi1>
    %c16_i32_26 = arith.constant 16 : i32
    %80 = vector.broadcast %c16_i32_26 : i32 to vector<1x2048xi32>
    %81 = arith.cmpi slt, %1, %80 : vector<1x2048xi32>
    %82 = arith.andi %79, %81 : vector<1x2048xi1>
    %83 = arith.extui %82 : vector<1x2048xi1> to vector<1x2048xi32>
    %84 = arith.sitofp %83 : vector<1x2048xi32> to vector<1x2048xf32>
    %85 = vector.broadcast %84 : vector<1x2048xf32> to vector<8x2048xf32>
    %86 = arith.mulf %71, %85 : vector<8x2048xf32>
    %c0_27 = arith.constant 0 : index
    %c0_28 = arith.constant 0 : index
    %c129 = arith.constant 129 : index
    %87 = vector.load %arg1[%c0_27, %c0_28, %c129] : memref<1x8x2304xf32, #tpu.memory_space<vmem>>, vector<1x8x2048xf32>
    %88 = vector.shape_cast %87 : vector<1x8x2048xf32> to vector<8x2048xf32>
    %c0_i32_29 = arith.constant 0 : i32
    %89 = vector.broadcast %c0_i32_29 : i32 to vector<1x2048xi32>
    %90 = arith.cmpi sge, %0, %89 : vector<1x2048xi32>
    %c16_i32_30 = arith.constant 16 : i32
    %91 = vector.broadcast %c16_i32_30 : i32 to vector<1x2048xi32>
    %92 = arith.cmpi slt, %0, %91 : vector<1x2048xi32>
    %93 = arith.andi %90, %92 : vector<1x2048xi1>
    %c-1_i32_31 = arith.constant -1 : i32
    %94 = vector.broadcast %c-1_i32_31 : i32 to vector<1x2048xi32>
    %95 = arith.cmpi sge, %1, %94 : vector<1x2048xi32>
    %96 = arith.andi %93, %95 : vector<1x2048xi1>
    %c15_i32_32 = arith.constant 15 : i32
    %97 = vector.broadcast %c15_i32_32 : i32 to vector<1x2048xi32>
    %98 = arith.cmpi slt, %1, %97 : vector<1x2048xi32>
    %99 = arith.andi %96, %98 : vector<1x2048xi1>
    %100 = arith.extui %99 : vector<1x2048xi1> to vector<1x2048xi32>
    %101 = arith.sitofp %100 : vector<1x2048xi32> to vector<1x2048xf32>
    %102 = vector.broadcast %101 : vector<1x2048xf32> to vector<8x2048xf32>
    %103 = arith.mulf %88, %102 : vector<8x2048xf32>
    %c0_33 = arith.constant 0 : index
    %c0_34 = arith.constant 0 : index
    %c143 = arith.constant 143 : index
    %104 = vector.load %arg1[%c0_33, %c0_34, %c143] : memref<1x8x2304xf32, #tpu.memory_space<vmem>>, vector<1x8x2048xf32>
    %105 = vector.shape_cast %104 : vector<1x8x2048xf32> to vector<8x2048xf32>
    %c-1_i32_35 = arith.constant -1 : i32
    %106 = vector.broadcast %c-1_i32_35 : i32 to vector<1x2048xi32>
    %107 = arith.cmpi sge, %0, %106 : vector<1x2048xi32>
    %c15_i32_36 = arith.constant 15 : i32
    %108 = vector.broadcast %c15_i32_36 : i32 to vector<1x2048xi32>
    %109 = arith.cmpi slt, %0, %108 : vector<1x2048xi32>
    %110 = arith.andi %107, %109 : vector<1x2048xi1>
    %c1_i32_37 = arith.constant 1 : i32
    %111 = vector.broadcast %c1_i32_37 : i32 to vector<1x2048xi32>
    %112 = arith.cmpi sge, %1, %111 : vector<1x2048xi32>
    %113 = arith.andi %110, %112 : vector<1x2048xi1>
    %c17_i32_38 = arith.constant 17 : i32
    %114 = vector.broadcast %c17_i32_38 : i32 to vector<1x2048xi32>
    %115 = arith.cmpi slt, %1, %114 : vector<1x2048xi32>
    %116 = arith.andi %113, %115 : vector<1x2048xi1>
    %117 = arith.extui %116 : vector<1x2048xi1> to vector<1x2048xi32>
    %118 = arith.sitofp %117 : vector<1x2048xi32> to vector<1x2048xf32>
    %119 = vector.broadcast %118 : vector<1x2048xf32> to vector<8x2048xf32>
    %120 = arith.mulf %105, %119 : vector<8x2048xf32>
    %c0_39 = arith.constant 0 : index
    %c0_40 = arith.constant 0 : index
    %c144 = arith.constant 144 : index
    %121 = vector.load %arg1[%c0_39, %c0_40, %c144] : memref<1x8x2304xf32, #tpu.memory_space<vmem>>, vector<1x8x2048xf32>
    %122 = vector.shape_cast %121 : vector<1x8x2048xf32> to vector<8x2048xf32>
    %c-1_i32_41 = arith.constant -1 : i32
    %123 = vector.broadcast %c-1_i32_41 : i32 to vector<1x2048xi32>
    %124 = arith.cmpi sge, %0, %123 : vector<1x2048xi32>
    %c15_i32_42 = arith.constant 15 : i32
    %125 = vector.broadcast %c15_i32_42 : i32 to vector<1x2048xi32>
    %126 = arith.cmpi slt, %0, %125 : vector<1x2048xi32>
    %127 = arith.andi %124, %126 : vector<1x2048xi1>
    %c0_i32_43 = arith.constant 0 : i32
    %128 = vector.broadcast %c0_i32_43 : i32 to vector<1x2048xi32>
    %129 = arith.cmpi sge, %1, %128 : vector<1x2048xi32>
    %130 = arith.andi %127, %129 : vector<1x2048xi1>
    %c16_i32_44 = arith.constant 16 : i32
    %131 = vector.broadcast %c16_i32_44 : i32 to vector<1x2048xi32>
    %132 = arith.cmpi slt, %1, %131 : vector<1x2048xi32>
    %133 = arith.andi %130, %132 : vector<1x2048xi1>
    %134 = arith.extui %133 : vector<1x2048xi1> to vector<1x2048xi32>
    %135 = arith.sitofp %134 : vector<1x2048xi32> to vector<1x2048xf32>
    %136 = vector.broadcast %135 : vector<1x2048xf32> to vector<8x2048xf32>
    %137 = arith.mulf %122, %136 : vector<8x2048xf32>
    %c0_45 = arith.constant 0 : index
    %c0_46 = arith.constant 0 : index
    %c145 = arith.constant 145 : index
    %138 = vector.load %arg1[%c0_45, %c0_46, %c145] : memref<1x8x2304xf32, #tpu.memory_space<vmem>>, vector<1x8x2048xf32>
    %139 = vector.shape_cast %138 : vector<1x8x2048xf32> to vector<8x2048xf32>
    %c-1_i32_47 = arith.constant -1 : i32
    %140 = vector.broadcast %c-1_i32_47 : i32 to vector<1x2048xi32>
    %141 = arith.cmpi sge, %0, %140 : vector<1x2048xi32>
    %c15_i32_48 = arith.constant 15 : i32
    %142 = vector.broadcast %c15_i32_48 : i32 to vector<1x2048xi32>
    %143 = arith.cmpi slt, %0, %142 : vector<1x2048xi32>
    %144 = arith.andi %141, %143 : vector<1x2048xi1>
    %c-1_i32_49 = arith.constant -1 : i32
    %145 = vector.broadcast %c-1_i32_49 : i32 to vector<1x2048xi32>
    %146 = arith.cmpi sge, %1, %145 : vector<1x2048xi32>
    %147 = arith.andi %144, %146 : vector<1x2048xi1>
    %c15_i32_50 = arith.constant 15 : i32
    %148 = vector.broadcast %c15_i32_50 : i32 to vector<1x2048xi32>
    %149 = arith.cmpi slt, %1, %148 : vector<1x2048xi32>
    %150 = arith.andi %147, %149 : vector<1x2048xi1>
    %151 = arith.extui %150 : vector<1x2048xi1> to vector<1x2048xi32>
    %152 = arith.sitofp %151 : vector<1x2048xi32> to vector<1x2048xf32>
    %153 = vector.broadcast %152 : vector<1x2048xf32> to vector<8x2048xf32>
    %154 = arith.mulf %139, %153 : vector<8x2048xf32>
    %155 = tpu.concatenate %18, %35, %52, %69, %86, %103, %120, %137, %154 in 0 : vector<8x2048xf32>, vector<8x2048xf32>, vector<8x2048xf32>, vector<8x2048xf32>, vector<8x2048xf32>, vector<8x2048xf32>, vector<8x2048xf32>, vector<8x2048xf32>, vector<8x2048xf32> -> vector<72x2048xf32>
    %c0_51 = arith.constant 0 : index
    %c0_52 = arith.constant 0 : index
    %156 = vector.load %arg4[%c0_51, %c0_52] : memref<16x72xf32, #tpu.memory_space<vmem>>, vector<16x72xf32>
    %cst = arith.constant dense<0.000000e+00> : vector<16x2048xf32>
    %157 = tpu.matmul %156, %155, %cst {dimension_numbers = #tpu.dot_dimension_numbers<[1], [0], [0], [1], [0, 0, 1, 1], [], []>} : vector<16x72xf32>, vector<72x2048xf32>, vector<16x2048xf32> -> vector<16x2048xf32>
    %c0_53 = arith.constant 0 : index
    %c0_54 = arith.constant 0 : index
    %158 = vector.load %arg5[%c0_53, %c0_54] : memref<16x1xf32, #tpu.memory_space<vmem>>, vector<16x1xf32>
    %159 = vector.broadcast %158 : vector<16x1xf32> to vector<16x2048xf32>
    %160 = arith.addf %157, %159 : vector<16x2048xf32>
    %cst_55 = arith.constant 0.000000e+00 : f32
    %161 = vector.broadcast %cst_55 : f32 to vector<16x2048xf32>
    %162 = arith.maximumf %160, %161 : vector<16x2048xf32>
    %cst_56 = arith.constant 0.000000e+00 : f32
    %163 = vector.broadcast %cst_56 : f32 to vector<16x256xf32>
    %cst_57 = arith.constant 0.000000e+00 : f32
    %164 = vector.broadcast %cst_57 : f32 to vector<16x256xf32>
    %165 = tpu.concatenate %163, %162, %164 in 1 : vector<16x256xf32>, vector<16x2048xf32>, vector<16x256xf32> -> vector<16x2560xf32>
    %166 = vector.extract_strided_slice %165 {offsets = [0, 0], sizes = [16, 2048], strides = [1, 1]} : vector<16x2560xf32> to vector<16x2048xf32>
    %167 = vector.extract_strided_slice %165 {offsets = [0, 256], sizes = [16, 2048], strides = [1, 1]} : vector<16x2560xf32> to vector<16x2048xf32>
    %168 = vector.extract_strided_slice %165 {offsets = [0, 512], sizes = [16, 2048], strides = [1, 1]} : vector<16x2560xf32> to vector<16x2048xf32>
    %169 = tpu.concatenate %166, %167, %168 in 0 : vector<16x2048xf32>, vector<16x2048xf32>, vector<16x2048xf32> -> vector<48x2048xf32>
    %c0_58 = arith.constant 0 : index
    %c0_59 = arith.constant 0 : index
    %170 = vector.load %arg6[%c0_58, %c0_59] : memref<8x48xf32, #tpu.memory_space<vmem>>, vector<8x48xf32>
    %cst_60 = arith.constant dense<0.000000e+00> : vector<8x2048xf32>
    %171 = tpu.matmul %170, %169, %cst_60 {dimension_numbers = #tpu.dot_dimension_numbers<[1], [0], [0], [1], [0, 0, 1, 1], [], []>} : vector<8x48xf32>, vector<48x2048xf32>, vector<8x2048xf32> -> vector<8x2048xf32>
    %c0_61 = arith.constant 0 : index
    %c0_62 = arith.constant 0 : index
    %172 = vector.load %arg7[%c0_61, %c0_62] : memref<8x1xf32, #tpu.memory_space<vmem>>, vector<8x1xf32>
    %173 = vector.broadcast %172 : vector<8x1xf32> to vector<8x2048xf32>
    %174 = arith.addf %171, %173 : vector<8x2048xf32>
    %c0_63 = arith.constant 0 : index
    %c0_64 = arith.constant 0 : index
    %c0_65 = arith.constant 0 : index
    %175 = vector.load %arg8[%c0_63, %c0_64, %c0_65] : memref<1x8x2048xf32, #tpu.memory_space<vmem>>, vector<1x8x2048xf32>
    %176 = vector.shape_cast %175 : vector<1x8x2048xf32> to vector<8x2048xf32>
    %177 = vector.shape_cast %174 : vector<8x2048xf32> to vector<1x8x2048xf32>
    tpu.vector_store %arg8[%c0_63, %c0_64, %c0_65], %177 {strides = array<i32>} : memref<1x8x2048xf32, #tpu.memory_space<vmem>>, vector<1x8x2048xf32>,
    return
  }
  func.func @transform_0(%arg0: i32) -> (i32, i32, i32) {
    %c0_i32 = arith.constant 0 : i32
    %c0_i32_0 = arith.constant 0 : i32
    %c0_i32_1 = arith.constant 0 : i32
    return %arg0, %c0_i32, %c0_i32_0 : i32, i32, i32
  }
  func.func @transform_1(%arg0: i32) -> (i32, i32) {
    %c0_i32 = arith.constant 0 : i32
    %c0_i32_0 = arith.constant 0 : i32
    %c0_i32_1 = arith.constant 0 : i32
    return %c0_i32, %c0_i32_0 : i32, i32
  }
  func.func @transform_2(%arg0: i32) -> (i32, i32) {
    %c0_i32 = arith.constant 0 : i32
    %c0_i32_0 = arith.constant 0 : i32
    %c0_i32_1 = arith.constant 0 : i32
    return %c0_i32, %c0_i32_0 : i32, i32
  }
  func.func @transform_3(%arg0: i32) -> (i32, i32) {
    %c0_i32 = arith.constant 0 : i32
    %c0_i32_0 = arith.constant 0 : i32
    %c0_i32_1 = arith.constant 0 : i32
    return %c0_i32, %c0_i32_0 : i32, i32
  }
  func.func @transform_4(%arg0: i32) -> (i32, i32) {
    %c0_i32 = arith.constant 0 : i32
    %c0_i32_0 = arith.constant 0 : i32
    %c0_i32_1 = arith.constant 0 : i32
    return %c0_i32, %c0_i32_0 : i32, i32
  }
  func.func @transform_5(%arg0: i32) -> (i32, i32) {
    %c0_i32 = arith.constant 0 : i32
    %c0_i32_0 = arith.constant 0 : i32
    %c0_i32_1 = arith.constant 0 : i32
    return %c0_i32, %c0_i32_0 : i32, i32
  }
  func.func @transform_6(%arg0: i32) -> (i32, i32) {
    %c0_i32 = arith.constant 0 : i32
    %c0_i32_0 = arith.constant 0 : i32
    %c0_i32_1 = arith.constant 0 : i32
    return %c0_i32, %c0_i32_0 : i32, i32
  }
  func.func @transform_7(%arg0: i32) -> (i32, i32, i32) {
    %c0_i32 = arith.constant 0 : i32
    %c0_i32_0 = arith.constant 0 : i32
    %c0_i32_1 = arith.constant 0 : i32
    return %arg0, %c0_i32, %c0_i32_0 : i32, i32, i32
  }
}

</mosaic_0001>

<llo_original>
// kernel: tpu_custom_call.1
$region0: #{tpu_custom_call.1}
  #allocation0 [shape = 'u32[]', space=smem, size = 0x4, offset = 0x4, fixed_abs, tag = 'smem constant byte address 0x4 - core index']
  #allocation1 [shape = 'u32[72,128]{1,0:T(1,128)}', space=vmem, size = 0x9000, scoped, tag = 'internal scratch']
  %s0 = inlined_call_operand.hbm [shape: f32[2,8,2304], index: 0, kind: input, shape index: {}]
  %s1 = inlined_call_operand.vmem [shape: s32[1,2048], index: 1, kind: input, shape index: {}]
  %s2 = inlined_call_operand.hbm [shape: s32[1,2048], index: 2, kind: input, shape index: {}]
  %s3 = inlined_call_operand.hbm [shape: f32[16,72], index: 3, kind: input, shape index: {}]
  %s4 = inlined_call_operand.vmem [shape: f32[16,1], index: 4, kind: input, shape index: {}]
  %s5 = inlined_call_operand.vmem [shape: f32[8,48], index: 5, kind: input, shape index: {}]
  %s6 = inlined_call_operand.vmem [shape: f32[8,1], index: 6, kind: input, shape index: {}]
  %s7 = inlined_call_operand.hbm [shape: f32[2,8,2048], index: 7, kind: output, shape index: {}]
  %s8 = sld [smem:[#allocation0]]
  $region73: #{tpu_custom_call.1} parent=0
    _
  %s10 = ssub.s32 1, %s8
  %s11 = scalar_select 0, %s10, %s8
  $region1: #{tpu_custom_call.1} parent=0
    #allocation2 [shape = 'u8[147456]{0}', space=vmem, size = 0x24000, scoped, tag = 'input window, operand 0']
    #allocation3 [shape = 's32[2]{0}', space=sflag, size = 0x8, scoped, tag = 'scoped memory for tpu_custom_call.1']
    #allocation4 [shape = 's32[2]{0}', space=sflag, size = 0x8, scoped, tag = 'scoped memory for tpu_custom_call.1']
    #allocation5 [shape = 'u8[8192]{0}', space=vmem, size = 0x2000, scoped, tag = 'input window, operand 2, single buffered']
    #allocation6 [shape = 's32[1]{0}', space=sflag, size = 0x4, scoped, tag = 'scoped memory for tpu_custom_call.1']
    #allocation7 [shape = 'u8[8192]{0}', space=vmem, size = 0x2000, scoped, tag = 'input window, operand 3, single buffered']
    #allocation8 [shape = 'u8[131072]{0}', space=vmem, size = 0x20000, scoped, tag = 'output window, operand 0']
    %12 = vsyncpa [#allocation3], 0
    %s13 = scalar_lea.sflag [#allocation3], 1
    %14 = vsyncpa %s13, 0
    %15 = vsyncpa [#allocation6], 0
    %16 = vsyncpa [#allocation4], 0
    %s17 = scalar_lea.sflag [#allocation4], 1
    %18 = vsyncpa %s17, 0
    loop: start=0, step=1, limit=4
    $region2: #{tpu_custom_call.1} parent=1 // loop_pre_header
      _
    $region3: #{tpu_custom_call.1} parent=1 // loop_header
      %s20 = sphi 0, %s24
      %p21 = scmp.ge.s32.totalorder %s20, 4
      %s30 = sphi 0, %s32
      %s33 = sphi 0, %s30
      %s34 = sphi 0, %s33
      %s50 = sphi 0, %s34
      %s54 = sphi 0, %s54
      %s56 = sphi 0, %s54
      %s57 = sphi 0, %s56
      %s71 = sphi 0, %s57
      %s75 = sphi 0, %s75
      %s77 = sphi 0, %s75
      %s78 = sphi 0, %s77
      %s92 = sphi 0, %s78
      %s96 = sphi 0, %s96
      %s98 = sphi 0, %s96
      %s99 = sphi 0, %s98
      %s113 = sphi 0, %s99
      %s117 = sphi 0, %s117
      %s119 = sphi 0, %s117
      %s120 = sphi 0, %s119
      %s134 = sphi 0, %s120
      %s138 = sphi 0, %s138
      %s140 = sphi 0, %s138
      %s141 = sphi 0, %s140
      %s155 = sphi 0, %s141
      %s159 = sphi 0, %s159
      %s161 = sphi 0, %s159
      %s162 = sphi 0, %s161
      %s176 = sphi 0, %s162
      %s182 = sphi 0, %s184
      %s185 = sphi 0, %s182
      %s186 = sphi 0, %s185
      %s202 = sphi 0, %s186
    $region4: #{tpu_custom_call.1} parent=1 // loop_header_branch
      %23 = sbr.rel (%p21) target = $region8
    $region5: #{tpu_custom_call.1} parent=1 // loop_body
      %s25 = ssub.s32 %s20, 1
      %s26 = ssub.s32 %s20, 2
      %s27 = sadd.s32 %s20, 1
      %s28 = ssub.s32 %s20, %s27
      %p29 = scmp.eq.s32.totalorder %s28, 0
      %s31 = sadd.s32 %s30, 1
      %s32 = scalar_select %p29, %s30, %s31
      %p35 = pneg %p29
      %p36 = scmp.eq.s32.totalorder %s20, 1
      %p37 = por %p35, %p36
      %p38 = scmp.ne.s32.totalorder %s30, %s33
      %p39 = scmp.eq.s32.totalorder %s20, 0
      %p40 = por %p38, %p39
      %p41 = scmp.ne.s32.totalorder %s30, %s33
      %p42 = scmp.eq.s32.totalorder %s25, 1
      %p43 = por %p41, %p42
      %p44 = scmp.ne.s32.totalorder %s33, %s34
      %p45 = scmp.eq.s32.totalorder %s25, 0
      %p46 = por %p44, %p45
      %p47 = scmp.ne.s32.totalorder %s33, %s34
      %p48 = scmp.eq.s32.totalorder %s26, 1
      %p49 = por %p47, %p48
      %p51 = scmp.ne.s32.totalorder %s34, %s50
      %p52 = scmp.eq.s32.totalorder %s26, 0
      %p53 = por %p51, %p52
      %s55 = sadd.s32 %s54, 1
      %p58 = scmp.eq.s32.totalorder %s20, 1
      %p59 = scmp.ne.s32.totalorder %s54, %s56
      %p60 = scmp.eq.s32.totalorder %s20, 0
      %p61 = por %p59, %p60
      %p62 = scmp.ne.s32.totalorder %s54, %s56
      %p63 = scmp.eq.s32.totalorder %s25, 1
      %p64 = por %p62, %p63
      %p65 = scmp.ne.s32.totalorder %s56, %s57
      %p66 = scmp.eq.s32.totalorder %s25, 0
      %p67 = por %p65, %p66
      %p68 = scmp.ne.s32.totalorder %s56, %s57
      %p69 = scmp.eq.s32.totalorder %s26, 1
      %p70 = por %p68, %p69
      %p72 = scmp.ne.s32.totalorder %s57, %s71
      %p73 = scmp.eq.s32.totalorder %s26, 0
      %p74 = por %p72, %p73
      %s76 = sadd.s32 %s75, 1
      %p79 = scmp.eq.s32.totalorder %s20, 1
      %p80 = scmp.ne.s32.totalorder %s75, %s77
      %p81 = scmp.eq.s32.totalorder %s20, 0
      %p82 = por %p80, %p81
      %p83 = scmp.ne.s32.totalorder %s75, %s77
      %p84 = scmp.eq.s32.totalorder %s25, 1
      %p85 = por %p83, %p84
      %p86 = scmp.ne.s32.totalorder %s77, %s78
      %p87 = scmp.eq.s32.totalorder %s25, 0
      %p88 = por %p86, %p87
      %p89 = scmp.ne.s32.totalorder %s77, %s78
      %p90 = scmp.eq.s32.totalorder %s26, 1
      %p91 = por %p89, %p90
      %p93 = scmp.ne.s32.totalorder %s78, %s92
      %p94 = scmp.eq.s32.totalorder %s26, 0
      %p95 = por %p93, %p94
      %s97 = sadd.s32 %s96, 1
      %p100 = scmp.eq.s32.totalorder %s20, 1
      %p101 = scmp.ne.s32.totalorder %s96, %s98
      %p102 = scmp.eq.s32.totalorder %s20, 0
      %p103 = por %p101, %p102
      %p104 = scmp.ne.s32.totalorder %s96, %s98
      %p105 = scmp.eq.s32.totalorder %s25, 1
      %p106 = por %p104, %p105
      %p107 = scmp.ne.s32.totalorder %s98, %s99
      %p108 = scmp.eq.s32.totalorder %s25, 0
      %p109 = por %p107, %p108
      %p110 = scmp.ne.s32.totalorder %s98, %s99
      %p111 = scmp.eq.s32.totalorder %s26, 1
      %p112 = por %p110, %p111
      %p114 = scmp.ne.s32.totalorder %s99, %s113
      %p115 = scmp.eq.s32.totalorder %s26, 0
      %p116 = por %p114, %p115
      %s118 = sadd.s32 %s117, 1
      %p121 = scmp.eq.s32.totalorder %s20, 1
      %p122 = scmp.ne.s32.totalorder %s117, %s119
      %p123 = scmp.eq.s32.totalorder %s20, 0
      %p124 = por %p122, %p123
      %p125 = scmp.ne.s32.totalorder %s117, %s119
      %p126 = scmp.eq.s32.totalorder %s25, 1
      %p127 = por %p125, %p126
      %p128 = scmp.ne.s32.totalorder %s119, %s120
      %p129 = scmp.eq.s32.totalorder %s25, 0
      %p130 = por %p128, %p129
      %p131 = scmp.ne.s32.totalorder %s119, %s120
      %p132 = scmp.eq.s32.totalorder %s26, 1
      %p133 = por %p131, %p132
      %p135 = scmp.ne.s32.totalorder %s120, %s134
      %p136 = scmp.eq.s32.totalorder %s26, 0
      %p137 = por %p135, %p136
      %s139 = sadd.s32 %s138, 1
      %p142 = scmp.eq.s32.totalorder %s20, 1
      %p143 = scmp.ne.s32.totalorder %s138, %s140
      %p144 = scmp.eq.s32.totalorder %s20, 0
      %p145 = por %p143, %p144
      %p146 = scmp.ne.s32.totalorder %s138, %s140
      %p147 = scmp.eq.s32.totalorder %s25, 1
      %p148 = por %p146, %p147
      %p149 = scmp.ne.s32.totalorder %s140, %s141
      %p150 = scmp.eq.s32.totalorder %s25, 0
      %p151 = por %p149, %p150
      %p152 = scmp.ne.s32.totalorder %s140, %s141
      %p153 = scmp.eq.s32.totalorder %s26, 1
      %p154 = por %p152, %p153
      %p156 = scmp.ne.s32.totalorder %s141, %s155
      %p157 = scmp.eq.s32.totalorder %s26, 0
      %p158 = por %p156, %p157
      %s160 = sadd.s32 %s159, 1
      %p163 = scmp.eq.s32.totalorder %s20, 1
      %p164 = scmp.ne.s32.totalorder %s159, %s161
      %p165 = scmp.eq.s32.totalorder %s20, 0
      %p166 = por %p164, %p165
      %p167 = scmp.ne.s32.totalorder %s159, %s161
      %p168 = scmp.eq.s32.totalorder %s25, 1
      %p169 = por %p167, %p168
      %p170 = scmp.ne.s32.totalorder %s161, %s162
      %p171 = scmp.eq.s32.totalorder %s25, 0
      %p172 = por %p170, %p171
      %p173 = scmp.ne.s32.totalorder %s161, %s162
      %p174 = scmp.eq.s32.totalorder %s26, 1
      %p175 = por %p173, %p174
      %p177 = scmp.ne.s32.totalorder %s162, %s176
      %p178 = scmp.eq.s32.totalorder %s26, 0
      %p179 = por %p177, %p178
      %s180 = ssub.s32 %s20, %s27
      %p181 = scmp.eq.s32.totalorder %s180, 0
      %s183 = sadd.s32 %s182, 1
      %s184 = scalar_select %p181, %s182, %s183
      %p187 = pneg %p181
      %p188 = scmp.eq.s32.totalorder %s20, 1
      %p189 = por %p187, %p188
      %p190 = scmp.ne.s32.totalorder %s182, %s185
      %p191 = scmp.eq.s32.totalorder %s20, 0
      %p192 = por %p190, %p191
      %p193 = scmp.ne.s32.totalorder %s182, %s185
      %p194 = scmp.eq.s32.totalorder %s25, 1
      %p195 = por %p193, %p194
      %p196 = scmp.ne.s32.totalorder %s185, %s186
      %p197 = scmp.eq.s32.totalorder %s25, 0
      %p198 = por %p196, %p197
      %p199 = scmp.ne.s32.totalorder %s185, %s186
      %p200 = scmp.eq.s32.totalorder %s26, 1
      %p201 = por %p199, %p200
      %p203 = scmp.ne.s32.totalorder %s186, %s202
      %p204 = scmp.eq.s32.totalorder %s26, 0
      %p205 = por %p203, %p204
      %p206 = scmp.le.s32.totalorder 1, %s20
      %p207 = scmp.lt.s32.totalorder %s20, 3
      %p208 = pnand %p206, %p207
      %p209 = pneg %p208
      // Predicated region
      $region9: #{tpu_custom_call.1} parent=5 // pred_check
        _
      $region10: #{tpu_custom_call.1} parent=5 // pred_check_branch
        %211 = sbr.rel (%p208) target = $region12
      $region11: #{tpu_custom_call.1} parent=5 // pred_region
        %s212 = ssub.s32 %s20, 1
        // Predicated region
        $region13: #{tpu_custom_call.1} parent=11 // pred_check
          %p213 = pneg %p67
        $region14: #{tpu_custom_call.1} parent=11 // pred_check_branch
          %215 = sbr.rel (%p213) target = $region16
        $region15: #{tpu_custom_call.1} parent=11 // pred_region
          _
        $region16: #{tpu_custom_call.1} parent=11 // pred_fallthru
          _
        // Predicated region
        $region17: #{tpu_custom_call.1} parent=11 // pred_check
          %p216 = pneg %p88
        $region18: #{tpu_custom_call.1} parent=11 // pred_check_branch
          %218 = sbr.rel (%p216) target = $region20
        $region19: #{tpu_custom_call.1} parent=11 // pred_region
          %220 = vsyncadd [#allocation6], 0
          %s222 = sshll.u32 %s2, 4
          %s223 = int_to_ptr.hbm [resolvable:$true] %s222
          %s224 = sshll.u32 [#allocation5], 4
          %s225 = int_to_ptr.vmem [resolvable:$true] %s224
          %227 = dma.hbm_to_vmem [thread:$0]  %s223, 256, %s225, [#allocation6]
        $region20: #{tpu_custom_call.1} parent=11 // pred_fallthru
          _
        // Predicated region
        $region21: #{tpu_custom_call.1} parent=11 // pred_check
          %p228 = pneg %p109
        $region22: #{tpu_custom_call.1} parent=11 // pred_check_branch
          %230 = sbr.rel (%p228) target = $region24
        $region23: #{tpu_custom_call.1} parent=11 // pred_region
          %232 = vsyncadd [#allocation6], 0
          %s233 = sshll.u32 %s3, 4
          %s234 = int_to_ptr.hbm [resolvable:$true] %s233
          %s235 = sshll.u32 [#allocation7], 4
          %s236 = int_to_ptr.vmem [resolvable:$true] %s235
          %241 = dma.hbm_to_vmem [thread:$0]  %s234, 256, %s236, [#allocation6], 128, 128, 8
        $region24: #{tpu_custom_call.1} parent=11 // pred_fallthru
          _
        // Predicated region
        $region25: #{tpu_custom_call.1} parent=11 // pred_check
          %p242 = pneg %p130
        $region26: #{tpu_custom_call.1} parent=11 // pred_check_branch
          %244 = sbr.rel (%p242) target = $region28
        $region27: #{tpu_custom_call.1} parent=11 // pred_region
          _
        $region28: #{tpu_custom_call.1} parent=11 // pred_fallthru
          _
        // Predicated region
        $region29: #{tpu_custom_call.1} parent=11 // pred_check
          %p245 = pneg %p151
        $region30: #{tpu_custom_call.1} parent=11 // pred_check_branch
          %247 = sbr.rel (%p245) target = $region32
        $region31: #{tpu_custom_call.1} parent=11 // pred_region
          _
        $region32: #{tpu_custom_call.1} parent=11 // pred_fallthru
          _
        // Predicated region
        $region33: #{tpu_custom_call.1} parent=11 // pred_check
          %p248 = pneg %p172
        $region34: #{tpu_custom_call.1} parent=11 // pred_check_branch
          %250 = sbr.rel (%p248) target = $region36
        $region35: #{tpu_custom_call.1} parent=11 // pred_region
          _
        $region36: #{tpu_custom_call.1} parent=11 // pred_fallthru
          _
      $region12: #{tpu_custom_call.1} parent=5 // pred_fallthru
        _
      %p251 = scmp.lt.s32.totalorder %s20, 2
      // Predicated region
      $region37: #{tpu_custom_call.1} parent=5 // pred_check
        %p252 = pneg %p251
      $region38: #{tpu_custom_call.1} parent=5 // pred_check_branch
        %254 = sbr.rel (%p252) target = $region40
      $region39: #{tpu_custom_call.1} parent=5 // pred_region
        // Predicated region
        $region41: #{tpu_custom_call.1} parent=39 // pred_check
          %p255 = pneg %p40
        $region42: #{tpu_custom_call.1} parent=39 // pred_check_branch
          %257 = sbr.rel (%p255) target = $region44
        $region43: #{tpu_custom_call.1} parent=39 // pred_region
          %s258 = sand.u32 %s30, 1
          %s259 = scalar_lea.sflag [#allocation3], %s258
          %s260 = sand.u32 %s30, 1
          %s261 = smul.addr %s260, 144
          %s262 = scalar_lea.vmem [#allocation2], %s261
          %264 = vsyncadd %s259, 0
          %s265 = smul.addr %s20, 18
          %s266 = smul.addr %s265, 8
          %s267 = scalar_lea.hbm %s0, %s266
          %s269 = sshll.u32 %s267, 4
          %s270 = int_to_ptr.hbm [resolvable:$true] %s269
          %s271 = sshll.u32 %s262, 4
          %s272 = int_to_ptr.vmem [resolvable:$true] %s271
          %274 = dma.hbm_to_vmem [thread:$0]  %s270, 2304, %s272, %s259
        $region44: #{tpu_custom_call.1} parent=39 // pred_fallthru
          _
      $region40: #{tpu_custom_call.1} parent=5 // pred_fallthru
        _
      %p275 = scmp.le.s32.totalorder 1, %s20
      %p276 = scmp.lt.s32.totalorder %s20, 3
      %p277 = pnand %p275, %p276
      %p278 = pneg %p277
      // Predicated region
      $region45: #{tpu_custom_call.1} parent=5 // pred_check
        _
      $region46: #{tpu_custom_call.1} parent=5 // pred_check_branch
        %280 = sbr.rel (%p277) target = $region48
      $region47: #{tpu_custom_call.1} parent=5 // pred_region
        %s281 = ssub.s32 %s20, 1
        %s282 = sand.u32 %s33, 1
        %s283 = scalar_lea.sflag [#allocation3], %s282
        %s284 = sand.u32 %s33, 1
        %s285 = smul.addr %s284, 144
        %s286 = scalar_lea.vmem [#allocation2], %s285
        // Predicated region
        $region49: #{tpu_custom_call.1} parent=47 // pred_check
          %p287 = pneg %p46
        $region50: #{tpu_custom_call.1} parent=47 // pred_check_branch
          %289 = sbr.rel (%p287) target = $region52
        $region51: #{tpu_custom_call.1} parent=47 // pred_region
          %291 = dma.done %s283, 2304
        $region52: #{tpu_custom_call.1} parent=47 // pred_fallthru
          _
        // Predicated region
        $region53: #{tpu_custom_call.1} parent=47 // pred_check
          %p292 = pneg %p88
        $region54: #{tpu_custom_call.1} parent=47 // pred_check_branch
          %294 = sbr.rel (%p292) target = $region56
        $region55: #{tpu_custom_call.1} parent=47 // pred_region
          %296 = dma.done [#allocation6], 256
        $region56: #{tpu_custom_call.1} parent=47 // pred_fallthru
          _
        // Predicated region
        $region57: #{tpu_custom_call.1} parent=47 // pred_check
          %p297 = pneg %p109
        $region58: #{tpu_custom_call.1} parent=47 // pred_check_branch
          %299 = sbr.rel (%p297) target = $region60
        $region59: #{tpu_custom_call.1} parent=47 // pred_region
          %301 = dma.done [#allocation6], 256
        $region60: #{tpu_custom_call.1} parent=47 // pred_fallthru
          _
        %s302 = sand.u32 %s33, 1
        %s303 = scalar_lea.sflag [#allocation3], %s302
        %s304 = sand.u32 %s33, 1
        %s305 = smul.addr %s304, 144
        %s306 = scalar_lea.vmem [#allocation2], %s305
        %p307 = pneg %p46
        %p308 = pneg %p43
        %p309 = pneg %p67
        %p310 = pneg %p64
        %p311 = pneg %p88
        %p312 = pneg %p85
        %p313 = pneg %p109
        %p314 = pneg %p106
        %p315 = pneg %p130
        %p316 = pneg %p127
        %p317 = pneg %p151
        %p318 = pneg %p148
        %p319 = pneg %p172
        %p320 = pneg %p169
        %p321 = pneg %p198
        %p322 = pneg %p195
        %s323 = sand.u32 %s185, 1
        %s324 = scalar_lea.sflag [#allocation4], %s323
        %s325 = sand.u32 %s185, 1
        %s326 = smul.addr %s325, 128
        %s327 = scalar_lea.vmem [#allocation8], %s326
        %v328 = vld [vmem:[%s1] sm:$0xff]
        %v329 = vld [vmem:[%s1 + $0x8] sm:$0xff]
        %v330 = vld [vmem:[#allocation5] sm:$0xff]
        %v331 = vld [vmem:[#allocation5 + $0x8] sm:$0xff]
        %v332 = vld [vmem:[%s286] sm:$0xff]
        %v333 = vld [vmem:[%s286 + $0x8] sm:$0xff]
        %v334 = vld [vmem:[%s286 + $0x10] sm:$0xff]
        %v335 = vld [vmem:[%s286 + $0x18] sm:$0xff]
        %v336 = vld [vmem:[%s286 + $0x20] sm:$0xff]
        %v337 = vld [vmem:[%s286 + $0x28] sm:$0xff]
        %v338 = vld [vmem:[%s286 + $0x30] sm:$0xff]
        %v339 = vld [vmem:[%s286 + $0x38] sm:$0xff]
        %v340 = vld [vmem:[%s286 + $0x40] sm:$0xff]
        %v341 = vld [vmem:[%s286 + $0x48] sm:$0xff]
        %v342 = vld [vmem:[%s286 + $0x50] sm:$0xff]
        %v343 = vld [vmem:[%s286 + $0x58] sm:$0xff]
        %v344 = vld [vmem:[%s286 + $0x60] sm:$0xff]
        %v345 = vld [vmem:[%s286 + $0x68] sm:$0xff]
        %v346 = vld [vmem:[%s286 + $0x70] sm:$0xff]
        %v347 = vld [vmem:[%s286 + $0x78] sm:$0xff]
        %v348 = vld [vmem:[%s286 + $0x80] sm:$0xff]
        %vm349 = vcmp.ge.s32.totalorder %v328, 1
        %vm350 = vcmp.ge.s32.totalorder %v329, 1
        %vm351 = vcmp.lt.s32.totalorder %v328, 17
        %vm352 = vcmp.lt.s32.totalorder %v329, 17
        %vm353 = vmand %vm349, %vm351
        %vm354 = vmand %vm350, %vm352
        %vm355 = vcmp.ge.s32.totalorder %v330, 1
        %vm356 = vcmp.ge.s32.totalorder %v331, 1
        %vm357 = vmand %vm353, %vm355
        %vm358 = vmand %vm354, %vm356
        %vm359 = vcmp.lt.s32.totalorder %v330, 17
        %vm360 = vcmp.lt.s32.totalorder %v331, 17
        %vm361 = vmand %vm357, %vm359
        %vm362 = vmand %vm358, %vm360
        %v363 = vsel %vm361, 1, 0
        %v364 = vsel %vm362, 1, 0
        %v365 = vcvt.s32.f32 %v363
        %v366 = vcvt.s32.f32 %v364
        %v369 = vperm.slane %v365, 0
        %v370 = vperm.slane %v365, 1
        %v371 = vperm.slane %v365, 2
        %v372 = vperm.slane %v365, 3
        %v373 = vperm.slane %v365, 4
        %v374 = vperm.slane %v365, 5
        %v375 = vperm.slane %v365, 6
        %v376 = vperm.slane %v365, 7
        %v377 = vperm.slane %v366, 0
        %v378 = vperm.slane %v366, 1
        %v379 = vperm.slane %v366, 2
        %v380 = vperm.slane %v366, 3
        %v381 = vperm.slane %v366, 4
        %v382 = vperm.slane %v366, 5
        %v383 = vperm.slane %v366, 6
        %v384 = vperm.slane %v366, 7
        %385 = vrot.lane.b32.xlu0 %v369, 111
        %v386 = vpop.permute.xlu0 %385
        %387 = vrot.lane.b32.xlu0 %v370, 111
        %v388 = vpop.permute.xlu0 %387
        %389 = vrot.lane.b32.xlu0 %v371, 111
        %v390 = vpop.permute.xlu0 %389
        %391 = vrot.lane.b32.xlu0 %v372, 111
        %v392 = vpop.permute.xlu0 %391
        %393 = vrot.lane.b32.xlu0 %v373, 111
        %v394 = vpop.permute.xlu0 %393
        %395 = vrot.lane.b32.xlu0 %v374, 111
        %v396 = vpop.permute.xlu0 %395
        %397 = vrot.lane.b32.xlu0 %v375, 111
        %v398 = vpop.permute.xlu0 %397
        %399 = vrot.lane.b32.xlu0 %v376, 111
        %v400 = vpop.permute.xlu0 %399
        %401 = vrot.lane.b32.xlu0 %v377, 111
        %v402 = vpop.permute.xlu0 %401
        %403 = vrot.lane.b32.xlu0 %v378, 111
        %v404 = vpop.permute.xlu0 %403
        %405 = vrot.lane.b32.xlu0 %v379, 111
        %v406 = vpop.permute.xlu0 %405
        %407 = vrot.lane.b32.xlu0 %v380, 111
        %v408 = vpop.permute.xlu0 %407
        %409 = vrot.lane.b32.xlu0 %v381, 111
        %v410 = vpop.permute.xlu0 %409
        %411 = vrot.lane.b32.xlu0 %v382, 111
        %v412 = vpop.permute.xlu0 %411
        %413 = vrot.lane.b32.xlu0 %v383, 111
        %v414 = vpop.permute.xlu0 %413
        %415 = vrot.lane.b32.xlu0 %v384, 111
        %v416 = vpop.permute.xlu0 %415
        %vm417 = vcmask 908288
        %v418 = vsel %vm417, %v386, %v388
        %v419 = vsel %vm417, %v388, %v390
        %v420 = vsel %vm417, %v390, %v392
        %v421 = vsel %vm417, %v392, %v394
        %v422 = vsel %vm417, %v394, %v396
        %v423 = vsel %vm417, %v396, %v398
        %v424 = vsel %vm417, %v398, %v400
        %v425 = vsel %vm417, %v400, %v402
        %v426 = vsel %vm417, %v402, %v404
        %v427 = vsel %vm417, %v404, %v406
        %v428 = vsel %vm417, %v406, %v408
        %v429 = vsel %vm417, %v408, %v410
        %v430 = vsel %vm417, %v410, %v412
        %v431 = vsel %vm417, %v412, %v414
        %v432 = vsel %vm417, %v414, %v416
        %v450 = vmul.f32 %v332, %v386
        %v451 = vmul.f32 %v333, %v418
        %v452 = vmul.f32 %v334, %v419
        %v453 = vmul.f32 %v335, %v420
        %v454 = vmul.f32 %v336, %v421
        %v455 = vmul.f32 %v337, %v422
        %v456 = vmul.f32 %v338, %v423
        %v457 = vmul.f32 %v339, %v424
        %v458 = vmul.f32 %v340, %v425
        %v459 = vmul.f32 %v341, %v426
        %v460 = vmul.f32 %v342, %v427
        %v461 = vmul.f32 %v343, %v428
        %v462 = vmul.f32 %v344, %v429
        %v463 = vmul.f32 %v345, %v430
        %v464 = vmul.f32 %v346, %v431
        %v465 = vmul.f32 %v347, %v432
        %v466 = vmul.f32 %v348, %v416
        %vm467 = vcmp.ge.s32.totalorder %v330, 0
        %vm468 = vcmp.ge.s32.totalorder %v331, 0
        %vm469 = vmand %vm353, %vm467
        %vm470 = vmand %vm354, %vm468
        %vm471 = vcmp.lt.s32.totalorder %v330, 16
        %vm472 = vcmp.lt.s32.totalorder %v331, 16
        %vm473 = vmand %vm469, %vm471
        %vm474 = vmand %vm470, %vm472
        %v475 = vsel %vm473, 1, 0
        %v476 = vsel %vm474, 1, 0
        %v477 = vcvt.s32.f32 %v475
        %v478 = vcvt.s32.f32 %v476
        %v481 = vperm.slane %v477, 0
        %v482 = vperm.slane %v477, 1
        %v483 = vperm.slane %v477, 2
        %v484 = vperm.slane %v477, 3
        %v485 = vperm.slane %v477, 4
        %v486 = vperm.slane %v477, 5
        %v487 = vperm.slane %v477, 6
        %v488 = vperm.slane %v477, 7
        %v489 = vperm.slane %v478, 0
        %v490 = vperm.slane %v478, 1
        %v491 = vperm.slane %v478, 2
        %v492 = vperm.slane %v478, 3
        %v493 = vperm.slane %v478, 4
        %v494 = vperm.slane %v478, 5
        %v495 = vperm.slane %v478, 6
        %v496 = vperm.slane %v478, 7
        %497 = vrot.lane.b32.xlu0 %v481, 112
        %v498 = vpop.permute.xlu0 %497
        %499 = vrot.lane.b32.xlu0 %v482, 112
        %v500 = vpop.permute.xlu0 %499
        %501 = vrot.lane.b32.xlu0 %v483, 112
        %v502 = vpop.permute.xlu0 %501
        %503 = vrot.lane.b32.xlu0 %v484, 112
        %v504 = vpop.permute.xlu0 %503
        %505 = vrot.lane.b32.xlu0 %v485, 112
        %v506 = vpop.permute.xlu0 %505
        %507 = vrot.lane.b32.xlu0 %v486, 112
        %v508 = vpop.permute.xlu0 %507
        %509 = vrot.lane.b32.xlu0 %v487, 112
        %v510 = vpop.permute.xlu0 %509
        %511 = vrot.lane.b32.xlu0 %v488, 112
        %v512 = vpop.permute.xlu0 %511
        %513 = vrot.lane.b32.xlu0 %v489, 112
        %v514 = vpop.permute.xlu0 %513
        %515 = vrot.lane.b32.xlu0 %v490, 112
        %v516 = vpop.permute.xlu0 %515
        %517 = vrot.lane.b32.xlu0 %v491, 112
        %v518 = vpop.permute.xlu0 %517
        %519 = vrot.lane.b32.xlu0 %v492, 112
        %v520 = vpop.permute.xlu0 %519
        %521 = vrot.lane.b32.xlu0 %v493, 112
        %v522 = vpop.permute.xlu0 %521
        %523 = vrot.lane.b32.xlu0 %v494, 112
        %v524 = vpop.permute.xlu0 %523
        %525 = vrot.lane.b32.xlu0 %v495, 112
        %v526 = vpop.permute.xlu0 %525
        %527 = vrot.lane.b32.xlu0 %v496, 112
        %v528 = vpop.permute.xlu0 %527
        %vm529 = vcmask 916480
        %v530 = vsel %vm529, %v498, %v500
        %v531 = vsel %vm529, %v500, %v502
        %v532 = vsel %vm529, %v502, %v504
        %v533 = vsel %vm529, %v504, %v506
        %v534 = vsel %vm529, %v506, %v508
        %v535 = vsel %vm529, %v508, %v510
        %v536 = vsel %vm529, %v510, %v512
        %v537 = vsel %vm529, %v512, %v514
        %v538 = vsel %vm529, %v514, %v516
        %v539 = vsel %vm529, %v516, %v518
        %v540 = vsel %vm529, %v518, %v520
        %v541 = vsel %vm529, %v520, %v522
        %v542 = vsel %vm529, %v522, %v524
        %v543 = vsel %vm529, %v524, %v526
        %v544 = vsel %vm529, %v526, %v528
        %v562 = vmul.f32 %v332, %v498
        %v563 = vmul.f32 %v333, %v530
        %v564 = vmul.f32 %v334, %v531
        %v565 = vmul.f32 %v335, %v532
        %v566 = vmul.f32 %v336, %v533
        %v567 = vmul.f32 %v337, %v534
        %v568 = vmul.f32 %v338, %v535
        %v569 = vmul.f32 %v339, %v536
        %v570 = vmul.f32 %v340, %v537
        %v571 = vmul.f32 %v341, %v538
        %v572 = vmul.f32 %v342, %v539
        %v573 = vmul.f32 %v343, %v540
        %v574 = vmul.f32 %v344, %v541
        %v575 = vmul.f32 %v345, %v542
        %v576 = vmul.f32 %v346, %v543
        %v577 = vmul.f32 %v347, %v544
        %v578 = vmul.f32 %v348, %v528
        %vm579 = vcmp.ge.s32.totalorder %v330, 4294967295
        %vm580 = vcmp.ge.s32.totalorder %v331, 4294967295
        %vm581 = vmand %vm353, %vm579
        %vm582 = vmand %vm354, %vm580
        %vm583 = vcmp.lt.s32.totalorder %v330, 15
        %vm584 = vcmp.lt.s32.totalorder %v331, 15
        %vm585 = vmand %vm581, %vm583
        %vm586 = vmand %vm582, %vm584
        %v587 = vsel %vm585, 1, 0
        %v588 = vsel %vm586, 1, 0
        %v589 = vcvt.s32.f32 %v587
        %v590 = vcvt.s32.f32 %v588
        %v593 = vperm.slane %v589, 0
        %v594 = vperm.slane %v589, 1
        %v595 = vperm.slane %v589, 2
        %v596 = vperm.slane %v589, 3
        %v597 = vperm.slane %v589, 4
        %v598 = vperm.slane %v589, 5
        %v599 = vperm.slane %v589, 6
        %v600 = vperm.slane %v589, 7
        %v601 = vperm.slane %v590, 0
        %v602 = vperm.slane %v590, 1
        %v603 = vperm.slane %v590, 2
        %v604 = vperm.slane %v590, 3
        %v605 = vperm.slane %v590, 4
        %v606 = vperm.slane %v590, 5
        %v607 = vperm.slane %v590, 6
        %v608 = vperm.slane %v590, 7
        %609 = vrot.lane.b32.xlu0 %v593, 113
        %v610 = vpop.permute.xlu0 %609
        %611 = vrot.lane.b32.xlu0 %v594, 113
        %v612 = vpop.permute.xlu0 %611
        %613 = vrot.lane.b32.xlu0 %v595, 113
        %v614 = vpop.permute.xlu0 %613
        %615 = vrot.lane.b32.xlu0 %v596, 113
        %v616 = vpop.permute.xlu0 %615
        %617 = vrot.lane.b32.xlu0 %v597, 113
        %v618 = vpop.permute.xlu0 %617
        %619 = vrot.lane.b32.xlu0 %v598, 113
        %v620 = vpop.permute.xlu0 %619
        %621 = vrot.lane.b32.xlu0 %v599, 113
        %v622 = vpop.permute.xlu0 %621
        %623 = vrot.lane.b32.xlu0 %v600, 113
        %v624 = vpop.permute.xlu0 %623
        %625 = vrot.lane.b32.xlu0 %v601, 113
        %v626 = vpop.permute.xlu0 %625
        %627 = vrot.lane.b32.xlu0 %v602, 113
        %v628 = vpop.permute.xlu0 %627
        %629 = vrot.lane.b32.xlu0 %v603, 113
        %v630 = vpop.permute.xlu0 %629
        %631 = vrot.lane.b32.xlu0 %v604, 113
        %v632 = vpop.permute.xlu0 %631
        %633 = vrot.lane.b32.xlu0 %v605, 113
        %v634 = vpop.permute.xlu0 %633
        %635 = vrot.lane.b32.xlu0 %v606, 113
        %v636 = vpop.permute.xlu0 %635
        %637 = vrot.lane.b32.xlu0 %v607, 113
        %v638 = vpop.permute.xlu0 %637
        %639 = vrot.lane.b32.xlu0 %v608, 113
        %v640 = vpop.permute.xlu0 %639
        %vm641 = vcmask 924672
        %v642 = vsel %vm641, %v610, %v612
        %v643 = vsel %vm641, %v612, %v614
        %v644 = vsel %vm641, %v614, %v616
        %v645 = vsel %vm641, %v616, %v618
        %v646 = vsel %vm641, %v618, %v620
        %v647 = vsel %vm641, %v620, %v622
        %v648 = vsel %vm641, %v622, %v624
        %v649 = vsel %vm641, %v624, %v626
        %v650 = vsel %vm641, %v626, %v628
        %v651 = vsel %vm641, %v628, %v630
        %v652 = vsel %vm641, %v630, %v632
        %v653 = vsel %vm641, %v632, %v634
        %v654 = vsel %vm641, %v634, %v636
        %v655 = vsel %vm641, %v636, %v638
        %v656 = vsel %vm641, %v638, %v640
        %v674 = vmul.f32 %v332, %v610
        %v675 = vmul.f32 %v333, %v642
        %v676 = vmul.f32 %v334, %v643
        %v677 = vmul.f32 %v335, %v644
        %v678 = vmul.f32 %v336, %v645
        %v679 = vmul.f32 %v337, %v646
        %v680 = vmul.f32 %v338, %v647
        %v681 = vmul.f32 %v339, %v648
        %v682 = vmul.f32 %v340, %v649
        %v683 = vmul.f32 %v341, %v650
        %v684 = vmul.f32 %v342, %v651
        %v685 = vmul.f32 %v343, %v652
        %v686 = vmul.f32 %v344, %v653
        %v687 = vmul.f32 %v345, %v654
        %v688 = vmul.f32 %v346, %v655
        %v689 = vmul.f32 %v347, %v656
        %v690 = vmul.f32 %v348, %v640
        %vm691 = vcmp.ge.s32.totalorder %v328, 0
        %vm692 = vcmp.ge.s32.totalorder %v329, 0
        %vm693 = vcmp.lt.s32.totalorder %v328, 16
        %vm694 = vcmp.lt.s32.totalorder %v329, 16
        %vm695 = vmand %vm691, %vm693
        %vm696 = vmand %vm692, %vm694
        %vm697 = vmand %vm695, %vm355
        %vm698 = vmand %vm696, %vm356
        %vm699 = vmand %vm697, %vm359
        %vm700 = vmand %vm698, %vm360
        %v701 = vsel %vm699, 1, 0
        %v702 = vsel %vm700, 1, 0
        %v703 = vcvt.s32.f32 %v701
        %v704 = vcvt.s32.f32 %v702
        %v707 = vperm.slane %v703, 0
        %v708 = vperm.slane %v703, 1
        %v709 = vperm.slane %v703, 2
        %v710 = vperm.slane %v703, 3
        %v711 = vperm.slane %v703, 4
        %v712 = vperm.slane %v703, 5
        %v713 = vperm.slane %v703, 6
        %v714 = vperm.slane %v703, 7
        %v715 = vperm.slane %v704, 0
        %v716 = vperm.slane %v704, 1
        %v717 = vperm.slane %v704, 2
        %v718 = vperm.slane %v704, 3
        %v719 = vperm.slane %v704, 4
        %v720 = vperm.slane %v704, 5
        %v721 = vperm.slane %v704, 6
        %v722 = vperm.slane %v704, 7
        %723 = vrot.lane.b32.xlu0 %v707, 127
        %v724 = vpop.permute.xlu0 %723
        %725 = vrot.lane.b32.xlu0 %v708, 127
        %v726 = vpop.permute.xlu0 %725
        %727 = vrot.lane.b32.xlu0 %v709, 127
        %v728 = vpop.permute.xlu0 %727
        %729 = vrot.lane.b32.xlu0 %v710, 127
        %v730 = vpop.permute.xlu0 %729
        %731 = vrot.lane.b32.xlu0 %v711, 127
        %v732 = vpop.permute.xlu0 %731
        %733 = vrot.lane.b32.xlu0 %v712, 127
        %v734 = vpop.permute.xlu0 %733
        %735 = vrot.lane.b32.xlu0 %v713, 127
        %v736 = vpop.permute.xlu0 %735
        %737 = vrot.lane.b32.xlu0 %v714, 127
        %v738 = vpop.permute.xlu0 %737
        %739 = vrot.lane.b32.xlu0 %v715, 127
        %v740 = vpop.permute.xlu0 %739
        %741 = vrot.lane.b32.xlu0 %v716, 127
        %v742 = vpop.permute.xlu0 %741
        %743 = vrot.lane.b32.xlu0 %v717, 127
        %v744 = vpop.permute.xlu0 %743
        %745 = vrot.lane.b32.xlu0 %v718, 127
        %v746 = vpop.permute.xlu0 %745
        %747 = vrot.lane.b32.xlu0 %v719, 127
        %v748 = vpop.permute.xlu0 %747
        %749 = vrot.lane.b32.xlu0 %v720, 127
        %v750 = vpop.permute.xlu0 %749
        %751 = vrot.lane.b32.xlu0 %v721, 127
        %v752 = vpop.permute.xlu0 %751
        %753 = vrot.lane.b32.xlu0 %v722, 127
        %v754 = vpop.permute.xlu0 %753
        %vm755 = vcmask 1039360
        %v756 = vsel %vm755, %v724, %v726
        %v757 = vsel %vm755, %v726, %v728
        %v758 = vsel %vm755, %v728, %v730
        %v759 = vsel %vm755, %v730, %v732
        %v760 = vsel %vm755, %v732, %v734
        %v761 = vsel %vm755, %v734, %v736
        %v762 = vsel %vm755, %v736, %v738
        %v763 = vsel %vm755, %v738, %v740
        %v764 = vsel %vm755, %v740, %v742
        %v765 = vsel %vm755, %v742, %v744
        %v766 = vsel %vm755, %v744, %v746
        %v767 = vsel %vm755, %v746, %v748
        %v768 = vsel %vm755, %v748, %v750
        %v769 = vsel %vm755, %v750, %v752
        %v770 = vsel %vm755, %v752, %v754
        %v788 = vmul.f32 %v332, %v724
        %v789 = vmul.f32 %v333, %v756
        %v790 = vmul.f32 %v334, %v757
        %v791 = vmul.f32 %v335, %v758
        %v792 = vmul.f32 %v336, %v759
        %v793 = vmul.f32 %v337, %v760
        %v794 = vmul.f32 %v338, %v761
        %v795 = vmul.f32 %v339, %v762
        %v796 = vmul.f32 %v340, %v763
        %v797 = vmul.f32 %v341, %v764
        %v798 = vmul.f32 %v342, %v765
        %v799 = vmul.f32 %v343, %v766
        %v800 = vmul.f32 %v344, %v767
        %v801 = vmul.f32 %v345, %v768
        %v802 = vmul.f32 %v346, %v769
        %v803 = vmul.f32 %v347, %v770
        %v804 = vmul.f32 %v348, %v754
        %vm805 = vmand %vm695, %vm467
        %vm806 = vmand %vm696, %vm468
        %vm807 = vmand %vm805, %vm471
        %vm808 = vmand %vm806, %vm472
        %v809 = vsel %vm807, 1, 0
        %v810 = vsel %vm808, 1, 0
        %v811 = vcvt.s32.f32 %v809
        %v812 = vcvt.s32.f32 %v810
        %v815 = vperm.slane %v811, 0
        %v816 = vperm.slane %v811, 1
        %v817 = vperm.slane %v811, 2
        %v818 = vperm.slane %v811, 3
        %v819 = vperm.slane %v811, 4
        %v820 = vperm.slane %v811, 5
        %v821 = vperm.slane %v811, 6
        %v822 = vperm.slane %v811, 7
        %v823 = vperm.slane %v812, 0
        %v824 = vperm.slane %v812, 1
        %v825 = vperm.slane %v812, 2
        %v826 = vperm.slane %v812, 3
        %v827 = vperm.slane %v812, 4
        %v828 = vperm.slane %v812, 5
        %v829 = vperm.slane %v812, 6
        %v830 = vperm.slane %v812, 7
        %v847 = vmul.f32 %v333, %v815
        %v848 = vmul.f32 %v334, %v816
        %v849 = vmul.f32 %v335, %v817
        %v850 = vmul.f32 %v336, %v818
        %v851 = vmul.f32 %v337, %v819
        %v852 = vmul.f32 %v338, %v820
        %v853 = vmul.f32 %v339, %v821
        %v854 = vmul.f32 %v340, %v822
        %v855 = vmul.f32 %v341, %v823
        %v856 = vmul.f32 %v342, %v824
        %v857 = vmul.f32 %v343, %v825
        %v858 = vmul.f32 %v344, %v826
        %v859 = vmul.f32 %v345, %v827
        %v860 = vmul.f32 %v346, %v828
        %v861 = vmul.f32 %v347, %v829
        %v862 = vmul.f32 %v348, %v830
        %v863 = vld [vmem:[%s286 + $0x8] sm:$0xff]
        %v864 = vld [vmem:[%s286 + $0x10] sm:$0xff]
        %v865 = vld [vmem:[%s286 + $0x18] sm:$0xff]
        %v866 = vld [vmem:[%s286 + $0x20] sm:$0xff]
        %v867 = vld [vmem:[%s286 + $0x28] sm:$0xff]
        %v868 = vld [vmem:[%s286 + $0x30] sm:$0xff]
        %v869 = vld [vmem:[%s286 + $0x38] sm:$0xff]
        %v870 = vld [vmem:[%s286 + $0x40] sm:$0xff]
        %v871 = vld [vmem:[%s286 + $0x48] sm:$0xff]
        %v872 = vld [vmem:[%s286 + $0x50] sm:$0xff]
        %v873 = vld [vmem:[%s286 + $0x58] sm:$0xff]
        %v874 = vld [vmem:[%s286 + $0x60] sm:$0xff]
        %v875 = vld [vmem:[%s286 + $0x68] sm:$0xff]
        %v876 = vld [vmem:[%s286 + $0x70] sm:$0xff]
        %v877 = vld [vmem:[%s286 + $0x78] sm:$0xff]
        %v878 = vld [vmem:[%s286 + $0x80] sm:$0xff]
        %v879 = vld [vmem:[%s286 + $0x88] sm:$0xff]
        %vm880 = vmand %vm695, %vm579
        %vm881 = vmand %vm696, %vm580
        %vm882 = vmand %vm880, %vm583
        %vm883 = vmand %vm881, %vm584
        %v884 = vsel %vm882, 1, 0
        %v885 = vsel %vm883, 1, 0
        %v886 = vcvt.s32.f32 %v884
        %v887 = vcvt.s32.f32 %v885
        %v890 = vperm.slane %v886, 0
        %v891 = vperm.slane %v886, 1
        %v892 = vperm.slane %v886, 2
        %v893 = vperm.slane %v886, 3
        %v894 = vperm.slane %v886, 4
        %v895 = vperm.slane %v886, 5
        %v896 = vperm.slane %v886, 6
        %v897 = vperm.slane %v886, 7
        %v898 = vperm.slane %v887, 0
        %v899 = vperm.slane %v887, 1
        %v900 = vperm.slane %v887, 2
        %v901 = vperm.slane %v887, 3
        %v902 = vperm.slane %v887, 4
        %v903 = vperm.slane %v887, 5
        %v904 = vperm.slane %v887, 6
        %v905 = vperm.slane %v887, 7
        %906 = vrot.lane.b32.xlu0 %v890, 1
        %v907 = vpop.permute.xlu0 %906
        %908 = vrot.lane.b32.xlu0 %v891, 1
        %v909 = vpop.permute.xlu0 %908
        %910 = vrot.lane.b32.xlu0 %v892, 1
        %v911 = vpop.permute.xlu0 %910
        %912 = vrot.lane.b32.xlu0 %v893, 1
        %v913 = vpop.permute.xlu0 %912
        %914 = vrot.lane.b32.xlu0 %v894, 1
        %v915 = vpop.permute.xlu0 %914
        %916 = vrot.lane.b32.xlu0 %v895, 1
        %v917 = vpop.permute.xlu0 %916
        %918 = vrot.lane.b32.xlu0 %v896, 1
        %v919 = vpop.permute.xlu0 %918
        %920 = vrot.lane.b32.xlu0 %v897, 1
        %v921 = vpop.permute.xlu0 %920
        %922 = vrot.lane.b32.xlu0 %v898, 1
        %v923 = vpop.permute.xlu0 %922
        %924 = vrot.lane.b32.xlu0 %v899, 1
        %v925 = vpop.permute.xlu0 %924
        %926 = vrot.lane.b32.xlu0 %v900, 1
        %v927 = vpop.permute.xlu0 %926
        %928 = vrot.lane.b32.xlu0 %v901, 1
        %v929 = vpop.permute.xlu0 %928
        %930 = vrot.lane.b32.xlu0 %v902, 1
        %v931 = vpop.permute.xlu0 %930
        %932 = vrot.lane.b32.xlu0 %v903, 1
        %v933 = vpop.permute.xlu0 %932
        %934 = vrot.lane.b32.xlu0 %v904, 1
        %v935 = vpop.permute.xlu0 %934
        %936 = vrot.lane.b32.xlu0 %v905, 1
        %v937 = vpop.permute.xlu0 %936
        %vm938 = vcmask 7168
        %v939 = vsel %vm938, %v907, %v909
        %v940 = vsel %vm938, %v909, %v911
        %v941 = vsel %vm938, %v911, %v913
        %v942 = vsel %vm938, %v913, %v915
        %v943 = vsel %vm938, %v915, %v917
        %v944 = vsel %vm938, %v917, %v919
        %v945 = vsel %vm938, %v919, %v921
        %v946 = vsel %vm938, %v921, %v923
        %v947 = vsel %vm938, %v923, %v925
        %v948 = vsel %vm938, %v925, %v927
        %v949 = vsel %vm938, %v927, %v929
        %v950 = vsel %vm938, %v929, %v931
        %v951 = vsel %vm938, %v931, %v933
        %v952 = vsel %vm938, %v933, %v935
        %v953 = vsel %vm938, %v935, %v937
        %v971 = vmul.f32 %v863, %v907
        %v972 = vmul.f32 %v864, %v939
        %v973 = vmul.f32 %v865, %v940
        %v974 = vmul.f32 %v866, %v941
        %v975 = vmul.f32 %v867, %v942
        %v976 = vmul.f32 %v868, %v943
        %v977 = vmul.f32 %v869, %v944
        %v978 = vmul.f32 %v870, %v945
        %v979 = vmul.f32 %v871, %v946
        %v980 = vmul.f32 %v872, %v947
        %v981 = vmul.f32 %v873, %v948
        %v982 = vmul.f32 %v874, %v949
        %v983 = vmul.f32 %v875, %v950
        %v984 = vmul.f32 %v876, %v951
        %v985 = vmul.f32 %v877, %v952
        %v986 = vmul.f32 %v878, %v953
        %v987 = vmul.f32 %v879, %v937
        %vm988 = vcmp.ge.s32.totalorder %v328, 4294967295
        %vm989 = vcmp.ge.s32.totalorder %v329, 4294967295
        %vm990 = vcmp.lt.s32.totalorder %v328, 15
        %vm991 = vcmp.lt.s32.totalorder %v329, 15
        %vm992 = vmand %vm988, %vm990
        %vm993 = vmand %vm989, %vm991
        %vm994 = vmand %vm992, %vm355
        %vm995 = vmand %vm993, %vm356
        %vm996 = vmand %vm994, %vm359
        %vm997 = vmand %vm995, %vm360
        %v998 = vsel %vm996, 1, 0
        %v999 = vsel %vm997, 1, 0
        %v1000 = vcvt.s32.f32 %v998
        %v1001 = vcvt.s32.f32 %v999
        %v1004 = vperm.slane %v1000, 0
        %v1005 = vperm.slane %v1000, 1
        %v1006 = vperm.slane %v1000, 2
        %v1007 = vperm.slane %v1000, 3
        %v1008 = vperm.slane %v1000, 4
        %v1009 = vperm.slane %v1000, 5
        %v1010 = vperm.slane %v1000, 6
        %v1011 = vperm.slane %v1000, 7
        %v1012 = vperm.slane %v1001, 0
        %v1013 = vperm.slane %v1001, 1
        %v1014 = vperm.slane %v1001, 2
        %v1015 = vperm.slane %v1001, 3
        %v1016 = vperm.slane %v1001, 4
        %v1017 = vperm.slane %v1001, 5
        %v1018 = vperm.slane %v1001, 6
        %v1019 = vperm.slane %v1001, 7
        %1020 = vrot.lane.b32.xlu0 %v1004, 15
        %v1021 = vpop.permute.xlu0 %1020
        %1022 = vrot.lane.b32.xlu0 %v1005, 15
        %v1023 = vpop.permute.xlu0 %1022
        %1024 = vrot.lane.b32.xlu0 %v1006, 15
        %v1025 = vpop.permute.xlu0 %1024
        %1026 = vrot.lane.b32.xlu0 %v1007, 15
        %v1027 = vpop.permute.xlu0 %1026
        %1028 = vrot.lane.b32.xlu0 %v1008, 15
        %v1029 = vpop.permute.xlu0 %1028
        %1030 = vrot.lane.b32.xlu0 %v1009, 15
        %v1031 = vpop.permute.xlu0 %1030
        %1032 = vrot.lane.b32.xlu0 %v1010, 15
        %v1033 = vpop.permute.xlu0 %1032
        %1034 = vrot.lane.b32.xlu0 %v1011, 15
        %v1035 = vpop.permute.xlu0 %1034
        %1036 = vrot.lane.b32.xlu0 %v1012, 15
        %v1037 = vpop.permute.xlu0 %1036
        %1038 = vrot.lane.b32.xlu0 %v1013, 15
        %v1039 = vpop.permute.xlu0 %1038
        %1040 = vrot.lane.b32.xlu0 %v1014, 15
        %v1041 = vpop.permute.xlu0 %1040
        %1042 = vrot.lane.b32.xlu0 %v1015, 15
        %v1043 = vpop.permute.xlu0 %1042
        %1044 = vrot.lane.b32.xlu0 %v1016, 15
        %v1045 = vpop.permute.xlu0 %1044
        %1046 = vrot.lane.b32.xlu0 %v1017, 15
        %v1047 = vpop.permute.xlu0 %1046
        %1048 = vrot.lane.b32.xlu0 %v1018, 15
        %v1049 = vpop.permute.xlu0 %1048
        %1050 = vrot.lane.b32.xlu0 %v1019, 15
        %v1051 = vpop.permute.xlu0 %1050
        %vm1052 = vcmask 121856
        %v1053 = vsel %vm1052, %v1021, %v1023
        %v1054 = vsel %vm1052, %v1023, %v1025
        %v1055 = vsel %vm1052, %v1025, %v1027
        %v1056 = vsel %vm1052, %v1027, %v1029
        %v1057 = vsel %vm1052, %v1029, %v1031
        %v1058 = vsel %vm1052, %v1031, %v1033
        %v1059 = vsel %vm1052, %v1033, %v1035
        %v1060 = vsel %vm1052, %v1035, %v1037
        %v1061 = vsel %vm1052, %v1037, %v1039
        %v1062 = vsel %vm1052, %v1039, %v1041
        %v1063 = vsel %vm1052, %v1041, %v1043
        %v1064 = vsel %vm1052, %v1043, %v1045
        %v1065 = vsel %vm1052, %v1045, %v1047
        %v1066 = vsel %vm1052, %v1047, %v1049
        %v1067 = vsel %vm1052, %v1049, %v1051
        %v1085 = vmul.f32 %v863, %v1021
        %v1086 = vmul.f32 %v864, %v1053
        %v1087 = vmul.f32 %v865, %v1054
        %v1088 = vmul.f32 %v866, %v1055
        %v1089 = vmul.f32 %v867, %v1056
        %v1090 = vmul.f32 %v868, %v1057
        %v1091 = vmul.f32 %v869, %v1058
        %v1092 = vmul.f32 %v870, %v1059
        %v1093 = vmul.f32 %v871, %v1060
        %v1094 = vmul.f32 %v872, %v1061
        %v1095 = vmul.f32 %v873, %v1062
        %v1096 = vmul.f32 %v874, %v1063
        %v1097 = vmul.f32 %v875, %v1064
        %v1098 = vmul.f32 %v876, %v1065
        %v1099 = vmul.f32 %v877, %v1066
        %v1100 = vmul.f32 %v878, %v1067
        %v1101 = vmul.f32 %v879, %v1051
        %vm1102 = vmand %vm992, %vm467
        %vm1103 = vmand %vm993, %vm468
        %vm1104 = vmand %vm1102, %vm471
        %vm1105 = vmand %vm1103, %vm472
        %v1106 = vsel %vm1104, 1, 0
        %v1107 = vsel %vm1105, 1, 0
        %v1108 = vcvt.s32.f32 %v1106
        %v1109 = vcvt.s32.f32 %v1107
        %v1112 = vperm.slane %v1108, 0
        %v1113 = vperm.slane %v1108, 1
        %v1114 = vperm.slane %v1108, 2
        %v1115 = vperm.slane %v1108, 3
        %v1116 = vperm.slane %v1108, 4
        %v1117 = vperm.slane %v1108, 5
        %v1118 = vperm.slane %v1108, 6
        %v1119 = vperm.slane %v1108, 7
        %v1120 = vperm.slane %v1109, 0
        %v1121 = vperm.slane %v1109, 1
        %v1122 = vperm.slane %v1109, 2
        %v1123 = vperm.slane %v1109, 3
        %v1124 = vperm.slane %v1109, 4
        %v1125 = vperm.slane %v1109, 5
        %v1126 = vperm.slane %v1109, 6
        %v1127 = vperm.slane %v1109, 7
        %1128 = vrot.lane.b32.xlu0 %v1112, 16
        %v1129 = vpop.permute.xlu0 %1128
        %1130 = vrot.lane.b32.xlu0 %v1113, 16
        %v1131 = vpop.permute.xlu0 %1130
        %1132 = vrot.lane.b32.xlu0 %v1114, 16
        %v1133 = vpop.permute.xlu0 %1132
        %1134 = vrot.lane.b32.xlu0 %v1115, 16
        %v1135 = vpop.permute.xlu0 %1134
        %1136 = vrot.lane.b32.xlu0 %v1116, 16
        %v1137 = vpop.permute.xlu0 %1136
        %1138 = vrot.lane.b32.xlu0 %v1117, 16
        %v1139 = vpop.permute.xlu0 %1138
        %1140 = vrot.lane.b32.xlu0 %v1118, 16
        %v1141 = vpop.permute.xlu0 %1140
        %1142 = vrot.lane.b32.xlu0 %v1119, 16
        %v1143 = vpop.permute.xlu0 %1142
        %1144 = vrot.lane.b32.xlu0 %v1120, 16
        %v1145 = vpop.permute.xlu0 %1144
        %1146 = vrot.lane.b32.xlu0 %v1121, 16
        %v1147 = vpop.permute.xlu0 %1146
        %1148 = vrot.lane.b32.xlu0 %v1122, 16
        %v1149 = vpop.permute.xlu0 %1148
        %1150 = vrot.lane.b32.xlu0 %v1123, 16
        %v1151 = vpop.permute.xlu0 %1150
        %1152 = vrot.lane.b32.xlu0 %v1124, 16
        %v1153 = vpop.permute.xlu0 %1152
        %1154 = vrot.lane.b32.xlu0 %v1125, 16
        %v1155 = vpop.permute.xlu0 %1154
        %1156 = vrot.lane.b32.xlu0 %v1126, 16
        %v1157 = vpop.permute.xlu0 %1156
        %1158 = vrot.lane.b32.xlu0 %v1127, 16
        %v1159 = vpop.permute.xlu0 %1158
        %vm1160 = vcmask 130048
        %v1161 = vsel %vm1160, %v1129, %v1131
        %v1162 = vsel %vm1160, %v1131, %v1133
        %v1163 = vsel %vm1160, %v1133, %v1135
        %v1164 = vsel %vm1160, %v1135, %v1137
        %v1165 = vsel %vm1160, %v1137, %v1139
        %v1166 = vsel %vm1160, %v1139, %v1141
        %v1167 = vsel %vm1160, %v1141, %v1143
        %v1168 = vsel %vm1160, %v1143, %v1145
        %v1169 = vsel %vm1160, %v1145, %v1147
        %v1170 = vsel %vm1160, %v1147, %v1149
        %v1171 = vsel %vm1160, %v1149, %v1151
        %v1172 = vsel %vm1160, %v1151, %v1153
        %v1173 = vsel %vm1160, %v1153, %v1155
        %v1174 = vsel %vm1160, %v1155, %v1157
        %v1175 = vsel %vm1160, %v1157, %v1159
        %v1193 = vmul.f32 %v863, %v1129
        %v1194 = vmul.f32 %v864, %v1161
        %v1195 = vmul.f32 %v865, %v1162
        %v1196 = vmul.f32 %v866, %v1163
        %v1197 = vmul.f32 %v867, %v1164
        %v1198 = vmul.f32 %v868, %v1165
        %v1199 = vmul.f32 %v869, %v1166
        %v1200 = vmul.f32 %v870, %v1167
        %v1201 = vmul.f32 %v871, %v1168
        %v1202 = vmul.f32 %v872, %v1169
        %v1203 = vmul.f32 %v873, %v1170
        %v1204 = vmul.f32 %v874, %v1171
        %v1205 = vmul.f32 %v875, %v1172
        %v1206 = vmul.f32 %v876, %v1173
        %v1207 = vmul.f32 %v877, %v1174
        %v1208 = vmul.f32 %v878, %v1175
        %v1209 = vmul.f32 %v879, %v1159
        %vm1210 = vmand %vm992, %vm579
        %vm1211 = vmand %vm993, %vm580
        %vm1212 = vmand %vm1210, %vm583
        %vm1213 = vmand %vm1211, %vm584
        %v1214 = vsel %vm1212, 1, 0
        %v1215 = vsel %vm1213, 1, 0
        %v1216 = vcvt.s32.f32 %v1214
        %v1217 = vcvt.s32.f32 %v1215
        %v1220 = vperm.slane %v1216, 0
        %v1221 = vperm.slane %v1216, 1
        %v1222 = vperm.slane %v1216, 2
        %v1223 = vperm.slane %v1216, 3
        %v1224 = vperm.slane %v1216, 4
        %v1225 = vperm.slane %v1216, 5
        %v1226 = vperm.slane %v1216, 6
        %v1227 = vperm.slane %v1216, 7
        %v1228 = vperm.slane %v1217, 0
        %v1229 = vperm.slane %v1217, 1
        %v1230 = vperm.slane %v1217, 2
        %v1231 = vperm.slane %v1217, 3
        %v1232 = vperm.slane %v1217, 4
        %v1233 = vperm.slane %v1217, 5
        %v1234 = vperm.slane %v1217, 6
        %v1235 = vperm.slane %v1217, 7
        %1236 = vrot.lane.b32.xlu0 %v1220, 17
        %v1237 = vpop.permute.xlu0 %1236
        %1238 = vrot.lane.b32.xlu0 %v1221, 17
        %v1239 = vpop.permute.xlu0 %1238
        %1240 = vrot.lane.b32.xlu0 %v1222, 17
        %v1241 = vpop.permute.xlu0 %1240
        %1242 = vrot.lane.b32.xlu0 %v1223, 17
        %v1243 = vpop.permute.xlu0 %1242
        %1244 = vrot.lane.b32.xlu0 %v1224, 17
        %v1245 = vpop.permute.xlu0 %1244
        %1246 = vrot.lane.b32.xlu0 %v1225, 17
        %v1247 = vpop.permute.xlu0 %1246
        %1248 = vrot.lane.b32.xlu0 %v1226, 17
        %v1249 = vpop.permute.xlu0 %1248
        %1250 = vrot.lane.b32.xlu0 %v1227, 17
        %v1251 = vpop.permute.xlu0 %1250
        %1252 = vrot.lane.b32.xlu0 %v1228, 17
        %v1253 = vpop.permute.xlu0 %1252
        %1254 = vrot.lane.b32.xlu0 %v1229, 17
        %v1255 = vpop.permute.xlu0 %1254
        %1256 = vrot.lane.b32.xlu0 %v1230, 17
        %v1257 = vpop.permute.xlu0 %1256
        %1258 = vrot.lane.b32.xlu0 %v1231, 17
        %v1259 = vpop.permute.xlu0 %1258
        %1260 = vrot.lane.b32.xlu0 %v1232, 17
        %v1261 = vpop.permute.xlu0 %1260
        %1262 = vrot.lane.b32.xlu0 %v1233, 17
        %v1263 = vpop.permute.xlu0 %1262
        %1264 = vrot.lane.b32.xlu0 %v1234, 17
        %v1265 = vpop.permute.xlu0 %1264
        %1266 = vrot.lane.b32.xlu0 %v1235, 17
        %v1267 = vpop.permute.xlu0 %1266
        %vm1268 = vcmask 138240
        %v1269 = vsel %vm1268, %v1237, %v1239
        %v1270 = vsel %vm1268, %v1239, %v1241
        %v1271 = vsel %vm1268, %v1241, %v1243
        %v1272 = vsel %vm1268, %v1243, %v1245
        %v1273 = vsel %vm1268, %v1245, %v1247
        %v1274 = vsel %vm1268, %v1247, %v1249
        %v1275 = vsel %vm1268, %v1249, %v1251
        %v1276 = vsel %vm1268, %v1251, %v1253
        %v1277 = vsel %vm1268, %v1253, %v1255
        %v1278 = vsel %vm1268, %v1255, %v1257
        %v1279 = vsel %vm1268, %v1257, %v1259
        %v1280 = vsel %vm1268, %v1259, %v1261
        %v1281 = vsel %vm1268, %v1261, %v1263
        %v1282 = vsel %vm1268, %v1263, %v1265
        %v1283 = vsel %vm1268, %v1265, %v1267
        %v1301 = vmul.f32 %v863, %v1237
        %v1302 = vmul.f32 %v864, %v1269
        %v1303 = vmul.f32 %v865, %v1270
        %v1304 = vmul.f32 %v866, %v1271
        %v1305 = vmul.f32 %v867, %v1272
        %v1306 = vmul.f32 %v868, %v1273
        %v1307 = vmul.f32 %v869, %v1274
        %v1308 = vmul.f32 %v870, %v1275
        %v1309 = vmul.f32 %v871, %v1276
        %v1310 = vmul.f32 %v872, %v1277
        %v1311 = vmul.f32 %v873, %v1278
        %v1312 = vmul.f32 %v874, %v1279
        %v1313 = vmul.f32 %v875, %v1280
        %v1314 = vmul.f32 %v876, %v1281
        %v1315 = vmul.f32 %v877, %v1282
        %v1316 = vmul.f32 %v878, %v1283
        %v1317 = vmul.f32 %v879, %v1267
        %1335 = vrot.lane.b32.xlu0 %v562, 127
        %v1336 = vpop.permute.xlu0 %1335
        %1337 = vrot.lane.b32.xlu0 %v563, 127
        %v1338 = vpop.permute.xlu0 %1337
        %1339 = vrot.lane.b32.xlu0 %v564, 127
        %v1340 = vpop.permute.xlu0 %1339
        %1341 = vrot.lane.b32.xlu0 %v565, 127
        %v1342 = vpop.permute.xlu0 %1341
        %1343 = vrot.lane.b32.xlu0 %v566, 127
        %v1344 = vpop.permute.xlu0 %1343
        %1345 = vrot.lane.b32.xlu0 %v567, 127
        %v1346 = vpop.permute.xlu0 %1345
        %1347 = vrot.lane.b32.xlu0 %v568, 127
        %v1348 = vpop.permute.xlu0 %1347
        %1349 = vrot.lane.b32.xlu0 %v569, 127
        %v1350 = vpop.permute.xlu0 %1349
        %1351 = vrot.lane.b32.xlu0 %v570, 127
        %v1352 = vpop.permute.xlu0 %1351
        %1353 = vrot.lane.b32.xlu0 %v571, 127
        %v1354 = vpop.permute.xlu0 %1353
        %1355 = vrot.lane.b32.xlu0 %v572, 127
        %v1356 = vpop.permute.xlu0 %1355
        %1357 = vrot.lane.b32.xlu0 %v573, 127
        %v1358 = vpop.permute.xlu0 %1357
        %1359 = vrot.lane.b32.xlu0 %v574, 127
        %v1360 = vpop.permute.xlu0 %1359
        %1361 = vrot.lane.b32.xlu0 %v575, 127
        %v1362 = vpop.permute.xlu0 %1361
        %1363 = vrot.lane.b32.xlu0 %v576, 127
        %v1364 = vpop.permute.xlu0 %1363
        %1365 = vrot.lane.b32.xlu0 %v577, 127
        %v1366 = vpop.permute.xlu0 %1365
        %1367 = vrot.lane.b32.xlu0 %v578, 127
        %v1368 = vpop.permute.xlu0 %1367
        %v1369 = vsel %vm755, %v1336, %v1338
        %v1370 = vsel %vm755, %v1338, %v1340
        %v1371 = vsel %vm755, %v1340, %v1342
        %v1372 = vsel %vm755, %v1342, %v1344
        %v1373 = vsel %vm755, %v1344, %v1346
        %v1374 = vsel %vm755, %v1346, %v1348
        %v1375 = vsel %vm755, %v1348, %v1350
        %v1376 = vsel %vm755, %v1350, %v1352
        %v1377 = vsel %vm755, %v1352, %v1354
        %v1378 = vsel %vm755, %v1354, %v1356
        %v1379 = vsel %vm755, %v1356, %v1358
        %v1380 = vsel %vm755, %v1358, %v1360
        %v1381 = vsel %vm755, %v1360, %v1362
        %v1382 = vsel %vm755, %v1362, %v1364
        %v1383 = vsel %vm755, %v1364, %v1366
        %v1384 = vsel %vm755, %v1366, %v1368
        %1402 = vrot.lane.b32.xlu0 %v674, 126
        %v1403 = vpop.permute.xlu0 %1402
        %1404 = vrot.lane.b32.xlu0 %v675, 126
        %v1405 = vpop.permute.xlu0 %1404
        %1406 = vrot.lane.b32.xlu0 %v676, 126
        %v1407 = vpop.permute.xlu0 %1406
        %1408 = vrot.lane.b32.xlu0 %v677, 126
        %v1409 = vpop.permute.xlu0 %1408
        %1410 = vrot.lane.b32.xlu0 %v678, 126
        %v1411 = vpop.permute.xlu0 %1410
        %1412 = vrot.lane.b32.xlu0 %v679, 126
        %v1413 = vpop.permute.xlu0 %1412
        %1414 = vrot.lane.b32.xlu0 %v680, 126
        %v1415 = vpop.permute.xlu0 %1414
        %1416 = vrot.lane.b32.xlu0 %v681, 126
        %v1417 = vpop.permute.xlu0 %1416
        %1418 = vrot.lane.b32.xlu0 %v682, 126
        %v1419 = vpop.permute.xlu0 %1418
        %1420 = vrot.lane.b32.xlu0 %v683, 126
        %v1421 = vpop.permute.xlu0 %1420
        %1422 = vrot.lane.b32.xlu0 %v684, 126
        %v1423 = vpop.permute.xlu0 %1422
        %1424 = vrot.lane.b32.xlu0 %v685, 126
        %v1425 = vpop.permute.xlu0 %1424
        %1426 = vrot.lane.b32.xlu0 %v686, 126
        %v1427 = vpop.permute.xlu0 %1426
        %1428 = vrot.lane.b32.xlu0 %v687, 126
        %v1429 = vpop.permute.xlu0 %1428
        %1430 = vrot.lane.b32.xlu0 %v688, 126
        %v1431 = vpop.permute.xlu0 %1430
        %1432 = vrot.lane.b32.xlu0 %v689, 126
        %v1433 = vpop.permute.xlu0 %1432
        %1434 = vrot.lane.b32.xlu0 %v690, 126
        %v1435 = vpop.permute.xlu0 %1434
        %vm1436 = vcmask 1031168
        %v1437 = vsel %vm1436, %v1403, %v1405
        %v1438 = vsel %vm1436, %v1405, %v1407
        %v1439 = vsel %vm1436, %v1407, %v1409
        %v1440 = vsel %vm1436, %v1409, %v1411
        %v1441 = vsel %vm1436, %v1411, %v1413
        %v1442 = vsel %vm1436, %v1413, %v1415
        %v1443 = vsel %vm1436, %v1415, %v1417
        %v1444 = vsel %vm1436, %v1417, %v1419
        %v1445 = vsel %vm1436, %v1419, %v1421
        %v1446 = vsel %vm1436, %v1421, %v1423
        %v1447 = vsel %vm1436, %v1423, %v1425
        %v1448 = vsel %vm1436, %v1425, %v1427
        %v1449 = vsel %vm1436, %v1427, %v1429
        %v1450 = vsel %vm1436, %v1429, %v1431
        %v1451 = vsel %vm1436, %v1431, %v1433
        %v1452 = vsel %vm1436, %v1433, %v1435
        %1470 = vrot.lane.b32.xlu0 %v788, 112
        %v1471 = vpop.permute.xlu0 %1470
        %1472 = vrot.lane.b32.xlu0 %v789, 112
        %v1473 = vpop.permute.xlu0 %1472
        %1474 = vrot.lane.b32.xlu0 %v790, 112
        %v1475 = vpop.permute.xlu0 %1474
        %1476 = vrot.lane.b32.xlu0 %v791, 112
        %v1477 = vpop.permute.xlu0 %1476
        %1478 = vrot.lane.b32.xlu0 %v792, 112
        %v1479 = vpop.permute.xlu0 %1478
        %1480 = vrot.lane.b32.xlu0 %v793, 112
        %v1481 = vpop.permute.xlu0 %1480
        %1482 = vrot.lane.b32.xlu0 %v794, 112
        %v1483 = vpop.permute.xlu0 %1482
        %1484 = vrot.lane.b32.xlu0 %v795, 112
        %v1485 = vpop.permute.xlu0 %1484
        %1486 = vrot.lane.b32.xlu0 %v796, 112
        %v1487 = vpop.permute.xlu0 %1486
        %1488 = vrot.lane.b32.xlu0 %v797, 112
        %v1489 = vpop.permute.xlu0 %1488
        %1490 = vrot.lane.b32.xlu0 %v798, 112
        %v1491 = vpop.permute.xlu0 %1490
        %1492 = vrot.lane.b32.xlu0 %v799, 112
        %v1493 = vpop.permute.xlu0 %1492
        %1494 = vrot.lane.b32.xlu0 %v800, 112
        %v1495 = vpop.permute.xlu0 %1494
        %1496 = vrot.lane.b32.xlu0 %v801, 112
        %v1497 = vpop.permute.xlu0 %1496
        %1498 = vrot.lane.b32.xlu0 %v802, 112
        %v1499 = vpop.permute.xlu0 %1498
        %1500 = vrot.lane.b32.xlu0 %v803, 112
        %v1501 = vpop.permute.xlu0 %1500
        %1502 = vrot.lane.b32.xlu0 %v804, 112
        %v1503 = vpop.permute.xlu0 %1502
        %v1504 = vsel %vm529, %v1471, %v1473
        %v1505 = vsel %vm529, %v1473, %v1475
        %v1506 = vsel %vm529, %v1475, %v1477
        %v1507 = vsel %vm529, %v1477, %v1479
        %v1508 = vsel %vm529, %v1479, %v1481
        %v1509 = vsel %vm529, %v1481, %v1483
        %v1510 = vsel %vm529, %v1483, %v1485
        %v1511 = vsel %vm529, %v1485, %v1487
        %v1512 = vsel %vm529, %v1487, %v1489
        %v1513 = vsel %vm529, %v1489, %v1491
        %v1514 = vsel %vm529, %v1491, %v1493
        %v1515 = vsel %vm529, %v1493, %v1495
        %v1516 = vsel %vm529, %v1495, %v1497
        %v1517 = vsel %vm529, %v1497, %v1499
        %v1518 = vsel %vm529, %v1499, %v1501
        %v1519 = vsel %vm529, %v1501, %v1503
        %1536 = vrot.lane.b32.xlu0 %v847, 111
        %v1537 = vpop.permute.xlu0 %1536
        %1538 = vrot.lane.b32.xlu0 %v848, 111
        %v1539 = vpop.permute.xlu0 %1538
        %1540 = vrot.lane.b32.xlu0 %v849, 111
        %v1541 = vpop.permute.xlu0 %1540
        %1542 = vrot.lane.b32.xlu0 %v850, 111
        %v1543 = vpop.permute.xlu0 %1542
        %1544 = vrot.lane.b32.xlu0 %v851, 111
        %v1545 = vpop.permute.xlu0 %1544
        %1546 = vrot.lane.b32.xlu0 %v852, 111
        %v1547 = vpop.permute.xlu0 %1546
        %1548 = vrot.lane.b32.xlu0 %v853, 111
        %v1549 = vpop.permute.xlu0 %1548
        %1550 = vrot.lane.b32.xlu0 %v854, 111
        %v1551 = vpop.permute.xlu0 %1550
        %1552 = vrot.lane.b32.xlu0 %v855, 111
        %v1553 = vpop.permute.xlu0 %1552
        %1554 = vrot.lane.b32.xlu0 %v856, 111
        %v1555 = vpop.permute.xlu0 %1554
        %1556 = vrot.lane.b32.xlu0 %v857, 111
        %v1557 = vpop.permute.xlu0 %1556
        %1558 = vrot.lane.b32.xlu0 %v858, 111
        %v1559 = vpop.permute.xlu0 %1558
        %1560 = vrot.lane.b32.xlu0 %v859, 111
        %v1561 = vpop.permute.xlu0 %1560
        %1562 = vrot.lane.b32.xlu0 %v860, 111
        %v1563 = vpop.permute.xlu0 %1562
        %1564 = vrot.lane.b32.xlu0 %v861, 111
        %v1565 = vpop.permute.xlu0 %1564
        %1566 = vrot.lane.b32.xlu0 %v862, 111
        %v1567 = vpop.permute.xlu0 %1566
        %v1568 = vsel %vm417, %v1537, %v1539
        %v1569 = vsel %vm417, %v1539, %v1541
        %v1570 = vsel %vm417, %v1541, %v1543
        %v1571 = vsel %vm417, %v1543, %v1545
        %v1572 = vsel %vm417, %v1545, %v1547
        %v1573 = vsel %vm417, %v1547, %v1549
        %v1574 = vsel %vm417, %v1549, %v1551
        %v1575 = vsel %vm417, %v1551, %v1553
        %v1576 = vsel %vm417, %v1553, %v1555
        %v1577 = vsel %vm417, %v1555, %v1557
        %v1578 = vsel %vm417, %v1557, %v1559
        %v1579 = vsel %vm417, %v1559, %v1561
        %v1580 = vsel %vm417, %v1561, %v1563
        %v1581 = vsel %vm417, %v1563, %v1565
        %v1582 = vsel %vm417, %v1565, %v1567
        %1600 = vrot.lane.b32.xlu0 %v971, 110
        %v1601 = vpop.permute.xlu0 %1600
        %1602 = vrot.lane.b32.xlu0 %v972, 110
        %v1603 = vpop.permute.xlu0 %1602
        %1604 = vrot.lane.b32.xlu0 %v973, 110
        %v1605 = vpop.permute.xlu0 %1604
        %1606 = vrot.lane.b32.xlu0 %v974, 110
        %v1607 = vpop.permute.xlu0 %1606
        %1608 = vrot.lane.b32.xlu0 %v975, 110
        %v1609 = vpop.permute.xlu0 %1608
        %1610 = vrot.lane.b32.xlu0 %v976, 110
        %v1611 = vpop.permute.xlu0 %1610
        %1612 = vrot.lane.b32.xlu0 %v977, 110
        %v1613 = vpop.permute.xlu0 %1612
        %1614 = vrot.lane.b32.xlu0 %v978, 110
        %v1615 = vpop.permute.xlu0 %1614
        %1616 = vrot.lane.b32.xlu0 %v979, 110
        %v1617 = vpop.permute.xlu0 %1616
        %1618 = vrot.lane.b32.xlu0 %v980, 110
        %v1619 = vpop.permute.xlu0 %1618
        %1620 = vrot.lane.b32.xlu0 %v981, 110
        %v1621 = vpop.permute.xlu0 %1620
        %1622 = vrot.lane.b32.xlu0 %v982, 110
        %v1623 = vpop.permute.xlu0 %1622
        %1624 = vrot.lane.b32.xlu0 %v983, 110
        %v1625 = vpop.permute.xlu0 %1624
        %1626 = vrot.lane.b32.xlu0 %v984, 110
        %v1627 = vpop.permute.xlu0 %1626
        %1628 = vrot.lane.b32.xlu0 %v985, 110
        %v1629 = vpop.permute.xlu0 %1628
        %1630 = vrot.lane.b32.xlu0 %v986, 110
        %v1631 = vpop.permute.xlu0 %1630
        %1632 = vrot.lane.b32.xlu0 %v987, 110
        %v1633 = vpop.permute.xlu0 %1632
        %vm1634 = vcmask 900096
        %v1635 = vsel %vm1634, %v1601, %v1603
        %v1636 = vsel %vm1634, %v1603, %v1605
        %v1637 = vsel %vm1634, %v1605, %v1607
        %v1638 = vsel %vm1634, %v1607, %v1609
        %v1639 = vsel %vm1634, %v1609, %v1611
        %v1640 = vsel %vm1634, %v1611, %v1613
        %v1641 = vsel %vm1634, %v1613, %v1615
        %v1642 = vsel %vm1634, %v1615, %v1617
        %v1643 = vsel %vm1634, %v1617, %v1619
        %v1644 = vsel %vm1634, %v1619, %v1621
        %v1645 = vsel %vm1634, %v1621, %v1623
        %v1646 = vsel %vm1634, %v1623, %v1625
        %v1647 = vsel %vm1634, %v1625, %v1627
        %v1648 = vsel %vm1634, %v1627, %v1629
        %v1649 = vsel %vm1634, %v1629, %v1631
        %v1650 = vsel %vm1634, %v1631, %v1633
        %1668 = vrot.lane.b32.xlu0 %v1085, 96
        %v1669 = vpop.permute.xlu0 %1668
        %1670 = vrot.lane.b32.xlu0 %v1086, 96
        %v1671 = vpop.permute.xlu0 %1670
        %1672 = vrot.lane.b32.xlu0 %v1087, 96
        %v1673 = vpop.permute.xlu0 %1672
        %1674 = vrot.lane.b32.xlu0 %v1088, 96
        %v1675 = vpop.permute.xlu0 %1674
        %1676 = vrot.lane.b32.xlu0 %v1089, 96
        %v1677 = vpop.permute.xlu0 %1676
        %1678 = vrot.lane.b32.xlu0 %v1090, 96
        %v1679 = vpop.permute.xlu0 %1678
        %1680 = vrot.lane.b32.xlu0 %v1091, 96
        %v1681 = vpop.permute.xlu0 %1680
        %1682 = vrot.lane.b32.xlu0 %v1092, 96
        %v1683 = vpop.permute.xlu0 %1682
        %1684 = vrot.lane.b32.xlu0 %v1093, 96
        %v1685 = vpop.permute.xlu0 %1684
        %1686 = vrot.lane.b32.xlu0 %v1094, 96
        %v1687 = vpop.permute.xlu0 %1686
        %1688 = vrot.lane.b32.xlu0 %v1095, 96
        %v1689 = vpop.permute.xlu0 %1688
        %1690 = vrot.lane.b32.xlu0 %v1096, 96
        %v1691 = vpop.permute.xlu0 %1690
        %1692 = vrot.lane.b32.xlu0 %v1097, 96
        %v1693 = vpop.permute.xlu0 %1692
        %1694 = vrot.lane.b32.xlu0 %v1098, 96
        %v1695 = vpop.permute.xlu0 %1694
        %1696 = vrot.lane.b32.xlu0 %v1099, 96
        %v1697 = vpop.permute.xlu0 %1696
        %1698 = vrot.lane.b32.xlu0 %v1100, 96
        %v1699 = vpop.permute.xlu0 %1698
        %1700 = vrot.lane.b32.xlu0 %v1101, 96
        %v1701 = vpop.permute.xlu0 %1700
        %vm1702 = vcmask 785408
        %v1703 = vsel %vm1702, %v1669, %v1671
        %v1704 = vsel %vm1702, %v1671, %v1673
        %v1705 = vsel %vm1702, %v1673, %v1675
        %v1706 = vsel %vm1702, %v1675, %v1677
        %v1707 = vsel %vm1702, %v1677, %v1679
        %v1708 = vsel %vm1702, %v1679, %v1681
        %v1709 = vsel %vm1702, %v1681, %v1683
        %v1710 = vsel %vm1702, %v1683, %v1685
        %v1711 = vsel %vm1702, %v1685, %v1687
        %v1712 = vsel %vm1702, %v1687, %v1689
        %v1713 = vsel %vm1702, %v1689, %v1691
        %v1714 = vsel %vm1702, %v1691, %v1693
        %v1715 = vsel %vm1702, %v1693, %v1695
        %v1716 = vsel %vm1702, %v1695, %v1697
        %v1717 = vsel %vm1702, %v1697, %v1699
        %v1718 = vsel %vm1702, %v1699, %v1701
        %1736 = vrot.lane.b32.xlu0 %v1193, 95
        %v1737 = vpop.permute.xlu0 %1736
        %1738 = vrot.lane.b32.xlu0 %v1194, 95
        %v1739 = vpop.permute.xlu0 %1738
        %1740 = vrot.lane.b32.xlu0 %v1195, 95
        %v1741 = vpop.permute.xlu0 %1740
        %1742 = vrot.lane.b32.xlu0 %v1196, 95
        %v1743 = vpop.permute.xlu0 %1742
        %1744 = vrot.lane.b32.xlu0 %v1197, 95
        %v1745 = vpop.permute.xlu0 %1744
        %1746 = vrot.lane.b32.xlu0 %v1198, 95
        %v1747 = vpop.permute.xlu0 %1746
        %1748 = vrot.lane.b32.xlu0 %v1199, 95
        %v1749 = vpop.permute.xlu0 %1748
        %1750 = vrot.lane.b32.xlu0 %v1200, 95
        %v1751 = vpop.permute.xlu0 %1750
        %1752 = vrot.lane.b32.xlu0 %v1201, 95
        %v1753 = vpop.permute.xlu0 %1752
        %1754 = vrot.lane.b32.xlu0 %v1202, 95
        %v1755 = vpop.permute.xlu0 %1754
        %1756 = vrot.lane.b32.xlu0 %v1203, 95
        %v1757 = vpop.permute.xlu0 %1756
        %1758 = vrot.lane.b32.xlu0 %v1204, 95
        %v1759 = vpop.permute.xlu0 %1758
        %1760 = vrot.lane.b32.xlu0 %v1205, 95
        %v1761 = vpop.permute.xlu0 %1760
        %1762 = vrot.lane.b32.xlu0 %v1206, 95
        %v1763 = vpop.permute.xlu0 %1762
        %1764 = vrot.lane.b32.xlu0 %v1207, 95
        %v1765 = vpop.permute.xlu0 %1764
        %1766 = vrot.lane.b32.xlu0 %v1208, 95
        %v1767 = vpop.permute.xlu0 %1766
        %1768 = vrot.lane.b32.xlu0 %v1209, 95
        %v1769 = vpop.permute.xlu0 %1768
        %vm1770 = vcmask 777216
        %v1771 = vsel %vm1770, %v1737, %v1739
        %v1772 = vsel %vm1770, %v1739, %v1741
        %v1773 = vsel %vm1770, %v1741, %v1743
        %v1774 = vsel %vm1770, %v1743, %v1745
        %v1775 = vsel %vm1770, %v1745, %v1747
        %v1776 = vsel %vm1770, %v1747, %v1749
        %v1777 = vsel %vm1770, %v1749, %v1751
        %v1778 = vsel %vm1770, %v1751, %v1753
        %v1779 = vsel %vm1770, %v1753, %v1755
        %v1780 = vsel %vm1770, %v1755, %v1757
        %v1781 = vsel %vm1770, %v1757, %v1759
        %v1782 = vsel %vm1770, %v1759, %v1761
        %v1783 = vsel %vm1770, %v1761, %v1763
        %v1784 = vsel %vm1770, %v1763, %v1765
        %v1785 = vsel %vm1770, %v1765, %v1767
        %v1786 = vsel %vm1770, %v1767, %v1769
        %1804 = vrot.lane.b32.xlu0 %v1301, 94
        %v1805 = vpop.permute.xlu0 %1804
        %1806 = vrot.lane.b32.xlu0 %v1302, 94
        %v1807 = vpop.permute.xlu0 %1806
        %1808 = vrot.lane.b32.xlu0 %v1303, 94
        %v1809 = vpop.permute.xlu0 %1808
        %1810 = vrot.lane.b32.xlu0 %v1304, 94
        %v1811 = vpop.permute.xlu0 %1810
        %1812 = vrot.lane.b32.xlu0 %v1305, 94
        %v1813 = vpop.permute.xlu0 %1812
        %1814 = vrot.lane.b32.xlu0 %v1306, 94
        %v1815 = vpop.permute.xlu0 %1814
        %1816 = vrot.lane.b32.xlu0 %v1307, 94
        %v1817 = vpop.permute.xlu0 %1816
        %1818 = vrot.lane.b32.xlu0 %v1308, 94
        %v1819 = vpop.permute.xlu0 %1818
        %1820 = vrot.lane.b32.xlu0 %v1309, 94
        %v1821 = vpop.permute.xlu0 %1820
        %1822 = vrot.lane.b32.xlu0 %v1310, 94
        %v1823 = vpop.permute.xlu0 %1822
        %1824 = vrot.lane.b32.xlu0 %v1311, 94
        %v1825 = vpop.permute.xlu0 %1824
        %1826 = vrot.lane.b32.xlu0 %v1312, 94
        %v1827 = vpop.permute.xlu0 %1826
        %1828 = vrot.lane.b32.xlu0 %v1313, 94
        %v1829 = vpop.permute.xlu0 %1828
        %1830 = vrot.lane.b32.xlu0 %v1314, 94
        %v1831 = vpop.permute.xlu0 %1830
        %1832 = vrot.lane.b32.xlu0 %v1315, 94
        %v1833 = vpop.permute.xlu0 %1832
        %1834 = vrot.lane.b32.xlu0 %v1316, 94
        %v1835 = vpop.permute.xlu0 %1834
        %1836 = vrot.lane.b32.xlu0 %v1317, 94
        %v1837 = vpop.permute.xlu0 %1836
        %vm1838 = vcmask 769024
        %v1839 = vsel %vm1838, %v1805, %v1807
        %v1840 = vsel %vm1838, %v1807, %v1809
        %v1841 = vsel %vm1838, %v1809, %v1811
        %v1842 = vsel %vm1838, %v1811, %v1813
        %v1843 = vsel %vm1838, %v1813, %v1815
        %v1844 = vsel %vm1838, %v1815, %v1817
        %v1845 = vsel %vm1838, %v1817, %v1819
        %v1846 = vsel %vm1838, %v1819, %v1821
        %v1847 = vsel %vm1838, %v1821, %v1823
        %v1848 = vsel %vm1838, %v1823, %v1825
        %v1849 = vsel %vm1838, %v1825, %v1827
        %v1850 = vsel %vm1838, %v1827, %v1829
        %v1851 = vsel %vm1838, %v1829, %v1831
        %v1852 = vsel %vm1838, %v1831, %v1833
        %v1853 = vsel %vm1838, %v1833, %v1835
        %v1854 = vsel %vm1838, %v1835, %v1837
        %v1855 = vld [vmem:[#allocation7] sm:$0xff]
        %v1856 = vld [vmem:[#allocation7 + $0x8] sm:$0xff]
        %v1857 = vld [vmem:[%s4] sm:$0xff]
        %v1858 = vld [vmem:[%s4 + $0x8] sm:$0xff]
        %1860 = vset.pattern.permute.xlu0 0
        %1861 = vperm.xlu0 %1860, %v1857
        %v1862 = vpop.permute.xlu0 %1861
        %1865 = vset.pattern.permute.xlu0 0
        %1866 = vperm.xlu0 %1865, %v1858
        %v1867 = vpop.permute.xlu0 %1866
        %1886 = vrot.lane.b32.xlu0 %v450, 17
        %v1887 = vpop.permute.xlu0 %1886
        %1888 = vrot.lane.b32.xlu0 %v451, 17
        %v1889 = vpop.permute.xlu0 %1888
        %1890 = vrot.lane.b32.xlu0 %v452, 17
        %v1891 = vpop.permute.xlu0 %1890
        %1892 = vrot.lane.b32.xlu0 %v453, 17
        %v1893 = vpop.permute.xlu0 %1892
        %1894 = vrot.lane.b32.xlu0 %v454, 17
        %v1895 = vpop.permute.xlu0 %1894
        %1896 = vrot.lane.b32.xlu0 %v455, 17
        %v1897 = vpop.permute.xlu0 %1896
        %1898 = vrot.lane.b32.xlu0 %v456, 17
        %v1899 = vpop.permute.xlu0 %1898
        %1900 = vrot.lane.b32.xlu0 %v457, 17
        %v1901 = vpop.permute.xlu0 %1900
        %1902 = vrot.lane.b32.xlu0 %v458, 17
        %v1903 = vpop.permute.xlu0 %1902
        %1904 = vrot.lane.b32.xlu0 %v459, 17
        %v1905 = vpop.permute.xlu0 %1904
        %1906 = vrot.lane.b32.xlu0 %v460, 17
        %v1907 = vpop.permute.xlu0 %1906
        %1908 = vrot.lane.b32.xlu0 %v461, 17
        %v1909 = vpop.permute.xlu0 %1908
        %1910 = vrot.lane.b32.xlu0 %v462, 17
        %v1911 = vpop.permute.xlu0 %1910
        %1912 = vrot.lane.b32.xlu0 %v463, 17
        %v1913 = vpop.permute.xlu0 %1912
        %1914 = vrot.lane.b32.xlu0 %v464, 17
        %v1915 = vpop.permute.xlu0 %1914
        %1916 = vrot.lane.b32.xlu0 %v465, 17
        %v1917 = vpop.permute.xlu0 %1916
        %1918 = vrot.lane.b32.xlu0 %v466, 17
        %v1919 = vpop.permute.xlu0 %1918
        %1920 = vrot.lane.b32.xlu0 %v1369, 17
        %v1921 = vpop.permute.xlu0 %1920
        %1922 = vrot.lane.b32.xlu0 %v1370, 17
        %v1923 = vpop.permute.xlu0 %1922
        %1924 = vrot.lane.b32.xlu0 %v1371, 17
        %v1925 = vpop.permute.xlu0 %1924
        %1926 = vrot.lane.b32.xlu0 %v1372, 17
        %v1927 = vpop.permute.xlu0 %1926
        %1928 = vrot.lane.b32.xlu0 %v1373, 17
        %v1929 = vpop.permute.xlu0 %1928
        %1930 = vrot.lane.b32.xlu0 %v1374, 17
        %v1931 = vpop.permute.xlu0 %1930
        %1932 = vrot.lane.b32.xlu0 %v1375, 17
        %v1933 = vpop.permute.xlu0 %1932
        %1934 = vrot.lane.b32.xlu0 %v1376, 17
        %v1935 = vpop.permute.xlu0 %1934
        %1936 = vrot.lane.b32.xlu0 %v1377, 17
        %v1937 = vpop.permute.xlu0 %1936
        %1938 = vrot.lane.b32.xlu0 %v1378, 17
        %v1939 = vpop.permute.xlu0 %1938
        %1940 = vrot.lane.b32.xlu0 %v1379, 17
        %v1941 = vpop.permute.xlu0 %1940
        %1942 = vrot.lane.b32.xlu0 %v1380, 17
        %v1943 = vpop.permute.xlu0 %1942
        %1944 = vrot.lane.b32.xlu0 %v1381, 17
        %v1945 = vpop.permute.xlu0 %1944
        %1946 = vrot.lane.b32.xlu0 %v1382, 17
        %v1947 = vpop.permute.xlu0 %1946
        %1948 = vrot.lane.b32.xlu0 %v1383, 17
        %v1949 = vpop.permute.xlu0 %1948
        %1950 = vrot.lane.b32.xlu0 %v1384, 17
        %v1951 = vpop.permute.xlu0 %1950
        %1952 = vrot.lane.b32.xlu0 %v1368, 17
        %v1953 = vpop.permute.xlu0 %1952
        %1954 = vrot.lane.b32.xlu0 %v1437, 17
        %v1955 = vpop.permute.xlu0 %1954
        %1956 = vrot.lane.b32.xlu0 %v1438, 17
        %v1957 = vpop.permute.xlu0 %1956
        %1958 = vrot.lane.b32.xlu0 %v1439, 17
        %v1959 = vpop.permute.xlu0 %1958
        %1960 = vrot.lane.b32.xlu0 %v1440, 17
        %v1961 = vpop.permute.xlu0 %1960
        %1962 = vrot.lane.b32.xlu0 %v1441, 17
        %v1963 = vpop.permute.xlu0 %1962
        %1964 = vrot.lane.b32.xlu0 %v1442, 17
        %v1965 = vpop.permute.xlu0 %1964
        %1966 = vrot.lane.b32.xlu0 %v1443, 17
        %v1967 = vpop.permute.xlu0 %1966
        %1968 = vrot.lane.b32.xlu0 %v1444, 17
        %v1969 = vpop.permute.xlu0 %1968
        %1970 = vrot.lane.b32.xlu0 %v1445, 17
        %v1971 = vpop.permute.xlu0 %1970
        %1972 = vrot.lane.b32.xlu0 %v1446, 17
        %v1973 = vpop.permute.xlu0 %1972
        %1974 = vrot.lane.b32.xlu0 %v1447, 17
        %v1975 = vpop.permute.xlu0 %1974
        %1976 = vrot.lane.b32.xlu0 %v1448, 17
        %v1977 = vpop.permute.xlu0 %1976
        %1978 = vrot.lane.b32.xlu0 %v1449, 17
        %v1979 = vpop.permute.xlu0 %1978
        %1980 = vrot.lane.b32.xlu0 %v1450, 17
        %v1981 = vpop.permute.xlu0 %1980
        %1982 = vrot.lane.b32.xlu0 %v1451, 17
        %v1983 = vpop.permute.xlu0 %1982
        %1984 = vrot.lane.b32.xlu0 %v1452, 17
        %v1985 = vpop.permute.xlu0 %1984
        %1986 = vrot.lane.b32.xlu0 %v1435, 17
        %v1987 = vpop.permute.xlu0 %1986
        %1988 = vrot.lane.b32.xlu0 %v1504, 17
        %v1989 = vpop.permute.xlu0 %1988
        %1990 = vrot.lane.b32.xlu0 %v1505, 17
        %v1991 = vpop.permute.xlu0 %1990
        %1992 = vrot.lane.b32.xlu0 %v1506, 17
        %v1993 = vpop.permute.xlu0 %1992
        %1994 = vrot.lane.b32.xlu0 %v1507, 17
        %v1995 = vpop.permute.xlu0 %1994
        %1996 = vrot.lane.b32.xlu0 %v1508, 17
        %v1997 = vpop.permute.xlu0 %1996
        %1998 = vrot.lane.b32.xlu0 %v1509, 17
        %v1999 = vpop.permute.xlu0 %1998
        %2000 = vrot.lane.b32.xlu0 %v1510, 17
        %v2001 = vpop.permute.xlu0 %2000
        %2002 = vrot.lane.b32.xlu0 %v1511, 17
        %v2003 = vpop.permute.xlu0 %2002
        %2004 = vrot.lane.b32.xlu0 %v1512, 17
        %v2005 = vpop.permute.xlu0 %2004
        %2006 = vrot.lane.b32.xlu0 %v1513, 17
        %v2007 = vpop.permute.xlu0 %2006
        %2008 = vrot.lane.b32.xlu0 %v1514, 17
        %v2009 = vpop.permute.xlu0 %2008
        %2010 = vrot.lane.b32.xlu0 %v1515, 17
        %v2011 = vpop.permute.xlu0 %2010
        %2012 = vrot.lane.b32.xlu0 %v1516, 17
        %v2013 = vpop.permute.xlu0 %2012
        %2014 = vrot.lane.b32.xlu0 %v1517, 17
        %v2015 = vpop.permute.xlu0 %2014
        %2016 = vrot.lane.b32.xlu0 %v1518, 17
        %v2017 = vpop.permute.xlu0 %2016
        %2018 = vrot.lane.b32.xlu0 %v1519, 17
        %v2019 = vpop.permute.xlu0 %2018
        %2020 = vrot.lane.b32.xlu0 %v1503, 17
        %v2021 = vpop.permute.xlu0 %2020
        %2022 = vrot.lane.b32.xlu0 %v1537, 17
        %v2023 = vpop.permute.xlu0 %2022
        %2024 = vrot.lane.b32.xlu0 %v1568, 17
        %v2025 = vpop.permute.xlu0 %2024
        %2026 = vrot.lane.b32.xlu0 %v1569, 17
        %v2027 = vpop.permute.xlu0 %2026
        %2028 = vrot.lane.b32.xlu0 %v1570, 17
        %v2029 = vpop.permute.xlu0 %2028
        %2030 = vrot.lane.b32.xlu0 %v1571, 17
        %v2031 = vpop.permute.xlu0 %2030
        %2032 = vrot.lane.b32.xlu0 %v1572, 17
        %v2033 = vpop.permute.xlu0 %2032
        %2034 = vrot.lane.b32.xlu0 %v1573, 17
        %v2035 = vpop.permute.xlu0 %2034
        %2036 = vrot.lane.b32.xlu0 %v1574, 17
        %v2037 = vpop.permute.xlu0 %2036
        %2038 = vrot.lane.b32.xlu0 %v1575, 17
        %v2039 = vpop.permute.xlu0 %2038
        %2040 = vrot.lane.b32.xlu0 %v1576, 17
        %v2041 = vpop.permute.xlu0 %2040
        %2042 = vrot.lane.b32.xlu0 %v1577, 17
        %v2043 = vpop.permute.xlu0 %2042
        %2044 = vrot.lane.b32.xlu0 %v1578, 17
        %v2045 = vpop.permute.xlu0 %2044
        %2046 = vrot.lane.b32.xlu0 %v1579, 17
        %v2047 = vpop.permute.xlu0 %2046
        %2048 = vrot.lane.b32.xlu0 %v1580, 17
        %v2049 = vpop.permute.xlu0 %2048
        %2050 = vrot.lane.b32.xlu0 %v1581, 17
        %v2051 = vpop.permute.xlu0 %2050
        %2052 = vrot.lane.b32.xlu0 %v1582, 17
        %v2053 = vpop.permute.xlu0 %2052
        %2054 = vrot.lane.b32.xlu0 %v1567, 17
        %v2055 = vpop.permute.xlu0 %2054
        %2056 = vrot.lane.b32.xlu0 %v1601, 17
        %v2057 = vpop.permute.xlu0 %2056
        %2058 = vrot.lane.b32.xlu0 %v1635, 17
        %v2059 = vpop.permute.xlu0 %2058
        %2060 = vrot.lane.b32.xlu0 %v1636, 17
        %v2061 = vpop.permute.xlu0 %2060
        %2062 = vrot.lane.b32.xlu0 %v1637, 17
        %v2063 = vpop.permute.xlu0 %2062
        %2064 = vrot.lane.b32.xlu0 %v1638, 17
        %v2065 = vpop.permute.xlu0 %2064
        %2066 = vrot.lane.b32.xlu0 %v1639, 17
        %v2067 = vpop.permute.xlu0 %2066
        %2068 = vrot.lane.b32.xlu0 %v1640, 17
        %v2069 = vpop.permute.xlu0 %2068
        %2070 = vrot.lane.b32.xlu0 %v1641, 17
        %v2071 = vpop.permute.xlu0 %2070
        %2072 = vrot.lane.b32.xlu0 %v1642, 17
        %v2073 = vpop.permute.xlu0 %2072
        %2074 = vrot.lane.b32.xlu0 %v1643, 17
        %v2075 = vpop.permute.xlu0 %2074
        %2076 = vrot.lane.b32.xlu0 %v1644, 17
        %v2077 = vpop.permute.xlu0 %2076
        %2078 = vrot.lane.b32.xlu0 %v1645, 17
        %v2079 = vpop.permute.xlu0 %2078
        %2080 = vrot.lane.b32.xlu0 %v1646, 17
        %v2081 = vpop.permute.xlu0 %2080
        %2082 = vrot.lane.b32.xlu0 %v1647, 17
        %v2083 = vpop.permute.xlu0 %2082
        %2084 = vrot.lane.b32.xlu0 %v1648, 17
        %v2085 = vpop.permute.xlu0 %2084
        %2086 = vrot.lane.b32.xlu0 %v1649, 17
        %v2087 = vpop.permute.xlu0 %2086
        %2088 = vrot.lane.b32.xlu0 %v1650, 17
        %v2089 = vpop.permute.xlu0 %2088
        %2090 = vrot.lane.b32.xlu0 %v1669, 17
        %v2091 = vpop.permute.xlu0 %2090
        %2092 = vrot.lane.b32.xlu0 %v1703, 17
        %v2093 = vpop.permute.xlu0 %2092
        %2094 = vrot.lane.b32.xlu0 %v1704, 17
        %v2095 = vpop.permute.xlu0 %2094
        %2096 = vrot.lane.b32.xlu0 %v1705, 17
        %v2097 = vpop.permute.xlu0 %2096
        %2098 = vrot.lane.b32.xlu0 %v1706, 17
        %v2099 = vpop.permute.xlu0 %2098
        %2100 = vrot.lane.b32.xlu0 %v1707, 17
        %v2101 = vpop.permute.xlu0 %2100
        %2102 = vrot.lane.b32.xlu0 %v1708, 17
        %v2103 = vpop.permute.xlu0 %2102
        %2104 = vrot.lane.b32.xlu0 %v1709, 17
        %v2105 = vpop.permute.xlu0 %2104
        %2106 = vrot.lane.b32.xlu0 %v1710, 17
        %v2107 = vpop.permute.xlu0 %2106
        %2108 = vrot.lane.b32.xlu0 %v1711, 17
        %v2109 = vpop.permute.xlu0 %2108
        %2110 = vrot.lane.b32.xlu0 %v1712, 17
        %v2111 = vpop.permute.xlu0 %2110
        %2112 = vrot.lane.b32.xlu0 %v1713, 17
        %v2113 = vpop.permute.xlu0 %2112
        %2114 = vrot.lane.b32.xlu0 %v1714, 17
        %v2115 = vpop.permute.xlu0 %2114
        %2116 = vrot.lane.b32.xlu0 %v1715, 17
        %v2117 = vpop.permute.xlu0 %2116
        %2118 = vrot.lane.b32.xlu0 %v1716, 17
        %v2119 = vpop.permute.xlu0 %2118
        %2120 = vrot.lane.b32.xlu0 %v1717, 17
        %v2121 = vpop.permute.xlu0 %2120
        %2122 = vrot.lane.b32.xlu0 %v1718, 17
        %v2123 = vpop.permute.xlu0 %2122
        %2124 = vrot.lane.b32.xlu0 %v1737, 17
        %v2125 = vpop.permute.xlu0 %2124
        %2126 = vrot.lane.b32.xlu0 %v1771, 17
        %v2127 = vpop.permute.xlu0 %2126
        %2128 = vrot.lane.b32.xlu0 %v1772, 17
        %v2129 = vpop.permute.xlu0 %2128
        %2130 = vrot.lane.b32.xlu0 %v1773, 17
        %v2131 = vpop.permute.xlu0 %2130
        %2132 = vrot.lane.b32.xlu0 %v1774, 17
        %v2133 = vpop.permute.xlu0 %2132
        %2134 = vrot.lane.b32.xlu0 %v1775, 17
        %v2135 = vpop.permute.xlu0 %2134
        %2136 = vrot.lane.b32.xlu0 %v1776, 17
        %v2137 = vpop.permute.xlu0 %2136
        %2138 = vrot.lane.b32.xlu0 %v1777, 17
        %v2139 = vpop.permute.xlu0 %2138
        %2140 = vrot.lane.b32.xlu0 %v1778, 17
        %v2141 = vpop.permute.xlu0 %2140
        %2142 = vrot.lane.b32.xlu0 %v1779, 17
        %v2143 = vpop.permute.xlu0 %2142
        %2144 = vrot.lane.b32.xlu0 %v1780, 17
        %v2145 = vpop.permute.xlu0 %2144
        %2146 = vrot.lane.b32.xlu0 %v1781, 17
        %v2147 = vpop.permute.xlu0 %2146
        %2148 = vrot.lane.b32.xlu0 %v1782, 17
        %v2149 = vpop.permute.xlu0 %2148
        %2150 = vrot.lane.b32.xlu0 %v1783, 17
        %v2151 = vpop.permute.xlu0 %2150
        %2152 = vrot.lane.b32.xlu0 %v1784, 17
        %v2153 = vpop.permute.xlu0 %2152
        %2154 = vrot.lane.b32.xlu0 %v1785, 17
        %v2155 = vpop.permute.xlu0 %2154
        %2156 = vrot.lane.b32.xlu0 %v1786, 17
        %v2157 = vpop.permute.xlu0 %2156
        %2158 = vrot.lane.b32.xlu0 %v1805, 17
        %v2159 = vpop.permute.xlu0 %2158
        %2160 = vrot.lane.b32.xlu0 %v1839, 17
        %v2161 = vpop.permute.xlu0 %2160
        %2162 = vrot.lane.b32.xlu0 %v1840, 17
        %v2163 = vpop.permute.xlu0 %2162
        %2164 = vrot.lane.b32.xlu0 %v1841, 17
        %v2165 = vpop.permute.xlu0 %2164
        %2166 = vrot.lane.b32.xlu0 %v1842, 17
        %v2167 = vpop.permute.xlu0 %2166
        %2168 = vrot.lane.b32.xlu0 %v1843, 17
        %v2169 = vpop.permute.xlu0 %2168
        %2170 = vrot.lane.b32.xlu0 %v1844, 17
        %v2171 = vpop.permute.xlu0 %2170
        %2172 = vrot.lane.b32.xlu0 %v1845, 17
        %v2173 = vpop.permute.xlu0 %2172
        %2174 = vrot.lane.b32.xlu0 %v1846, 17
        %v2175 = vpop.permute.xlu0 %2174
        %2176 = vrot.lane.b32.xlu0 %v1847, 17
        %v2177 = vpop.permute.xlu0 %2176
        %2178 = vrot.lane.b32.xlu0 %v1848, 17
        %v2179 = vpop.permute.xlu0 %2178
        %2180 = vrot.lane.b32.xlu0 %v1849, 17
        %v2181 = vpop.permute.xlu0 %2180
        %2182 = vrot.lane.b32.xlu0 %v1850, 17
        %v2183 = vpop.permute.xlu0 %2182
        %2184 = vrot.lane.b32.xlu0 %v1851, 17
        %v2185 = vpop.permute.xlu0 %2184
        %2186 = vrot.lane.b32.xlu0 %v1852, 17
        %v2187 = vpop.permute.xlu0 %2186
        %2188 = vrot.lane.b32.xlu0 %v1853, 17
        %v2189 = vpop.permute.xlu0 %2188
        %2190 = vrot.lane.b32.xlu0 %v1854, 17
        %v2191 = vpop.permute.xlu0 %2190
        %v2192 = vsel %vm1268, %v1887, %v1889
        %v2193 = vsel %vm1268, %v1889, %v1891
        %v2194 = vsel %vm1268, %v1891, %v1893
        %v2195 = vsel %vm1268, %v1893, %v1895
        %v2196 = vsel %vm1268, %v1895, %v1897
        %v2197 = vsel %vm1268, %v1897, %v1899
        %v2198 = vsel %vm1268, %v1899, %v1901
        %v2199 = vsel %vm1268, %v1901, %v1903
        %v2200 = vsel %vm1268, %v1903, %v1905
        %v2201 = vsel %vm1268, %v1905, %v1907
        %v2202 = vsel %vm1268, %v1907, %v1909
        %v2203 = vsel %vm1268, %v1909, %v1911
        %v2204 = vsel %vm1268, %v1911, %v1913
        %v2205 = vsel %vm1268, %v1913, %v1915
        %v2206 = vsel %vm1268, %v1915, %v1917
        %v2207 = vsel %vm1268, %v1917, %v1919
        %v2208 = vsel %vm1268, %v1921, %v1923
        %v2209 = vsel %vm1268, %v1923, %v1925
        %v2210 = vsel %vm1268, %v1925, %v1927
        %v2211 = vsel %vm1268, %v1927, %v1929
        %v2212 = vsel %vm1268, %v1929, %v1931
        %v2213 = vsel %vm1268, %v1931, %v1933
        %v2214 = vsel %vm1268, %v1933, %v1935
        %v2215 = vsel %vm1268, %v1935, %v1937
        %v2216 = vsel %vm1268, %v1937, %v1939
        %v2217 = vsel %vm1268, %v1939, %v1941
        %v2218 = vsel %vm1268, %v1941, %v1943
        %v2219 = vsel %vm1268, %v1943, %v1945
        %v2220 = vsel %vm1268, %v1945, %v1947
        %v2221 = vsel %vm1268, %v1947, %v1949
        %v2222 = vsel %vm1268, %v1949, %v1951
        %v2223 = vsel %vm1268, %v1951, %v1953
        %v2224 = vsel %vm1268, %v1955, %v1957
        %v2225 = vsel %vm1268, %v1957, %v1959
        %v2226 = vsel %vm1268, %v1959, %v1961
        %v2227 = vsel %vm1268, %v1961, %v1963
        %v2228 = vsel %vm1268, %v1963, %v1965
        %v2229 = vsel %vm1268, %v1965, %v1967
        %v2230 = vsel %vm1268, %v1967, %v1969
        %v2231 = vsel %vm1268, %v1969, %v1971
        %v2232 = vsel %vm1268, %v1971, %v1973
        %v2233 = vsel %vm1268, %v1973, %v1975
        %v2234 = vsel %vm1268, %v1975, %v1977
        %v2235 = vsel %vm1268, %v1977, %v1979
        %v2236 = vsel %vm1268, %v1979, %v1981
        %v2237 = vsel %vm1268, %v1981, %v1983
        %v2238 = vsel %vm1268, %v1983, %v1985
        %v2239 = vsel %vm1268, %v1985, %v1987
        %v2240 = vsel %vm1268, %v1989, %v1991
        %v2241 = vsel %vm1268, %v1991, %v1993
        %v2242 = vsel %vm1268, %v1993, %v1995
        %v2243 = vsel %vm1268, %v1995, %v1997
        %v2244 = vsel %vm1268, %v1997, %v1999
        %v2245 = vsel %vm1268, %v1999, %v2001
        %v2246 = vsel %vm1268, %v2001, %v2003
        %v2247 = vsel %vm1268, %v2003, %v2005
        %v2248 = vsel %vm1268, %v2005, %v2007
        %v2249 = vsel %vm1268, %v2007, %v2009
        %v2250 = vsel %vm1268, %v2009, %v2011
        %v2251 = vsel %vm1268, %v2011, %v2013
        %v2252 = vsel %vm1268, %v2013, %v2015
        %v2253 = vsel %vm1268, %v2015, %v2017
        %v2254 = vsel %vm1268, %v2017, %v2019
        %v2255 = vsel %vm1268, %v2019, %v2021
        %v2256 = vsel %vm1268, %v2023, %v2025
        %v2257 = vsel %vm1268, %v2025, %v2027
        %v2258 = vsel %vm1268, %v2027, %v2029
        %v2259 = vsel %vm1268, %v2029, %v2031
        %v2260 = vsel %vm1268, %v2031, %v2033
        %v2261 = vsel %vm1268, %v2033, %v2035
        %v2262 = vsel %vm1268, %v2035, %v2037
        %v2263 = vsel %vm1268, %v2037, %v2039
        %v2264 = vsel %vm1268, %v2039, %v2041
        %v2265 = vsel %vm1268, %v2041, %v2043
        %v2266 = vsel %vm1268, %v2043, %v2045
        %v2267 = vsel %vm1268, %v2045, %v2047
        %v2268 = vsel %vm1268, %v2047, %v2049
        %v2269 = vsel %vm1268, %v2049, %v2051
        %v2270 = vsel %vm1268, %v2051, %v2053
        %v2271 = vsel %vm1268, %v2053, %v2055
        %v2272 = vsel %vm1268, %v2057, %v2059
        %v2273 = vsel %vm1268, %v2059, %v2061
        %v2274 = vsel %vm1268, %v2061, %v2063
        %v2275 = vsel %vm1268, %v2063, %v2065
        %v2276 = vsel %vm1268, %v2065, %v2067
        %v2277 = vsel %vm1268, %v2067, %v2069
        %v2278 = vsel %vm1268, %v2069, %v2071
        %v2279 = vsel %vm1268, %v2071, %v2073
        %v2280 = vsel %vm1268, %v2073, %v2075
        %v2281 = vsel %vm1268, %v2075, %v2077
        %v2282 = vsel %vm1268, %v2077, %v2079
        %v2283 = vsel %vm1268, %v2079, %v2081
        %v2284 = vsel %vm1268, %v2081, %v2083
        %v2285 = vsel %vm1268, %v2083, %v2085
        %v2286 = vsel %vm1268, %v2085, %v2087
        %v2287 = vsel %vm1268, %v2087, %v2089
        %v2288 = vsel %vm1268, %v2091, %v2093
        %v2289 = vsel %vm1268, %v2093, %v2095
        %v2290 = vsel %vm1268, %v2095, %v2097
        %v2291 = vsel %vm1268, %v2097, %v2099
        %v2292 = vsel %vm1268, %v2099, %v2101
        %v2293 = vsel %vm1268, %v2101, %v2103
        %v2294 = vsel %vm1268, %v2103, %v2105
        %v2295 = vsel %vm1268, %v2105, %v2107
        %v2296 = vsel %vm1268, %v2107, %v2109
        %v2297 = vsel %vm1268, %v2109, %v2111
        %v2298 = vsel %vm1268, %v2111, %v2113
        %v2299 = vsel %vm1268, %v2113, %v2115
        %v2300 = vsel %vm1268, %v2115, %v2117
        %v2301 = vsel %vm1268, %v2117, %v2119
        %v2302 = vsel %vm1268, %v2119, %v2121
        %v2303 = vsel %vm1268, %v2121, %v2123
        %v2304 = vsel %vm1268, %v2125, %v2127
        %v2305 = vsel %vm1268, %v2127, %v2129
        %v2306 = vsel %vm1268, %v2129, %v2131
        %v2307 = vsel %vm1268, %v2131, %v2133
        %v2308 = vsel %vm1268, %v2133, %v2135
        %v2309 = vsel %vm1268, %v2135, %v2137
        %v2310 = vsel %vm1268, %v2137, %v2139
        %v2311 = vsel %vm1268, %v2139, %v2141
        %v2312 = vsel %vm1268, %v2141, %v2143
        %v2313 = vsel %vm1268, %v2143, %v2145
        %v2314 = vsel %vm1268, %v2145, %v2147
        %v2315 = vsel %vm1268, %v2147, %v2149
        %v2316 = vsel %vm1268, %v2149, %v2151
        %v2317 = vsel %vm1268, %v2151, %v2153
        %v2318 = vsel %vm1268, %v2153, %v2155
        %v2319 = vsel %vm1268, %v2155, %v2157
        %v2320 = vsel %vm1268, %v2159, %v2161
        %v2321 = vsel %vm1268, %v2161, %v2163
        %v2322 = vsel %vm1268, %v2163, %v2165
        %v2323 = vsel %vm1268, %v2165, %v2167
        %v2324 = vsel %vm1268, %v2167, %v2169
        %v2325 = vsel %vm1268, %v2169, %v2171
        %v2326 = vsel %vm1268, %v2171, %v2173
        %v2327 = vsel %vm1268, %v2173, %v2175
        %v2328 = vsel %vm1268, %v2175, %v2177
        %v2329 = vsel %vm1268, %v2177, %v2179
        %v2330 = vsel %vm1268, %v2179, %v2181
        %v2331 = vsel %vm1268, %v2181, %v2183
        %v2332 = vsel %vm1268, %v2183, %v2185
        %v2333 = vsel %vm1268, %v2185, %v2187
        %v2334 = vsel %vm1268, %v2187, %v2189
        %v2335 = vsel %vm1268, %v2189, %v2191
        %vm2480 = vcmask 588800
        %v2482 = vsel %vm2480, %v1855, 0
        %v2485 = vsel %vm2480, %v1856, 0
        %2487 = vmatpush.msra.mxu0 0.0
        %2488 = vmatpush.msra.mxu0 0.0
        %2489 = vmatpush.msra.mxu0 0.0
        %2490 = vmatpush.msra.mxu0 0.0
        %2491 = vmatpush.msra.mxu0 0.0
        %2492 = vmatpush.msra.mxu0 0.0
        %2493 = vmatpush.msra.mxu0 0.0
        %2494 = vmatpush.msra.mxu0 %v2320
        %2495 = vmatpush.msra.mxu0 %v2304
        %2496 = vmatpush.msra.mxu0 %v2288
        %2497 = vmatpush.msra.mxu0 %v2272
        %2498 = vmatpush.msra.mxu0 %v2256
        %2499 = vmatpush.msra.mxu0 %v2240
        %2500 = vmatpush.msra.mxu0 %v2224
        %2501 = vmatpush.msra.mxu0 %v2208
        %2502 = vmatpush.msra.mxu0 %v2192
        %2503 = vmatmul.f32.gmra.mxu0 %v2482
        %v2504 = vpop.f32.mrf.mxu0
        %v2505 = vadd.f32 %v1862, %v2504
        %2506 = vmatmul.f32.gmra.mxu0 %v2485
        %v2507 = vpop.f32.mrf.mxu0
        %v2508 = vadd.f32 %v1867, %v2507
        %2509 = vdwg.mxu0
        %2510 = vmatpush.msra.mxu0 0.0
        %2511 = vmatpush.msra.mxu0 0.0
        %2512 = vmatpush.msra.mxu0 0.0
        %2513 = vmatpush.msra.mxu0 0.0
        %2514 = vmatpush.msra.mxu0 0.0
        %2515 = vmatpush.msra.mxu0 0.0
        %2516 = vmatpush.msra.mxu0 0.0
        %2517 = vmatpush.msra.mxu0 %v2321
        %2518 = vmatpush.msra.mxu0 %v2305
        %2519 = vmatpush.msra.mxu0 %v2289
        %2520 = vmatpush.msra.mxu0 %v2273
        %2521 = vmatpush.msra.mxu0 %v2257
        %2522 = vmatpush.msra.mxu0 %v2241
        %2523 = vmatpush.msra.mxu0 %v2225
        %2524 = vmatpush.msra.mxu0 %v2209
        %2525 = vmatpush.msra.mxu0 %v2193
        %2526 = vmatmul.f32.gmra.mxu0 %v2482
        %v2527 = vpop.f32.mrf.mxu0
        %v2528 = vadd.f32 %v1862, %v2527
        %2529 = vmatmul.f32.gmra.mxu0 %v2485
        %v2530 = vpop.f32.mrf.mxu0
        %v2531 = vadd.f32 %v1867, %v2530
        %2532 = vdwg.mxu0
        %2533 = vmatpush.msra.mxu0 0.0
        %2534 = vmatpush.msra.mxu0 0.0
        %2535 = vmatpush.msra.mxu0 0.0
        %2536 = vmatpush.msra.mxu0 0.0
        %2537 = vmatpush.msra.mxu0 0.0
        %2538 = vmatpush.msra.mxu0 0.0
        %2539 = vmatpush.msra.mxu0 0.0
        %2540 = vmatpush.msra.mxu0 %v2322
        %2541 = vmatpush.msra.mxu0 %v2306
        %2542 = vmatpush.msra.mxu0 %v2290
        %2543 = vmatpush.msra.mxu0 %v2274
        %2544 = vmatpush.msra.mxu0 %v2258
        %2545 = vmatpush.msra.mxu0 %v2242
        %2546 = vmatpush.msra.mxu0 %v2226
        %2547 = vmatpush.msra.mxu0 %v2210
        %2548 = vmatpush.msra.mxu0 %v2194
        %2549 = vmatmul.f32.gmra.mxu0 %v2482
        %v2550 = vpop.f32.mrf.mxu0
        %v2551 = vadd.f32 %v1862, %v2550
        %2552 = vmatmul.f32.gmra.mxu0 %v2485
        %v2553 = vpop.f32.mrf.mxu0
        %v2554 = vadd.f32 %v1867, %v2553
        %2555 = vdwg.mxu0
        %2556 = vmatpush.msra.mxu0 0.0
        %2557 = vmatpush.msra.mxu0 0.0
        %2558 = vmatpush.msra.mxu0 0.0
        %2559 = vmatpush.msra.mxu0 0.0
        %2560 = vmatpush.msra.mxu0 0.0
        %2561 = vmatpush.msra.mxu0 0.0
        %2562 = vmatpush.msra.mxu0 0.0
        %2563 = vmatpush.msra.mxu0 %v2323
        %2564 = vmatpush.msra.mxu0 %v2307
        %2565 = vmatpush.msra.mxu0 %v2291
        %2566 = vmatpush.msra.mxu0 %v2275
        %2567 = vmatpush.msra.mxu0 %v2259
        %2568 = vmatpush.msra.mxu0 %v2243
        %2569 = vmatpush.msra.mxu0 %v2227
        %2570 = vmatpush.msra.mxu0 %v2211
        %2571 = vmatpush.msra.mxu0 %v2195
        %2572 = vmatmul.f32.gmra.mxu0 %v2482
        %v2573 = vpop.f32.mrf.mxu0
        %v2574 = vadd.f32 %v1862, %v2573
        %2575 = vmatmul.f32.gmra.mxu0 %v2485
        %v2576 = vpop.f32.mrf.mxu0
        %v2577 = vadd.f32 %v1867, %v2576
        %2578 = vdwg.mxu0
        %2579 = vmatpush.msra.mxu0 0.0
        %2580 = vmatpush.msra.mxu0 0.0
        %2581 = vmatpush.msra.mxu0 0.0
        %2582 = vmatpush.msra.mxu0 0.0
        %2583 = vmatpush.msra.mxu0 0.0
        %2584 = vmatpush.msra.mxu0 0.0
        %2585 = vmatpush.msra.mxu0 0.0
        %2586 = vmatpush.msra.mxu0 %v2324
        %2587 = vmatpush.msra.mxu0 %v2308
        %2588 = vmatpush.msra.mxu0 %v2292
        %2589 = vmatpush.msra.mxu0 %v2276
        %2590 = vmatpush.msra.mxu0 %v2260
        %2591 = vmatpush.msra.mxu0 %v2244
        %2592 = vmatpush.msra.mxu0 %v2228
        %2593 = vmatpush.msra.mxu0 %v2212
        %2594 = vmatpush.msra.mxu0 %v2196
        %2595 = vmatmul.f32.gmra.mxu0 %v2482
        %v2596 = vpop.f32.mrf.mxu0
        %v2597 = vadd.f32 %v1862, %v2596
        %2598 = vmatmul.f32.gmra.mxu0 %v2485
        %v2599 = vpop.f32.mrf.mxu0
        %v2600 = vadd.f32 %v1867, %v2599
        %2601 = vdwg.mxu0
        %2602 = vmatpush.msra.mxu0 0.0
        %2603 = vmatpush.msra.mxu0 0.0
        %2604 = vmatpush.msra.mxu0 0.0
        %2605 = vmatpush.msra.mxu0 0.0
        %2606 = vmatpush.msra.mxu0 0.0
        %2607 = vmatpush.msra.mxu0 0.0
        %2608 = vmatpush.msra.mxu0 0.0
        %2609 = vmatpush.msra.mxu0 %v2325
        %2610 = vmatpush.msra.mxu0 %v2309
        %2611 = vmatpush.msra.mxu0 %v2293
        %2612 = vmatpush.msra.mxu0 %v2277
        %2613 = vmatpush.msra.mxu0 %v2261
        %2614 = vmatpush.msra.mxu0 %v2245
        %2615 = vmatpush.msra.mxu0 %v2229
        %2616 = vmatpush.msra.mxu0 %v2213
        %2617 = vmatpush.msra.mxu0 %v2197
        %2618 = vmatmul.f32.gmra.mxu0 %v2482
        %v2619 = vpop.f32.mrf.mxu0
        %v2620 = vadd.f32 %v1862, %v2619
        %2621 = vmatmul.f32.gmra.mxu0 %v2485
        %v2622 = vpop.f32.mrf.mxu0
        %v2623 = vadd.f32 %v1867, %v2622
        %2624 = vdwg.mxu0
        %2625 = vmatpush.msra.mxu0 0.0
        %2626 = vmatpush.msra.mxu0 0.0
        %2627 = vmatpush.msra.mxu0 0.0
        %2628 = vmatpush.msra.mxu0 0.0
        %2629 = vmatpush.msra.mxu0 0.0
        %2630 = vmatpush.msra.mxu0 0.0
        %2631 = vmatpush.msra.mxu0 0.0
        %2632 = vmatpush.msra.mxu0 %v2326
        %2633 = vmatpush.msra.mxu0 %v2310
        %2634 = vmatpush.msra.mxu0 %v2294
        %2635 = vmatpush.msra.mxu0 %v2278
        %2636 = vmatpush.msra.mxu0 %v2262
        %2637 = vmatpush.msra.mxu0 %v2246
        %2638 = vmatpush.msra.mxu0 %v2230
        %2639 = vmatpush.msra.mxu0 %v2214
        %2640 = vmatpush.msra.mxu0 %v2198
        %2641 = vmatmul.f32.gmra.mxu0 %v2482
        %v2642 = vpop.f32.mrf.mxu0
        %v2643 = vadd.f32 %v1862, %v2642
        %2644 = vmatmul.f32.gmra.mxu0 %v2485
        %v2645 = vpop.f32.mrf.mxu0
        %v2646 = vadd.f32 %v1867, %v2645
        %2647 = vdwg.mxu0
        %2648 = vmatpush.msra.mxu0 0.0
        %2649 = vmatpush.msra.mxu0 0.0
        %2650 = vmatpush.msra.mxu0 0.0
        %2651 = vmatpush.msra.mxu0 0.0
        %2652 = vmatpush.msra.mxu0 0.0
        %2653 = vmatpush.msra.mxu0 0.0
        %2654 = vmatpush.msra.mxu0 0.0
        %2655 = vmatpush.msra.mxu0 %v2327
        %2656 = vmatpush.msra.mxu0 %v2311
        %2657 = vmatpush.msra.mxu0 %v2295
        %2658 = vmatpush.msra.mxu0 %v2279
        %2659 = vmatpush.msra.mxu0 %v2263
        %2660 = vmatpush.msra.mxu0 %v2247
        %2661 = vmatpush.msra.mxu0 %v2231
        %2662 = vmatpush.msra.mxu0 %v2215
        %2663 = vmatpush.msra.mxu0 %v2199
        %2664 = vmatmul.f32.gmra.mxu0 %v2482
        %v2665 = vpop.f32.mrf.mxu0
        %v2666 = vadd.f32 %v1862, %v2665
        %2667 = vmatmul.f32.gmra.mxu0 %v2485
        %v2668 = vpop.f32.mrf.mxu0
        %v2669 = vadd.f32 %v1867, %v2668
        %2670 = vdwg.mxu0
        %2671 = vmatpush.msra.mxu0 0.0
        %2672 = vmatpush.msra.mxu0 0.0
        %2673 = vmatpush.msra.mxu0 0.0
        %2674 = vmatpush.msra.mxu0 0.0
        %2675 = vmatpush.msra.mxu0 0.0
        %2676 = vmatpush.msra.mxu0 0.0
        %2677 = vmatpush.msra.mxu0 0.0
        %2678 = vmatpush.msra.mxu0 %v2328
        %2679 = vmatpush.msra.mxu0 %v2312
        %2680 = vmatpush.msra.mxu0 %v2296
        %2681 = vmatpush.msra.mxu0 %v2280
        %2682 = vmatpush.msra.mxu0 %v2264
        %2683 = vmatpush.msra.mxu0 %v2248
        %2684 = vmatpush.msra.mxu0 %v2232
        %2685 = vmatpush.msra.mxu0 %v2216
        %2686 = vmatpush.msra.mxu0 %v2200
        %2687 = vmatmul.f32.gmra.mxu0 %v2482
        %v2688 = vpop.f32.mrf.mxu0
        %v2689 = vadd.f32 %v1862, %v2688
        %2690 = vmatmul.f32.gmra.mxu0 %v2485
        %v2691 = vpop.f32.mrf.mxu0
        %v2692 = vadd.f32 %v1867, %v2691
        %2693 = vdwg.mxu0
        %2694 = vmatpush.msra.mxu0 0.0
        %2695 = vmatpush.msra.mxu0 0.0
        %2696 = vmatpush.msra.mxu0 0.0
        %2697 = vmatpush.msra.mxu0 0.0
        %2698 = vmatpush.msra.mxu0 0.0
        %2699 = vmatpush.msra.mxu0 0.0
        %2700 = vmatpush.msra.mxu0 0.0
        %2701 = vmatpush.msra.mxu0 %v2329
        %2702 = vmatpush.msra.mxu0 %v2313
        %2703 = vmatpush.msra.mxu0 %v2297
        %2704 = vmatpush.msra.mxu0 %v2281
        %2705 = vmatpush.msra.mxu0 %v2265
        %2706 = vmatpush.msra.mxu0 %v2249
        %2707 = vmatpush.msra.mxu0 %v2233
        %2708 = vmatpush.msra.mxu0 %v2217
        %2709 = vmatpush.msra.mxu0 %v2201
        %2710 = vmatmul.f32.gmra.mxu0 %v2482
        %v2711 = vpop.f32.mrf.mxu0
        %v2712 = vadd.f32 %v1862, %v2711
        %2713 = vmatmul.f32.gmra.mxu0 %v2485
        %v2714 = vpop.f32.mrf.mxu0
        %v2715 = vadd.f32 %v1867, %v2714
        %2716 = vdwg.mxu0
        %2717 = vmatpush.msra.mxu0 0.0
        %2718 = vmatpush.msra.mxu0 0.0
        %2719 = vmatpush.msra.mxu0 0.0
        %2720 = vmatpush.msra.mxu0 0.0
        %2721 = vmatpush.msra.mxu0 0.0
        %2722 = vmatpush.msra.mxu0 0.0
        %2723 = vmatpush.msra.mxu0 0.0
        %2724 = vmatpush.msra.mxu0 %v2330
        %2725 = vmatpush.msra.mxu0 %v2314
        %2726 = vmatpush.msra.mxu0 %v2298
        %2727 = vmatpush.msra.mxu0 %v2282
        %2728 = vmatpush.msra.mxu0 %v2266
        %2729 = vmatpush.msra.mxu0 %v2250
        %2730 = vmatpush.msra.mxu0 %v2234
        %2731 = vmatpush.msra.mxu0 %v2218
        %2732 = vmatpush.msra.mxu0 %v2202
        %2733 = vmatmul.f32.gmra.mxu0 %v2482
        %v2734 = vpop.f32.mrf.mxu0
        %v2735 = vadd.f32 %v1862, %v2734
        %2736 = vmatmul.f32.gmra.mxu0 %v2485
        %v2737 = vpop.f32.mrf.mxu0
        %v2738 = vadd.f32 %v1867, %v2737
        %2739 = vdwg.mxu0
        %2740 = vmatpush.msra.mxu0 0.0
        %2741 = vmatpush.msra.mxu0 0.0
        %2742 = vmatpush.msra.mxu0 0.0
        %2743 = vmatpush.msra.mxu0 0.0
        %2744 = vmatpush.msra.mxu0 0.0
        %2745 = vmatpush.msra.mxu0 0.0
        %2746 = vmatpush.msra.mxu0 0.0
        %2747 = vmatpush.msra.mxu0 %v2331
        %2748 = vmatpush.msra.mxu0 %v2315
        %2749 = vmatpush.msra.mxu0 %v2299
        %2750 = vmatpush.msra.mxu0 %v2283
        %2751 = vmatpush.msra.mxu0 %v2267
        %2752 = vmatpush.msra.mxu0 %v2251
        %2753 = vmatpush.msra.mxu0 %v2235
        %2754 = vmatpush.msra.mxu0 %v2219
        %2755 = vmatpush.msra.mxu0 %v2203
        %2756 = vmatmul.f32.gmra.mxu0 %v2482
        %v2757 = vpop.f32.mrf.mxu0
        %v2758 = vadd.f32 %v1862, %v2757
        %2759 = vmatmul.f32.gmra.mxu0 %v2485
        %v2760 = vpop.f32.mrf.mxu0
        %v2761 = vadd.f32 %v1867, %v2760
        %2762 = vdwg.mxu0
        %2763 = vmatpush.msra.mxu0 0.0
        %2764 = vmatpush.msra.mxu0 0.0
        %2765 = vmatpush.msra.mxu0 0.0
        %2766 = vmatpush.msra.mxu0 0.0
        %2767 = vmatpush.msra.mxu0 0.0
        %2768 = vmatpush.msra.mxu0 0.0
        %2769 = vmatpush.msra.mxu0 0.0
        %2770 = vmatpush.msra.mxu0 %v2332
        %2771 = vmatpush.msra.mxu0 %v2316
        %2772 = vmatpush.msra.mxu0 %v2300
        %2773 = vmatpush.msra.mxu0 %v2284
        %2774 = vmatpush.msra.mxu0 %v2268
        %2775 = vmatpush.msra.mxu0 %v2252
        %2776 = vmatpush.msra.mxu0 %v2236
        %2777 = vmatpush.msra.mxu0 %v2220
        %2778 = vmatpush.msra.mxu0 %v2204
        %2779 = vmatmul.f32.gmra.mxu0 %v2482
        %v2780 = vpop.f32.mrf.mxu0
        %v2781 = vadd.f32 %v1862, %v2780
        %2782 = vmatmul.f32.gmra.mxu0 %v2485
        %v2783 = vpop.f32.mrf.mxu0
        %v2784 = vadd.f32 %v1867, %v2783
        %2785 = vdwg.mxu0
        %2786 = vmatpush.msra.mxu0 0.0
        %2787 = vmatpush.msra.mxu0 0.0
        %2788 = vmatpush.msra.mxu0 0.0
        %2789 = vmatpush.msra.mxu0 0.0
        %2790 = vmatpush.msra.mxu0 0.0
        %2791 = vmatpush.msra.mxu0 0.0
        %2792 = vmatpush.msra.mxu0 0.0
        %2793 = vmatpush.msra.mxu0 %v2333
        %2794 = vmatpush.msra.mxu0 %v2317
        %2795 = vmatpush.msra.mxu0 %v2301
        %2796 = vmatpush.msra.mxu0 %v2285
        %2797 = vmatpush.msra.mxu0 %v2269
        %2798 = vmatpush.msra.mxu0 %v2253
        %2799 = vmatpush.msra.mxu0 %v2237
        %2800 = vmatpush.msra.mxu0 %v2221
        %2801 = vmatpush.msra.mxu0 %v2205
        %2802 = vmatmul.f32.gmra.mxu0 %v2482
        %v2803 = vpop.f32.mrf.mxu0
        %v2804 = vadd.f32 %v1862, %v2803
        %2805 = vmatmul.f32.gmra.mxu0 %v2485
        %v2806 = vpop.f32.mrf.mxu0
        %v2807 = vadd.f32 %v1867, %v2806
        %2808 = vdwg.mxu0
        %2809 = vmatpush.msra.mxu0 0.0
        %2810 = vmatpush.msra.mxu0 0.0
        %2811 = vmatpush.msra.mxu0 0.0
        %2812 = vmatpush.msra.mxu0 0.0
        %2813 = vmatpush.msra.mxu0 0.0
        %2814 = vmatpush.msra.mxu0 0.0
        %2815 = vmatpush.msra.mxu0 0.0
        %2816 = vmatpush.msra.mxu0 %v2334
        %2817 = vmatpush.msra.mxu0 %v2318
        %2818 = vmatpush.msra.mxu0 %v2302
        %2819 = vmatpush.msra.mxu0 %v2286
        %2820 = vmatpush.msra.mxu0 %v2270
        %2821 = vmatpush.msra.mxu0 %v2254
        %2822 = vmatpush.msra.mxu0 %v2238
        %2823 = vmatpush.msra.mxu0 %v2222
        %2824 = vmatpush.msra.mxu0 %v2206
        %2825 = vmatmul.f32.gmra.mxu0 %v2482
        %v2826 = vpop.f32.mrf.mxu0
        %v2827 = vadd.f32 %v1862, %v2826
        %2828 = vmatmul.f32.gmra.mxu0 %v2485
        %v2829 = vpop.f32.mrf.mxu0
        %v2830 = vadd.f32 %v1867, %v2829
        %2831 = vdwg.mxu0
        %2832 = vmatpush.msra.mxu0 0.0
        %2833 = vmatpush.msra.mxu0 0.0
        %2834 = vmatpush.msra.mxu0 0.0
        %2835 = vmatpush.msra.mxu0 0.0
        %2836 = vmatpush.msra.mxu0 0.0
        %2837 = vmatpush.msra.mxu0 0.0
        %2838 = vmatpush.msra.mxu0 0.0
        %2839 = vmatpush.msra.mxu0 %v2335
        %2840 = vmatpush.msra.mxu0 %v2319
        %2841 = vmatpush.msra.mxu0 %v2303
        %2842 = vmatpush.msra.mxu0 %v2287
        %2843 = vmatpush.msra.mxu0 %v2271
        %2844 = vmatpush.msra.mxu0 %v2255
        %2845 = vmatpush.msra.mxu0 %v2239
        %2846 = vmatpush.msra.mxu0 %v2223
        %2847 = vmatpush.msra.mxu0 %v2207
        %2848 = vmatmul.f32.gmra.mxu0 %v2482
        %v2849 = vpop.f32.mrf.mxu0
        %v2850 = vadd.f32 %v1862, %v2849
        %2851 = vmatmul.f32.gmra.mxu0 %v2485
        %v2852 = vpop.f32.mrf.mxu0
        %v2853 = vadd.f32 %v1867, %v2852
        %2854 = vdwg.mxu0
        %v2855 = vmax.f32 %v2505, 0.0
        %v2856 = vmax.f32 %v2528, 0.0
        %v2857 = vmax.f32 %v2551, 0.0
        %v2858 = vmax.f32 %v2574, 0.0
        %v2859 = vmax.f32 %v2597, 0.0
        %v2860 = vmax.f32 %v2620, 0.0
        %v2861 = vmax.f32 %v2643, 0.0
        %v2862 = vmax.f32 %v2666, 0.0
        %v2863 = vmax.f32 %v2689, 0.0
        %v2864 = vmax.f32 %v2712, 0.0
        %v2865 = vmax.f32 %v2735, 0.0
        %v2866 = vmax.f32 %v2758, 0.0
        %v2867 = vmax.f32 %v2781, 0.0
        %v2868 = vmax.f32 %v2804, 0.0
        %v2869 = vmax.f32 %v2827, 0.0
        %v2870 = vmax.f32 %v2850, 0.0
        %v2871 = vmax.f32 %v2508, 0.0
        %v2872 = vmax.f32 %v2531, 0.0
        %v2873 = vmax.f32 %v2554, 0.0
        %v2874 = vmax.f32 %v2577, 0.0
        %v2875 = vmax.f32 %v2600, 0.0
        %v2876 = vmax.f32 %v2623, 0.0
        %v2877 = vmax.f32 %v2646, 0.0
        %v2878 = vmax.f32 %v2669, 0.0
        %v2879 = vmax.f32 %v2692, 0.0
        %v2880 = vmax.f32 %v2715, 0.0
        %v2881 = vmax.f32 %v2738, 0.0
        %v2882 = vmax.f32 %v2761, 0.0
        %v2883 = vmax.f32 %v2784, 0.0
        %v2884 = vmax.f32 %v2807, 0.0
        %v2885 = vmax.f32 %v2830, 0.0
        %v2886 = vmax.f32 %v2853, 0.0
        %v2887 = vld [vmem:[%s5] sm:$0xff]
        %v2888 = vld [vmem:[%s6] sm:$0xff]
        %2890 = vset.pattern.permute.xlu0 0
        %2891 = vperm.xlu0 %2890, %v2888
        %v2892 = vpop.permute.xlu0 %2891
        %vm2894 = vcmask 392192
        %v2896 = vsel %vm2894, %v2887, 0
        %2898 = vmatpush.msra.mxu0 0.0
        %2899 = vmatpush.msra.mxu0 0.0
        %2900 = vmatpush.msra.mxu0 0.0
        %2901 = vmatpush.msra.mxu0 0.0
        %2902 = vmatpush.msra.mxu0 0.0
        %2903 = vmatpush.msra.mxu0 0.0
        %2904 = vmatpush.msra.mxu0 0.0
        %2905 = vmatpush.msra.mxu0 0.0
        %2906 = vmatpush.msra.mxu0 0.0
        %2907 = vmatpush.msra.mxu0 0.0
        %2908 = vmatpush.msra.mxu0 %v2873
        %2909 = vmatpush.msra.mxu0 %v2857
        %2910 = vmatpush.msra.mxu0 %v2871
        %2911 = vmatpush.msra.mxu0 %v2855
        %2912 = vmatpush.msra.mxu0 0.0
        %2913 = vmatpush.msra.mxu0 0.0
        %2914 = vmatmul.f32.gmra.mxu0 %v2896
        %v2915 = vpop.f32.mrf.mxu0
        %v2916 = vadd.f32 %v2892, %v2915
        %2917 = vdwg.mxu0
        %2918 = vmatpush.msra.mxu0 0.0
        %2919 = vmatpush.msra.mxu0 0.0
        %2920 = vmatpush.msra.mxu0 0.0
        %2921 = vmatpush.msra.mxu0 0.0
        %2922 = vmatpush.msra.mxu0 0.0
        %2923 = vmatpush.msra.mxu0 0.0
        %2924 = vmatpush.msra.mxu0 0.0
        %2925 = vmatpush.msra.mxu0 0.0
        %2926 = vmatpush.msra.mxu0 0.0
        %2927 = vmatpush.msra.mxu0 0.0
        %2928 = vmatpush.msra.mxu0 %v2874
        %2929 = vmatpush.msra.mxu0 %v2858
        %2930 = vmatpush.msra.mxu0 %v2872
        %2931 = vmatpush.msra.mxu0 %v2856
        %2932 = vmatpush.msra.mxu0 0.0
        %2933 = vmatpush.msra.mxu0 0.0
        %2934 = vmatmul.f32.gmra.mxu0 %v2896
        %v2935 = vpop.f32.mrf.mxu0
        %v2936 = vadd.f32 %v2892, %v2935
        %2937 = vdwg.mxu0
        %2938 = vmatpush.msra.mxu0 0.0
        %2939 = vmatpush.msra.mxu0 0.0
        %2940 = vmatpush.msra.mxu0 0.0
        %2941 = vmatpush.msra.mxu0 0.0
        %2942 = vmatpush.msra.mxu0 0.0
        %2943 = vmatpush.msra.mxu0 0.0
        %2944 = vmatpush.msra.mxu0 0.0
        %2945 = vmatpush.msra.mxu0 0.0
        %2946 = vmatpush.msra.mxu0 0.0
        %2947 = vmatpush.msra.mxu0 0.0
        %2948 = vmatpush.msra.mxu0 %v2875
        %2949 = vmatpush.msra.mxu0 %v2859
        %2950 = vmatpush.msra.mxu0 %v2873
        %2951 = vmatpush.msra.mxu0 %v2857
        %2952 = vmatpush.msra.mxu0 %v2871
        %2953 = vmatpush.msra.mxu0 %v2855
        %2954 = vmatmul.f32.gmra.mxu0 %v2896
        %v2955 = vpop.f32.mrf.mxu0
        %v2956 = vadd.f32 %v2892, %v2955
        %2957 = vdwg.mxu0
        %2958 = vmatpush.msra.mxu0 0.0
        %2959 = vmatpush.msra.mxu0 0.0
        %2960 = vmatpush.msra.mxu0 0.0
        %2961 = vmatpush.msra.mxu0 0.0
        %2962 = vmatpush.msra.mxu0 0.0
        %2963 = vmatpush.msra.mxu0 0.0
        %2964 = vmatpush.msra.mxu0 0.0
        %2965 = vmatpush.msra.mxu0 0.0
        %2966 = vmatpush.msra.mxu0 0.0
        %2967 = vmatpush.msra.mxu0 0.0
        %2968 = vmatpush.msra.mxu0 %v2876
        %2969 = vmatpush.msra.mxu0 %v2860
        %2970 = vmatpush.msra.mxu0 %v2874
        %2971 = vmatpush.msra.mxu0 %v2858
        %2972 = vmatpush.msra.mxu0 %v2872
        %2973 = vmatpush.msra.mxu0 %v2856
        %2974 = vmatmul.f32.gmra.mxu0 %v2896
        %v2975 = vpop.f32.mrf.mxu0
        %v2976 = vadd.f32 %v2892, %v2975
        %2977 = vdwg.mxu0
        %2978 = vmatpush.msra.mxu0 0.0
        %2979 = vmatpush.msra.mxu0 0.0
        %2980 = vmatpush.msra.mxu0 0.0
        %2981 = vmatpush.msra.mxu0 0.0
        %2982 = vmatpush.msra.mxu0 0.0
        %2983 = vmatpush.msra.mxu0 0.0
        %2984 = vmatpush.msra.mxu0 0.0
        %2985 = vmatpush.msra.mxu0 0.0
        %2986 = vmatpush.msra.mxu0 0.0
        %2987 = vmatpush.msra.mxu0 0.0
        %2988 = vmatpush.msra.mxu0 %v2877
        %2989 = vmatpush.msra.mxu0 %v2861
        %2990 = vmatpush.msra.mxu0 %v2875
        %2991 = vmatpush.msra.mxu0 %v2859
        %2992 = vmatpush.msra.mxu0 %v2873
        %2993 = vmatpush.msra.mxu0 %v2857
        %2994 = vmatmul.f32.gmra.mxu0 %v2896
        %v2995 = vpop.f32.mrf.mxu0
        %v2996 = vadd.f32 %v2892, %v2995
        %2997 = vdwg.mxu0
        %2998 = vmatpush.msra.mxu0 0.0
        %2999 = vmatpush.msra.mxu0 0.0
        %3000 = vmatpush.msra.mxu0 0.0
        %3001 = vmatpush.msra.mxu0 0.0
        %3002 = vmatpush.msra.mxu0 0.0
        %3003 = vmatpush.msra.mxu0 0.0
        %3004 = vmatpush.msra.mxu0 0.0
        %3005 = vmatpush.msra.mxu0 0.0
        %3006 = vmatpush.msra.mxu0 0.0
        %3007 = vmatpush.msra.mxu0 0.0
        %3008 = vmatpush.msra.mxu0 %v2878
        %3009 = vmatpush.msra.mxu0 %v2862
        %3010 = vmatpush.msra.mxu0 %v2876
        %3011 = vmatpush.msra.mxu0 %v2860
        %3012 = vmatpush.msra.mxu0 %v2874
        %3013 = vmatpush.msra.mxu0 %v2858
        %3014 = vmatmul.f32.gmra.mxu0 %v2896
        %v3015 = vpop.f32.mrf.mxu0
        %v3016 = vadd.f32 %v2892, %v3015
        %3017 = vdwg.mxu0
        %3018 = vmatpush.msra.mxu0 0.0
        %3019 = vmatpush.msra.mxu0 0.0
        %3020 = vmatpush.msra.mxu0 0.0
        %3021 = vmatpush.msra.mxu0 0.0
        %3022 = vmatpush.msra.mxu0 0.0
        %3023 = vmatpush.msra.mxu0 0.0
        %3024 = vmatpush.msra.mxu0 0.0
        %3025 = vmatpush.msra.mxu0 0.0
        %3026 = vmatpush.msra.mxu0 0.0
        %3027 = vmatpush.msra.mxu0 0.0
        %3028 = vmatpush.msra.mxu0 %v2879
        %3029 = vmatpush.msra.mxu0 %v2863
        %3030 = vmatpush.msra.mxu0 %v2877
        %3031 = vmatpush.msra.mxu0 %v2861
        %3032 = vmatpush.msra.mxu0 %v2875
        %3033 = vmatpush.msra.mxu0 %v2859
        %3034 = vmatmul.f32.gmra.mxu0 %v2896
        %v3035 = vpop.f32.mrf.mxu0
        %v3036 = vadd.f32 %v2892, %v3035
        %3037 = vdwg.mxu0
        %3038 = vmatpush.msra.mxu0 0.0
        %3039 = vmatpush.msra.mxu0 0.0
        %3040 = vmatpush.msra.mxu0 0.0
        %3041 = vmatpush.msra.mxu0 0.0
        %3042 = vmatpush.msra.mxu0 0.0
        %3043 = vmatpush.msra.mxu0 0.0
        %3044 = vmatpush.msra.mxu0 0.0
        %3045 = vmatpush.msra.mxu0 0.0
        %3046 = vmatpush.msra.mxu0 0.0
        %3047 = vmatpush.msra.mxu0 0.0
        %3048 = vmatpush.msra.mxu0 %v2880
        %3049 = vmatpush.msra.mxu0 %v2864
        %3050 = vmatpush.msra.mxu0 %v2878
        %3051 = vmatpush.msra.mxu0 %v2862
        %3052 = vmatpush.msra.mxu0 %v2876
        %3053 = vmatpush.msra.mxu0 %v2860
        %3054 = vmatmul.f32.gmra.mxu0 %v2896
        %v3055 = vpop.f32.mrf.mxu0
        %v3056 = vadd.f32 %v2892, %v3055
        %3057 = vdwg.mxu0
        %3058 = vmatpush.msra.mxu0 0.0
        %3059 = vmatpush.msra.mxu0 0.0
        %3060 = vmatpush.msra.mxu0 0.0
        %3061 = vmatpush.msra.mxu0 0.0
        %3062 = vmatpush.msra.mxu0 0.0
        %3063 = vmatpush.msra.mxu0 0.0
        %3064 = vmatpush.msra.mxu0 0.0
        %3065 = vmatpush.msra.mxu0 0.0
        %3066 = vmatpush.msra.mxu0 0.0
        %3067 = vmatpush.msra.mxu0 0.0
        %3068 = vmatpush.msra.mxu0 %v2881
        %3069 = vmatpush.msra.mxu0 %v2865
        %3070 = vmatpush.msra.mxu0 %v2879
        %3071 = vmatpush.msra.mxu0 %v2863
        %3072 = vmatpush.msra.mxu0 %v2877
        %3073 = vmatpush.msra.mxu0 %v2861
        %3074 = vmatmul.f32.gmra.mxu0 %v2896
        %v3075 = vpop.f32.mrf.mxu0
        %v3076 = vadd.f32 %v2892, %v3075
        %3077 = vdwg.mxu0
        %3078 = vmatpush.msra.mxu0 0.0
        %3079 = vmatpush.msra.mxu0 0.0
        %3080 = vmatpush.msra.mxu0 0.0
        %3081 = vmatpush.msra.mxu0 0.0
        %3082 = vmatpush.msra.mxu0 0.0
        %3083 = vmatpush.msra.mxu0 0.0
        %3084 = vmatpush.msra.mxu0 0.0
        %3085 = vmatpush.msra.mxu0 0.0
        %3086 = vmatpush.msra.mxu0 0.0
        %3087 = vmatpush.msra.mxu0 0.0
        %3088 = vmatpush.msra.mxu0 %v2882
        %3089 = vmatpush.msra.mxu0 %v2866
        %3090 = vmatpush.msra.mxu0 %v2880
        %3091 = vmatpush.msra.mxu0 %v2864
        %3092 = vmatpush.msra.mxu0 %v2878
        %3093 = vmatpush.msra.mxu0 %v2862
        %3094 = vmatmul.f32.gmra.mxu0 %v2896
        %v3095 = vpop.f32.mrf.mxu0
        %v3096 = vadd.f32 %v2892, %v3095
        %3097 = vdwg.mxu0
        %3098 = vmatpush.msra.mxu0 0.0
        %3099 = vmatpush.msra.mxu0 0.0
        %3100 = vmatpush.msra.mxu0 0.0
        %3101 = vmatpush.msra.mxu0 0.0
        %3102 = vmatpush.msra.mxu0 0.0
        %3103 = vmatpush.msra.mxu0 0.0
        %3104 = vmatpush.msra.mxu0 0.0
        %3105 = vmatpush.msra.mxu0 0.0
        %3106 = vmatpush.msra.mxu0 0.0
        %3107 = vmatpush.msra.mxu0 0.0
        %3108 = vmatpush.msra.mxu0 %v2883
        %3109 = vmatpush.msra.mxu0 %v2867
        %3110 = vmatpush.msra.mxu0 %v2881
        %3111 = vmatpush.msra.mxu0 %v2865
        %3112 = vmatpush.msra.mxu0 %v2879
        %3113 = vmatpush.msra.mxu0 %v2863
        %3114 = vmatmul.f32.gmra.mxu0 %v2896
        %v3115 = vpop.f32.mrf.mxu0
        %v3116 = vadd.f32 %v2892, %v3115
        %3117 = vdwg.mxu0
        %3118 = vmatpush.msra.mxu0 0.0
        %3119 = vmatpush.msra.mxu0 0.0
        %3120 = vmatpush.msra.mxu0 0.0
        %3121 = vmatpush.msra.mxu0 0.0
        %3122 = vmatpush.msra.mxu0 0.0
        %3123 = vmatpush.msra.mxu0 0.0
        %3124 = vmatpush.msra.mxu0 0.0
        %3125 = vmatpush.msra.mxu0 0.0
        %3126 = vmatpush.msra.mxu0 0.0
        %3127 = vmatpush.msra.mxu0 0.0
        %3128 = vmatpush.msra.mxu0 %v2884
        %3129 = vmatpush.msra.mxu0 %v2868
        %3130 = vmatpush.msra.mxu0 %v2882
        %3131 = vmatpush.msra.mxu0 %v2866
        %3132 = vmatpush.msra.mxu0 %v2880
        %3133 = vmatpush.msra.mxu0 %v2864
        %3134 = vmatmul.f32.gmra.mxu0 %v2896
        %v3135 = vpop.f32.mrf.mxu0
        %v3136 = vadd.f32 %v2892, %v3135
        %3137 = vdwg.mxu0
        %3138 = vmatpush.msra.mxu0 0.0
        %3139 = vmatpush.msra.mxu0 0.0
        %3140 = vmatpush.msra.mxu0 0.0
        %3141 = vmatpush.msra.mxu0 0.0
        %3142 = vmatpush.msra.mxu0 0.0
        %3143 = vmatpush.msra.mxu0 0.0
        %3144 = vmatpush.msra.mxu0 0.0
        %3145 = vmatpush.msra.mxu0 0.0
        %3146 = vmatpush.msra.mxu0 0.0
        %3147 = vmatpush.msra.mxu0 0.0
        %3148 = vmatpush.msra.mxu0 %v2885
        %3149 = vmatpush.msra.mxu0 %v2869
        %3150 = vmatpush.msra.mxu0 %v2883
        %3151 = vmatpush.msra.mxu0 %v2867
        %3152 = vmatpush.msra.mxu0 %v2881
        %3153 = vmatpush.msra.mxu0 %v2865
        %3154 = vmatmul.f32.gmra.mxu0 %v2896
        %v3155 = vpop.f32.mrf.mxu0
        %v3156 = vadd.f32 %v2892, %v3155
        %3157 = vdwg.mxu0
        %3158 = vmatpush.msra.mxu0 0.0
        %3159 = vmatpush.msra.mxu0 0.0
        %3160 = vmatpush.msra.mxu0 0.0
        %3161 = vmatpush.msra.mxu0 0.0
        %3162 = vmatpush.msra.mxu0 0.0
        %3163 = vmatpush.msra.mxu0 0.0
        %3164 = vmatpush.msra.mxu0 0.0
        %3165 = vmatpush.msra.mxu0 0.0
        %3166 = vmatpush.msra.mxu0 0.0
        %3167 = vmatpush.msra.mxu0 0.0
        %3168 = vmatpush.msra.mxu0 %v2886
        %3169 = vmatpush.msra.mxu0 %v2870
        %3170 = vmatpush.msra.mxu0 %v2884
        %3171 = vmatpush.msra.mxu0 %v2868
        %3172 = vmatpush.msra.mxu0 %v2882
        %3173 = vmatpush.msra.mxu0 %v2866
        %3174 = vmatmul.f32.gmra.mxu0 %v2896
        %v3175 = vpop.f32.mrf.mxu0
        %v3176 = vadd.f32 %v2892, %v3175
        %3177 = vdwg.mxu0
        %3178 = vmatpush.msra.mxu0 0.0
        %3179 = vmatpush.msra.mxu0 0.0
        %3180 = vmatpush.msra.mxu0 0.0
        %3181 = vmatpush.msra.mxu0 0.0
        %3182 = vmatpush.msra.mxu0 0.0
        %3183 = vmatpush.msra.mxu0 0.0
        %3184 = vmatpush.msra.mxu0 0.0
        %3185 = vmatpush.msra.mxu0 0.0
        %3186 = vmatpush.msra.mxu0 0.0
        %3187 = vmatpush.msra.mxu0 0.0
        %3188 = vmatpush.msra.mxu0 0.0
        %3189 = vmatpush.msra.mxu0 0.0
        %3190 = vmatpush.msra.mxu0 %v2885
        %3191 = vmatpush.msra.mxu0 %v2869
        %3192 = vmatpush.msra.mxu0 %v2883
        %3193 = vmatpush.msra.mxu0 %v2867
        %3194 = vmatmul.f32.gmra.mxu0 %v2896
        %v3195 = vpop.f32.mrf.mxu0
        %v3196 = vadd.f32 %v2892, %v3195
        %3197 = vdwg.mxu0
        %3198 = vmatpush.msra.mxu0 0.0
        %3199 = vmatpush.msra.mxu0 0.0
        %3200 = vmatpush.msra.mxu0 0.0
        %3201 = vmatpush.msra.mxu0 0.0
        %3202 = vmatpush.msra.mxu0 0.0
        %3203 = vmatpush.msra.mxu0 0.0
        %3204 = vmatpush.msra.mxu0 0.0
        %3205 = vmatpush.msra.mxu0 0.0
        %3206 = vmatpush.msra.mxu0 0.0
        %3207 = vmatpush.msra.mxu0 0.0
        %3208 = vmatpush.msra.mxu0 0.0
        %3209 = vmatpush.msra.mxu0 0.0
        %3210 = vmatpush.msra.mxu0 %v2886
        %3211 = vmatpush.msra.mxu0 %v2870
        %3212 = vmatpush.msra.mxu0 %v2884
        %3213 = vmatpush.msra.mxu0 %v2868
        %3214 = vmatmul.f32.gmra.mxu0 %v2896
        %v3215 = vpop.f32.mrf.mxu0
        %v3216 = vadd.f32 %v2892, %v3215
        %3217 = vdwg.mxu0
        %3218 = vst [vmem:[%s327] sm:$0xff] %v2916
        %3219 = vst [vmem:[%s327 + $0x8] sm:$0xff] %v2936
        %3220 = vst [vmem:[%s327 + $0x10] sm:$0xff] %v2956
        %3221 = vst [vmem:[%s327 + $0x18] sm:$0xff] %v2976
        %3222 = vst [vmem:[%s327 + $0x20] sm:$0xff] %v2996
        %3223 = vst [vmem:[%s327 + $0x28] sm:$0xff] %v3016
        %3224 = vst [vmem:[%s327 + $0x30] sm:$0xff] %v3036
        %3225 = vst [vmem:[%s327 + $0x38] sm:$0xff] %v3056
        %3226 = vst [vmem:[%s327 + $0x40] sm:$0xff] %v3076
        %3227 = vst [vmem:[%s327 + $0x48] sm:$0xff] %v3096
        %3228 = vst [vmem:[%s327 + $0x50] sm:$0xff] %v3116
        %3229 = vst [vmem:[%s327 + $0x58] sm:$0xff] %v3136
        %3230 = vst [vmem:[%s327 + $0x60] sm:$0xff] %v3156
        %3231 = vst [vmem:[%s327 + $0x68] sm:$0xff] %v3176
        %3232 = vst [vmem:[%s327 + $0x70] sm:$0xff] %v3196
        %3233 = vst [vmem:[%s327 + $0x78] sm:$0xff] %v3216
        %s3234 = sand.u32 %s185, 1
        %s3235 = scalar_lea.sflag [#allocation4], %s3234
        %s3236 = sand.u32 %s185, 1
        %s3237 = smul.addr %s3236, 128
        %s3238 = scalar_lea.vmem [#allocation8], %s3237
        // Predicated region
        $region61: #{tpu_custom_call.1} parent=47 // pred_check
          %p3239 = pneg %p195
        $region62: #{tpu_custom_call.1} parent=47 // pred_check_branch
          %3241 = sbr.rel (%p3239) target = $region64
        $region63: #{tpu_custom_call.1} parent=47 // pred_region
          %3243 = vsyncadd %s3235, 0
          %s3244 = smul.addr %s25, 16
          %s3245 = smul.addr %s3244, 8
          %s3246 = scalar_lea.hbm %s7, %s3245
          %s3248 = sshll.u32 %s3238, 4
          %s3249 = int_to_ptr.vmem [resolvable:$true] %s3248
          %s3250 = sshll.u32 %s3246, 4
          %s3251 = int_to_ptr.hbm [resolvable:$true] %s3250
          %3253 = dma.vmem_to_hbm [thread:$0]  %s3249, 2048, %s3251, %s3235
        $region64: #{tpu_custom_call.1} parent=47 // pred_fallthru
          _
      $region48: #{tpu_custom_call.1} parent=5 // pred_fallthru
        _
      %p3254 = scmp.le.s32.totalorder 2, %s20
      // Predicated region
      $region65: #{tpu_custom_call.1} parent=5 // pred_check
        %p3255 = pneg %p3254
      $region66: #{tpu_custom_call.1} parent=5 // pred_check_branch
        %3257 = sbr.rel (%p3255) target = $region68
      $region67: #{tpu_custom_call.1} parent=5 // pred_region
        %s3258 = ssub.s32 %s20, 2
        // Predicated region
        $region69: #{tpu_custom_call.1} parent=67 // pred_check
          %p3259 = pneg %p201
        $region70: #{tpu_custom_call.1} parent=67 // pred_check_branch
          %3261 = sbr.rel (%p3259) target = $region72
        $region71: #{tpu_custom_call.1} parent=67 // pred_region
          %s3262 = sand.u32 %s186, 1
          %s3263 = scalar_lea.sflag [#allocation4], %s3262
          %s3264 = sand.u32 %s186, 1
          %s3265 = smul.addr %s3264, 128
          %s3266 = scalar_lea.vmem [#allocation8], %s3265
          %3268 = dma.done %s3263, 2048
        $region72: #{tpu_custom_call.1} parent=67 // pred_fallthru
          _
      $region68: #{tpu_custom_call.1} parent=5 // pred_fallthru
        _
    $region6: #{tpu_custom_call.1} parent=1 // loop_footer
      %s24 = sadd.s32 1, %s20
    $region7: #{tpu_custom_call.1} parent=1 // loop_footer_branch
      %19 = sbr.rel target = $region3
    $region8: #{tpu_custom_call.1} parent=1 // loop_exit
      _
    %3269 = vsyncpa [#allocation3], 1
    %s3270 = scalar_lea.sflag [#allocation3], 1
    %3271 = vsyncpa %s3270, 1
    %3272 = vsyncpa [#allocation6], 1
    %3273 = vsyncpa [#allocation4], 1
    %s3274 = scalar_lea.sflag [#allocation4], 1
    %3275 = vsyncpa %s3274, 1

</llo_original>
